<compile_context>
chip_gen: v7x
topology: tpu7x:2x2x1
jax: 0.10.0
libtpu: 0.0.40
codegen_flags: <defaults>
</compile_context>

<pallas_src>
import functools
import math

import jax
import jax.numpy as jnp
from jax.experimental import pallas as pl
from jax.experimental.pallas import tpu as pltpu

F32 = jnp.float32

# ---------------- small config (synthetic, deterministic) ----------------
VOCAB = 50
MAX_POS = 16
TYPE_VOCAB = 2
HIDDEN = 32
NHEADS = 4
DHEAD = HIDDEN // NHEADS
INTER = 64
NLAYERS = 2
NTASKS = 3
ADAPTER = 16          # bert_adapter_size
CAPD = 8              # semantic capsule size
NCLASSES = 5
B, S = 2, 8
LN_EPS = 1e-12
N_ROUTING_ITERS = 3

M = B * S             # flattened token count


def vmem():
    return pl.BlockSpec(memory_space=pltpu.MemorySpace.VMEM)


def smem():
    return pl.BlockSpec(memory_space=pltpu.MemorySpace.SMEM)


def _gelu(x):
    # TODO(synk): HF BERT uses exact (erf) gelu; tanh approximation used for robust TPU lowering.
    return jax.nn.gelu(x, approximate=True)


def _layernorm(x, g, b):
    mu = jnp.mean(x, axis=-1, keepdims=True)
    var = jnp.mean(jnp.square(x - mu), axis=-1, keepdims=True)
    return (x - mu) * jax.lax.rsqrt(var + LN_EPS) * g + b


def _squash(v):
    sq = jnp.sum(v * v, axis=-1, keepdims=True)
    return (sq / (1.0 + sq)) * v * jax.lax.rsqrt(sq + 1e-9)


# ============================ Kernel 1: fused BERT encoder ============================

def _encoder_kernel(x_ref, m_ref, eg_ref, eb_ref,
                    wqkv_ref, bqkv_ref, wo_ref, bo_ref, g1_ref, b1_ref,
                    wi_ref, bi_ref, wf_ref, bf_ref, g2_ref, b2_ref,
                    o_ref):
    l = pl.program_id(0)

    # Layer 0 prologue: embedding LayerNorm; output block is the resident carried state.
    @pl.when(l == 0)
    def _():
        o_ref[...] = _layernorm(x_ref[...], eg_ref[...], eb_ref[...])

    x = o_ref[...]                                                    # (M, H)

    # Fused Q|K|V projection: one (M,H)x(H,3H) matmul.
    qkv = jnp.dot(x, wqkv_ref[0], preferred_element_type=F32) + bqkv_ref[0]

    scale = 1.0 / math.sqrt(DHEAD)
    ctx_rows = []
    for b in range(B):
        rows = slice(b * S, (b + 1) * S)
        mb = m_ref[b:b + 1, :]                                        # (1, S) additive mask
        heads = []
        for h in range(NHEADS):
            qh = qkv[rows, h * DHEAD:(h + 1) * DHEAD]                 # (S, DH)
            kh = qkv[rows, HIDDEN + h * DHEAD: HIDDEN + (h + 1) * DHEAD]
            vh = qkv[rows, 2 * HIDDEN + h * DHEAD: 2 * HIDDEN + (h + 1) * DHEAD]
            sc = jnp.einsum("qd,kd->qk", qh, kh,
                            preferred_element_type=F32) * scale + mb  # (S, S)
            sc = sc - jnp.max(sc, axis=-1, keepdims=True)
            e = jnp.exp(sc)
            p = e * pl.reciprocal(jnp.sum(e, axis=-1, keepdims=True), approx=True)
            heads.append(jnp.dot(p, vh, preferred_element_type=F32))  # (S, DH)
        ctx_rows.append(jnp.concatenate(heads, axis=-1))              # (S, H)
    ctx = jnp.concatenate(ctx_rows, axis=0)                           # (M, H)

    attn = jnp.dot(ctx, wo_ref[0], preferred_element_type=F32) + bo_ref[0]
    h1 = _layernorm(x + attn, g1_ref[0], b1_ref[0])

    inter = _gelu(jnp.dot(h1, wi_ref[0], preferred_element_type=F32) + bi_ref[0])
    ffo = jnp.dot(inter, wf_ref[0], preferred_element_type=F32) + bf_ref[0]
    o_ref[...] = _layernorm(h1 + ffo, g2_ref[0], b2_ref[0])


def pallas_encoder(x2d, add_mask, p):
    H, I3, I = HIDDEN, 3 * HIDDEN, INTER

    def full2(shape):
        return pl.BlockSpec(shape, lambda l: (0, 0))

    def per_layer(shape):
        return pl.BlockSpec((1,) + shape, lambda l: (l, 0, 0))

    in_specs = [
        full2((M, H)),                # x (post-embedding sum)
        full2((B, S)),                # additive attention mask
        full2((1, H)),                # emb LN gamma
        full2((1, H)),                # emb LN beta
        per_layer((H, I3)),           # Wqkv
        per_layer((1, I3)),           # bqkv
        per_layer((H, H)),            # Wo
        per_layer((1, H)),            # bo
        per_layer((1, H)),            # ln1 gamma
        per_layer((1, H)),            # ln1 beta
        per_layer((H, I)),            # Wi
        per_layer((1, I)),            # bi
        per_layer((I, H)),            # Wf
        per_layer((1, H)),            # bf
        per_layer((1, H)),            # ln2 gamma
        per_layer((1, H)),            # ln2 beta
    ]
    return pl.pallas_call(
        _encoder_kernel,
        out_shape=jax.ShapeDtypeStruct((M, H), F32),
        grid=(NLAYERS,),
        in_specs=in_specs,
        out_specs=pl.BlockSpec((M, H), lambda l: (0, 0)),
        compiler_params=pltpu.CompilerParams(dimension_semantics=("arbitrary",)),
    )(x2d, add_mask,
      p["emb_ln_g"].reshape(1, H), p["emb_ln_b"].reshape(1, H),
      p["Wqkv"], p["bqkv"], p["Wo"], p["bo"], p["ln1_g"], p["ln1_b"],
      p["Wi"], p["bi"], p["Wf"], p["bf"], p["ln2_g"], p["ln2_b"])


# ============================ Kernel 2: fused capsule + adapter + head ============================

def _capsule_adapter_head_kernel(
        x_ref,                         # (M, H) sequence output
        wsem_ref, bsem_ref,            # (H, T*D), (1, T*D)
        route_ref,                     # (T, D, D)
        tsv_ref, neg_ref, s_ref,       # SMEM: (T,), (T,), (1,1)
        el_ref, e1_ref, e2_ref,        # (1,H), (1,ADAPTER), (1,H) task embedding rows
        wl_ref, bl_ref,                # (D, H), (1, H)        "larger"
        w1_ref, b1_ref,                # (H, A), (1, A)        fc1
        w2_ref, b2_ref,                # (A, H), (1, H)        fc2
        wc_ref, bc_ref,                # (H, C), (1, C)        classifier
        out_ref, pooled_ref, y_ref, glarger_ref, gfc1_ref, gfc2_ref):
    x = x_ref[...]
    s = s_ref[0, 0]

    # --- semantic capsules: single lane-dense matmul, then per-task squash ---
    uall = jnp.dot(x, wsem_ref[...], preferred_element_type=F32) + bsem_ref[...]   # (M, T*D)
    u = [_squash(uall[:, k * CAPD:(k + 1) * CAPD]) for k in range(NTASKS)]

    # --- priors (kept in vregs, no scratch round-trip) ---
    p = [jnp.dot(u[k], route_ref[k], preferred_element_type=F32) for k in range(NTASKS)]

    # --- masked dynamic routing over tasks (tsv / neg scalars from SMEM) ---
    logits = [jnp.zeros((x.shape[0], 1), F32) for _ in range(NTASKS)]
    v = jnp.zeros((x.shape[0], CAPD), F32)
    for it in range(N_ROUTING_ITERS):
        l = [logits[k] * tsv_ref[k] + neg_ref[k] for k in range(NTASKS)]
        mx = l[0]
        for k in range(1, NTASKS):
            mx = jnp.maximum(mx, l[k])
        e = [jnp.exp(l[k] - mx) for k in range(NTASKS)]
        den = e[0]
        for k in range(1, NTASKS):
            den = den + e[k]
        inv = pl.reciprocal(den, approx=True)
        vote = e[0] * inv * p[0]
        for k in range(1, NTASKS):
            vote = vote + e[k] * inv * p[k]
        v = _squash(vote)
        if it < N_ROUTING_ITERS - 1:
            logits = [logits[k] + jnp.sum(p[k] * v, axis=-1, keepdims=True)
                      for k in range(NTASKS)]

    # --- HAT gates (sigmoid on the EUP, fused into this kernel) ---
    glarger = jax.nn.sigmoid(s * el_ref[...])          # (1, H)
    gfc1 = jax.nn.sigmoid(s * e1_ref[...])             # (1, A)
    gfc2 = jax.nn.sigmoid(s * e2_ref[...])             # (1, H)
    glarger_ref[...] = glarger
    gfc1_ref[...] = gfc1
    gfc2_ref[...] = gfc2

    # --- "larger" projection + gate + capsule skip-connection ---
    cap = (jnp.dot(v, wl_ref[...], preferred_element_type=F32) + bl_ref[...]) * glarger
    h = x + cap

    # --- masked adapter fc1/fc2 + residual from the BERT sequence output ---
    a1 = _gelu(jnp.dot(h, w1_ref[...], preferred_element_type=F32) + b1_ref[...]) * gfc1
    a2 = _gelu(jnp.dot(a1, w2_ref[...], preferred_element_type=F32) + b2_ref[...]) * gfc2
    out = x + a2
    out_ref[...] = out

    # --- pooled = mean over sequence; y = 'dil' classifier (dropout = identity, eval) ---
    pooled_rows = [jnp.mean(out[b * S:(b + 1) * S, :], axis=0, keepdims=True)
                   for b in range(B)]
    pooled = jnp.concatenate(pooled_rows, axis=0)                     # (B, H)
    pooled_ref[...] = pooled
    y_ref[...] = jnp.dot(pooled, wc_ref[...], preferred_element_type=F32) + bc_ref[...]


def pallas_capsule_adapter_head(x2d, p, t, s):
    wsem_cat = p["Wsem"].transpose(1, 0, 2).reshape(HIDDEN, NTASKS * CAPD)
    bsem_cat = p["bsem"].reshape(1, NTASKS * CAPD)
    tsv_row = p["tsv"][t].astype(F32)                                 # (T,)
    neg_row = jnp.where(tsv_row == 0, -10000.0, 0.0).astype(F32)      # (T,)
    s_arr = jnp.full((1, 1), s, F32)

    out_shapes = (
        jax.ShapeDtypeStruct((M, HIDDEN), F32),       # outputs
        jax.ShapeDtypeStruct((B, HIDDEN), F32),       # pooled
        jax.ShapeDtypeStruct((B, NCLASSES), F32),     # y
        jax.ShapeDtypeStruct((1, HIDDEN), F32),       # glarger
        jax.ShapeDtypeStruct((1, ADAPTER), F32),      # gfc1
        jax.ShapeDtypeStruct((1, HIDDEN), F32),       # gfc2
    )
    return pl.pallas_call(
        _capsule_adapter_head_kernel,
        out_shape=out_shapes,
        in_specs=[vmem(), vmem(), vmem(), vmem(),
                  smem(), smem(), smem(),
                  vmem(), vmem(), vmem(),
                  vmem(), vmem(), vmem(), vmem(), vmem(), vmem(), vmem(), vmem()],
        out_specs=tuple(vmem() for _ in range(6)),
    )(x2d, wsem_cat, bsem_cat, p["route"],
      tsv_row, neg_row, s_arr,
      p["e_larger"][t].reshape(1, HIDDEN),
      p["efc1"][t].reshape(1, ADAPTER),
      p["efc2"][t].reshape(1, HIDDEN),
      p["W_larger"], p["b_larger"].reshape(1, HIDDEN),
      p["Wfc1"], p["bfc1"].reshape(1, ADAPTER),
      p["Wfc2"], p["bfc2"].reshape(1, HIDDEN),
      p["Wcls"], p["bcls"].reshape(1, NCLASSES))


# ============================ model glue ============================

def bert_encoder(params, input_ids, segment_ids, input_mask):
    Bb, Ss = input_ids.shape
    x = (params["word_emb"][input_ids]
         + params["pos_emb"][jnp.arange(Ss)][None, :, :]
         + params["type_emb"][segment_ids])
    x2d = x.reshape(Bb * Ss, HIDDEN)
    add_mask = (1.0 - input_mask.astype(F32)) * -10000.0              # (B, S) additive
    # TODO(synk): BERT pooler (tanh(cls@Wp+bp)) is skipped: the module overwrites
    # pooled_output with dropout(mean(hidden_states,1)), so the pooler output is unused.
    return pallas_encoder(x2d, add_mask, params)                      # (B*S, H)


def net_forward(params, t, input_ids, segment_ids, input_mask, targets, s):
    # targets only feed auxiliary losses in the original module; unused in the forward pass.
    seq2d = bert_encoder(params, input_ids, segment_ids, input_mask)

    out2d, pooled_output, y, glarger, gfc1, gfc2 = pallas_capsule_adapter_head(
        seq2d, params, t, s)
    hidden_states = out2d.reshape(B, S, HIDDEN)

    # pooled_output = dropout(mean(hidden_states, 1)); dropout is identity in eval mode.
    # TODO(synk): training-mode dropout RNG not implemented (deterministic eval path only).
    masks = {
        "adapter_capsule_mask.fc1": gfc1,
        "adapter_capsule_mask.fc2": gfc2,
        "adapter_capsule_mask.capsule_net.tsv_capsules.larger": glarger,
    }
    return {"outputs": hidden_states, "pooled_output": pooled_output, "y": y, "masks": masks}


# ============================ deterministic params ============================

def make_params(key):
    ks = iter(jax.random.split(key, 160))

    def nrm(shape, scale=0.02):
        return (scale * jax.random.normal(next(ks), shape)).astype(F32)

    def zeros(shape):
        return jnp.zeros(shape, F32)

    def ones(shape):
        return jnp.ones(shape, F32)

    p = {
        # frozen "pretrained" BERT (synthetic weights -- do NOT load a checkpoint)
        "word_emb": nrm((VOCAB, HIDDEN)),
        "pos_emb": nrm((MAX_POS, HIDDEN)),
        "type_emb": nrm((TYPE_VOCAB, HIDDEN)),
        "emb_ln_g": ones((HIDDEN,)), "emb_ln_b": zeros((HIDDEN,)),
        # per-layer weights stacked on a leading NLAYERS axis; Q|K|V fused.
        "Wqkv": nrm((NLAYERS, HIDDEN, 3 * HIDDEN)), "bqkv": zeros((NLAYERS, 1, 3 * HIDDEN)),
        "Wo": nrm((NLAYERS, HIDDEN, HIDDEN)), "bo": zeros((NLAYERS, 1, HIDDEN)),
        "ln1_g": ones((NLAYERS, 1, HIDDEN)), "ln1_b": zeros((NLAYERS, 1, HIDDEN)),
        "Wi": nrm((NLAYERS, HIDDEN, INTER)), "bi": zeros((NLAYERS, 1, INTER)),
        "Wf": nrm((NLAYERS, INTER, HIDDEN)), "bf": zeros((NLAYERS, 1, HIDDEN)),
        "ln2_g": ones((NLAYERS, 1, HIDDEN)), "ln2_b": zeros((NLAYERS, 1, HIDDEN)),
        # adapter_capsule_mask
        "Wsem": nrm((NTASKS, HIDDEN, CAPD)), "bsem": zeros((NTASKS, 1, CAPD)),
        "route": nrm((NTASKS, CAPD, CAPD), scale=0.1),
        "W_larger": nrm((CAPD, HIDDEN)), "b_larger": zeros((HIDDEN,)),
        "e_larger": nrm((NTASKS, HIDDEN), scale=1.0),
        "Wfc1": nrm((HIDDEN, ADAPTER)), "bfc1": zeros((ADAPTER,)),
        "Wfc2": nrm((ADAPTER, HIDDEN)), "bfc2": zeros((HIDDEN,)),
        "efc1": nrm((NTASKS, ADAPTER), scale=1.0),
        "efc2": nrm((NTASKS, HIDDEN), scale=1.0),
        "tsv": jnp.tril(jnp.ones((NTASKS, NTASKS), F32)),
        # 'dil' scenario classifier head
        "Wcls": nrm((HIDDEN, NCLASSES)), "bcls": zeros((NCLASSES,)),
    }
    return p


# ============================ main ============================

if __name__ == "__main__":
    key = jax.random.PRNGKey(0)
    k_ids, k_tgt, k_par = jax.random.split(key, 3)

    params = make_params(k_par)

    input_ids = jax.random.randint(k_ids, (B, S), 0, VOCAB, dtype=jnp.int32)
    segment_ids = jnp.zeros((B, S), jnp.int32)
    input_mask = jnp.ones((B, S), jnp.int32).at[1, 6:].set(0)   # second sequence is padded
    targets = jax.random.randint(k_tgt, (B,), 0, NCLASSES, dtype=jnp.int32)
    t = 1          # current task id
    s = 4.0        # HAT gate temperature

    out = net_forward(params, t, input_ids, segment_ids, input_mask, targets, s)
    jax.block_until_ready(out)

    assert out["outputs"].shape == (B, S, HIDDEN)
    assert out["pooled_output"].shape == (B, HIDDEN)
    assert out["y"].shape == (B, NCLASSES)
    assert out["masks"]["adapter_capsule_mask.fc1"].shape == (1, ADAPTER)
    assert out["masks"]["adapter_capsule_mask.fc2"].shape == (1, HIDDEN)
    assert out["masks"]["adapter_capsule_mask.capsule_net.tsv_capsules.larger"].shape == (1, HIDDEN)
    print("KERNEL_OK")
</pallas_src>

<mosaic_0001>
module attributes {stable_mosaic.version = 11 : i64} {
  func.func @_encoder_kernel(%arg0: i32, %arg1: memref<16x32xf32, #tpu.memory_space<vmem>>, %arg2: memref<2x8xf32, #tpu.memory_space<vmem>>, %arg3: memref<1x32xf32, #tpu.memory_space<vmem>>, %arg4: memref<1x32xf32, #tpu.memory_space<vmem>>, %arg5: memref<1x32x96xf32, #tpu.memory_space<vmem>>, %arg6: memref<1x1x96xf32, #tpu.memory_space<vmem>>, %arg7: memref<1x32x32xf32, #tpu.memory_space<vmem>>, %arg8: memref<1x1x32xf32, #tpu.memory_space<vmem>>, %arg9: memref<1x1x32xf32, #tpu.memory_space<vmem>>, %arg10: memref<1x1x32xf32, #tpu.memory_space<vmem>>, %arg11: memref<1x32x64xf32, #tpu.memory_space<vmem>>, %arg12: memref<1x1x64xf32, #tpu.memory_space<vmem>>, %arg13: memref<1x64x32xf32, #tpu.memory_space<vmem>>, %arg14: memref<1x1x32xf32, #tpu.memory_space<vmem>>, %arg15: memref<1x1x32xf32, #tpu.memory_space<vmem>>, %arg16: memref<1x1x32xf32, #tpu.memory_space<vmem>>, %arg17: memref<16x32xf32, #tpu.memory_space<vmem>>) attributes {dimension_semantics = [#tpu.dimension_semantics<arbitrary>], iteration_bounds = array<i64: 2>, scalar_prefetch = 0 : i64, scratch_operands = 0 : i64, tpu.core_type = #tpu.core_type<tc>, window_params = [{pipeline_mode = #tpu.pipeline_mode<synchronous>, transform_indices = @transform_0, window_bounds = array<i64: 16, 32>}, {pipeline_mode = #tpu.pipeline_mode<synchronous>, transform_indices = @transform_1, window_bounds = array<i64: 2, 8>}, {pipeline_mode = #tpu.pipeline_mode<synchronous>, transform_indices = @transform_2, window_bounds = array<i64: 1, 32>}, {pipeline_mode = #tpu.pipeline_mode<synchronous>, transform_indices = @transform_3, window_bounds = array<i64: 1, 32>}, {transform_indices = @transform_4, window_bounds = array<i64: 1, 32, 96>}, {transform_indices = @transform_5, window_bounds = array<i64: 1, 1, 96>}, {transform_indices = @transform_6, window_bounds = array<i64: 1, 32, 32>}, {transform_indices = @transform_7, window_bounds = array<i64: 1, 1, 32>}, {transform_indices = @transform_8, window_bounds = array<i64: 1, 1, 32>}, {transform_indices = @transform_9, window_bounds = array<i64: 1, 1, 32>}, {transform_indices = @transform_10, window_bounds = array<i64: 1, 32, 64>}, {transform_indices = @transform_11, window_bounds = array<i64: 1, 1, 64>}, {transform_indices = @transform_12, window_bounds = array<i64: 1, 64, 32>}, {transform_indices = @transform_13, window_bounds = array<i64: 1, 1, 32>}, {transform_indices = @transform_14, window_bounds = array<i64: 1, 1, 32>}, {transform_indices = @transform_15, window_bounds = array<i64: 1, 1, 32>}, {pipeline_mode = #tpu.pipeline_mode<synchronous>, transform_indices = @transform_16, window_bounds = array<i64: 16, 32>}]} {
    %c0_i32 = arith.constant 0 : i32
    %0 = arith.cmpi eq, %arg0, %c0_i32 : i32
    %1 = arith.extui %0 : i1 to i32
    %c0_i32_0 = arith.constant 0 : i32
    %2 = arith.cmpi ne, %1, %c0_i32_0 : i32
    scf.if %2 {
      %c0_100 = arith.constant 0 : index
      %c0_101 = arith.constant 0 : index
      %257 = vector.load %arg1[%c0_100, %c0_101] : memref<16x32xf32, #tpu.memory_space<vmem>>, vector<16x32xf32>
      %c0_102 = arith.constant 0 : index
      %c0_103 = arith.constant 0 : index
      %258 = vector.load %arg3[%c0_102, %c0_103] : memref<1x32xf32, #tpu.memory_space<vmem>>, vector<1x32xf32>
      %c0_104 = arith.constant 0 : index
      %c0_105 = arith.constant 0 : index
      %259 = vector.load %arg4[%c0_104, %c0_105] : memref<1x32xf32, #tpu.memory_space<vmem>>, vector<1x32xf32>
      %cst_106 = arith.constant dense<0.000000e+00> : vector<16xf32>
      %260 = vector.multi_reduction <add>, %257, %cst_106 [1] : vector<16x32xf32> to vector<16xf32>
      %261 = vector.shape_cast %260 : vector<16xf32> to vector<16x1xf32>
      %cst_107 = arith.constant 3.200000e+01 : f32
      %262 = vector.broadcast %cst_107 : f32 to vector<16x1xf32>
      %263 = arith.divf %261, %262 : vector<16x1xf32>
      %264 = vector.broadcast %263 : vector<16x1xf32> to vector<16x32xf32>
      %265 = arith.subf %257, %264 : vector<16x32xf32>
      %266 = arith.mulf %265, %265 : vector<16x32xf32>
      %cst_108 = arith.constant dense<0.000000e+00> : vector<16xf32>
      %267 = vector.multi_reduction <add>, %266, %cst_108 [1] : vector<16x32xf32> to vector<16xf32>
      %268 = vector.shape_cast %267 : vector<16xf32> to vector<16x1xf32>
      %cst_109 = arith.constant 3.200000e+01 : f32
      %269 = vector.broadcast %cst_109 : f32 to vector<16x1xf32>
      %270 = arith.divf %268, %269 : vector<16x1xf32>
      %271 = vector.broadcast %263 : vector<16x1xf32> to vector<16x32xf32>
      %272 = arith.subf %257, %271 : vector<16x32xf32>
      %cst_110 = arith.constant 9.99999996E-13 : f32
      %273 = vector.broadcast %cst_110 : f32 to vector<16x1xf32>
      %274 = arith.addf %270, %273 : vector<16x1xf32>
      %275 = math.rsqrt %274 : vector<16x1xf32>
      %276 = vector.broadcast %275 : vector<16x1xf32> to vector<16x32xf32>
      %277 = arith.mulf %272, %276 : vector<16x32xf32>
      %278 = vector.broadcast %258 : vector<1x32xf32> to vector<16x32xf32>
      %279 = arith.mulf %277, %278 : vector<16x32xf32>
      %280 = vector.broadcast %259 : vector<1x32xf32> to vector<16x32xf32>
      %281 = arith.addf %279, %280 : vector<16x32xf32>
      %c0_111 = arith.constant 0 : index
      %c0_112 = arith.constant 0 : index
      %282 = vector.load %arg17[%c0_111, %c0_112] : memref<16x32xf32, #tpu.memory_space<vmem>>, vector<16x32xf32>
      tpu.vector_store %arg17[%c0_111, %c0_112], %281 {strides = array<i32>} : memref<16x32xf32, #tpu.memory_space<vmem>>, vector<16x32xf32>,
    } else {
    }
    %c0 = arith.constant 0 : index
    %c0_1 = arith.constant 0 : index
    %3 = vector.load %arg17[%c0, %c0_1] : memref<16x32xf32, #tpu.memory_space<vmem>>, vector<16x32xf32>
    %c0_2 = arith.constant 0 : index
    %c0_3 = arith.constant 0 : index
    %c0_4 = arith.constant 0 : index
    %4 = vector.load %arg5[%c0_2, %c0_3, %c0_4] : memref<1x32x96xf32, #tpu.memory_space<vmem>>, vector<1x32x96xf32>
    %5 = vector.shape_cast %4 : vector<1x32x96xf32> to vector<32x96xf32>
    %cst = arith.constant dense<0.000000e+00> : vector<16x96xf32>
    %6 = tpu.matmul %3, %5, %cst {dimension_numbers = #tpu.dot_dimension_numbers<[1], [0], [0], [1], [0, 0, 1, 1], [], []>} : vector<16x32xf32>, vector<32x96xf32>, vector<16x96xf32> -> vector<16x96xf32>
    %c0_5 = arith.constant 0 : index
    %c0_6 = arith.constant 0 : index
    %c0_7 = arith.constant 0 : index
    %7 = vector.load %arg6[%c0_5, %c0_6, %c0_7] : memref<1x1x96xf32, #tpu.memory_space<vmem>>, vector<1x1x96xf32>
    %8 = vector.shape_cast %7 : vector<1x1x96xf32> to vector<1x96xf32>
    %9 = vector.broadcast %8 : vector<1x96xf32> to vector<16x96xf32>
    %10 = arith.addf %6, %9 : vector<16x96xf32>
    %c0_8 = arith.constant 0 : index
    %c0_9 = arith.constant 0 : index
    %11 = vector.load %arg2[%c0_8, %c0_9] : memref<2x8xf32, #tpu.memory_space<vmem>>, vector<1x8xf32>
    %12 = vector.extract_strided_slice %10 {offsets = [0, 0], sizes = [8, 8], strides = [1, 1]} : vector<16x96xf32> to vector<8x8xf32>
    %13 = vector.extract_strided_slice %10 {offsets = [0, 32], sizes = [8, 8], strides = [1, 1]} : vector<16x96xf32> to vector<8x8xf32>
    %14 = vector.extract_strided_slice %10 {offsets = [0, 64], sizes = [8, 8], strides = [1, 1]} : vector<16x96xf32> to vector<8x8xf32>
    "tpu.trace_start"() <{level = 10 : i32, message = "qd,kd->qk"}> : () -> ()
    %cst_10 = arith.constant dense<0.000000e+00> : vector<8x8xf32>
    %15 = tpu.matmul %12, %13, %cst_10 {dimension_numbers = #tpu.dot_dimension_numbers<[1], [1], [0], [0], [0, 0, 1, 0], [], []>} : vector<8x8xf32>, vector<8x8xf32>, vector<8x8xf32> -> vector<8x8xf32>
    "tpu.trace_stop"() : () -> ()
    %cst_11 = arith.constant 0.353553385 : f32
    %16 = vector.broadcast %cst_11 : f32 to vector<8x8xf32>
    %17 = arith.mulf %15, %16 : vector<8x8xf32>
    %18 = vector.broadcast %11 : vector<1x8xf32> to vector<8x8xf32>
    %19 = arith.addf %17, %18 : vector<8x8xf32>
    %cst_12 = arith.constant dense<0xFF800000> : vector<8xf32>
    %20 = vector.multi_reduction <maximumf>, %19, %cst_12 [1] : vector<8x8xf32> to vector<8xf32>
    %21 = vector.shape_cast %20 : vector<8xf32> to vector<8x1xf32>
    %22 = vector.broadcast %21 : vector<8x1xf32> to vector<8x8xf32>
    %23 = arith.subf %19, %22 : vector<8x8xf32>
    %24 = math.exp %23 : vector<8x8xf32>
    %cst_13 = arith.constant dense<0.000000e+00> : vector<8xf32>
    %25 = vector.multi_reduction <add>, %24, %cst_13 [1] : vector<8x8xf32> to vector<8xf32>
    %26 = vector.shape_cast %25 : vector<8xf32> to vector<8x1xf32>
    %27 = tpu.reciprocal %26 {approx = true} : vector<8x1xf32> -> vector<8x1xf32>
    %28 = vector.broadcast %27 : vector<8x1xf32> to vector<8x8xf32>
    %29 = arith.mulf %24, %28 : vector<8x8xf32>
    %cst_14 = arith.constant dense<0.000000e+00> : vector<8x8xf32>
    %30 = tpu.matmul %29, %14, %cst_14 {dimension_numbers = #tpu.dot_dimension_numbers<[1], [0], [0], [1], [0, 0, 1, 1], [], []>} : vector<8x8xf32>, vector<8x8xf32>, vector<8x8xf32> -> vector<8x8xf32>
    %31 = vector.extract_strided_slice %10 {offsets = [0, 8], sizes = [8, 8], strides = [1, 1]} : vector<16x96xf32> to vector<8x8xf32>
    %32 = vector.extract_strided_slice %10 {offsets = [0, 40], sizes = [8, 8], strides = [1, 1]} : vector<16x96xf32> to vector<8x8xf32>
    %33 = vector.extract_strided_slice %10 {offsets = [0, 72], sizes = [8, 8], strides = [1, 1]} : vector<16x96xf32> to vector<8x8xf32>
    "tpu.trace_start"() <{level = 10 : i32, message = "qd,kd->qk"}> : () -> ()
    %cst_15 = arith.constant dense<0.000000e+00> : vector<8x8xf32>
    %34 = tpu.matmul %31, %32, %cst_15 {dimension_numbers = #tpu.dot_dimension_numbers<[1], [1], [0], [0], [0, 0, 1, 0], [], []>} : vector<8x8xf32>, vector<8x8xf32>, vector<8x8xf32> -> vector<8x8xf32>
    "tpu.trace_stop"() : () -> ()
    %cst_16 = arith.constant 0.353553385 : f32
    %35 = vector.broadcast %cst_16 : f32 to vector<8x8xf32>
    %36 = arith.mulf %34, %35 : vector<8x8xf32>
    %37 = vector.broadcast %11 : vector<1x8xf32> to vector<8x8xf32>
    %38 = arith.addf %36, %37 : vector<8x8xf32>
    %cst_17 = arith.constant dense<0xFF800000> : vector<8xf32>
    %39 = vector.multi_reduction <maximumf>, %38, %cst_17 [1] : vector<8x8xf32> to vector<8xf32>
    %40 = vector.shape_cast %39 : vector<8xf32> to vector<8x1xf32>
    %41 = vector.broadcast %40 : vector<8x1xf32> to vector<8x8xf32>
    %42 = arith.subf %38, %41 : vector<8x8xf32>
    %43 = math.exp %42 : vector<8x8xf32>
    %cst_18 = arith.constant dense<0.000000e+00> : vector<8xf32>
    %44 = vector.multi_reduction <add>, %43, %cst_18 [1] : vector<8x8xf32> to vector<8xf32>
    %45 = vector.shape_cast %44 : vector<8xf32> to vector<8x1xf32>
    %46 = tpu.reciprocal %45 {approx = true} : vector<8x1xf32> -> vector<8x1xf32>
    %47 = vector.broadcast %46 : vector<8x1xf32> to vector<8x8xf32>
    %48 = arith.mulf %43, %47 : vector<8x8xf32>
    %cst_19 = arith.constant dense<0.000000e+00> : vector<8x8xf32>
    %49 = tpu.matmul %48, %33, %cst_19 {dimension_numbers = #tpu.dot_dimension_numbers<[1], [0], [0], [1], [0, 0, 1, 1], [], []>} : vector<8x8xf32>, vector<8x8xf32>, vector<8x8xf32> -> vector<8x8xf32>
    %50 = vector.extract_strided_slice %10 {offsets = [0, 16], sizes = [8, 8], strides = [1, 1]} : vector<16x96xf32> to vector<8x8xf32>
    %51 = vector.extract_strided_slice %10 {offsets = [0, 48], sizes = [8, 8], strides = [1, 1]} : vector<16x96xf32> to vector<8x8xf32>
    %52 = vector.extract_strided_slice %10 {offsets = [0, 80], sizes = [8, 8], strides = [1, 1]} : vector<16x96xf32> to vector<8x8xf32>
    "tpu.trace_start"() <{level = 10 : i32, message = "qd,kd->qk"}> : () -> ()
    %cst_20 = arith.constant dense<0.000000e+00> : vector<8x8xf32>
    %53 = tpu.matmul %50, %51, %cst_20 {dimension_numbers = #tpu.dot_dimension_numbers<[1], [1], [0], [0], [0, 0, 1, 0], [], []>} : vector<8x8xf32>, vector<8x8xf32>, vector<8x8xf32> -> vector<8x8xf32>
    "tpu.trace_stop"() : () -> ()
    %cst_21 = arith.constant 0.353553385 : f32
    %54 = vector.broadcast %cst_21 : f32 to vector<8x8xf32>
    %55 = arith.mulf %53, %54 : vector<8x8xf32>
    %56 = vector.broadcast %11 : vector<1x8xf32> to vector<8x8xf32>
    %57 = arith.addf %55, %56 : vector<8x8xf32>
    %cst_22 = arith.constant dense<0xFF800000> : vector<8xf32>
    %58 = vector.multi_reduction <maximumf>, %57, %cst_22 [1] : vector<8x8xf32> to vector<8xf32>
    %59 = vector.shape_cast %58 : vector<8xf32> to vector<8x1xf32>
    %60 = vector.broadcast %59 : vector<8x1xf32> to vector<8x8xf32>
    %61 = arith.subf %57, %60 : vector<8x8xf32>
    %62 = math.exp %61 : vector<8x8xf32>
    %cst_23 = arith.constant dense<0.000000e+00> : vector<8xf32>
    %63 = vector.multi_reduction <add>, %62, %cst_23 [1] : vector<8x8xf32> to vector<8xf32>
    %64 = vector.shape_cast %63 : vector<8xf32> to vector<8x1xf32>
    %65 = tpu.reciprocal %64 {approx = true} : vector<8x1xf32> -> vector<8x1xf32>
    %66 = vector.broadcast %65 : vector<8x1xf32> to vector<8x8xf32>
    %67 = arith.mulf %62, %66 : vector<8x8xf32>
    %cst_24 = arith.constant dense<0.000000e+00> : vector<8x8xf32>
    %68 = tpu.matmul %67, %52, %cst_24 {dimension_numbers = #tpu.dot_dimension_numbers<[1], [0], [0], [1], [0, 0, 1, 1], [], []>} : vector<8x8xf32>, vector<8x8xf32>, vector<8x8xf32> -> vector<8x8xf32>
    %69 = vector.extract_strided_slice %10 {offsets = [0, 24], sizes = [8, 8], strides = [1, 1]} : vector<16x96xf32> to vector<8x8xf32>
    %70 = vector.extract_strided_slice %10 {offsets = [0, 56], sizes = [8, 8], strides = [1, 1]} : vector<16x96xf32> to vector<8x8xf32>
    %71 = vector.extract_strided_slice %10 {offsets = [0, 88], sizes = [8, 8], strides = [1, 1]} : vector<16x96xf32> to vector<8x8xf32>
    "tpu.trace_start"() <{level = 10 : i32, message = "qd,kd->qk"}> : () -> ()
    %cst_25 = arith.constant dense<0.000000e+00> : vector<8x8xf32>
    %72 = tpu.matmul %69, %70, %cst_25 {dimension_numbers = #tpu.dot_dimension_numbers<[1], [1], [0], [0], [0, 0, 1, 0], [], []>} : vector<8x8xf32>, vector<8x8xf32>, vector<8x8xf32> -> vector<8x8xf32>
    "tpu.trace_stop"() : () -> ()
    %cst_26 = arith.constant 0.353553385 : f32
    %73 = vector.broadcast %cst_26 : f32 to vector<8x8xf32>
    %74 = arith.mulf %72, %73 : vector<8x8xf32>
    %75 = vector.broadcast %11 : vector<1x8xf32> to vector<8x8xf32>
    %76 = arith.addf %74, %75 : vector<8x8xf32>
    %cst_27 = arith.constant dense<0xFF800000> : vector<8xf32>
    %77 = vector.multi_reduction <maximumf>, %76, %cst_27 [1] : vector<8x8xf32> to vector<8xf32>
    %78 = vector.shape_cast %77 : vector<8xf32> to vector<8x1xf32>
    %79 = vector.broadcast %78 : vector<8x1xf32> to vector<8x8xf32>
    %80 = arith.subf %76, %79 : vector<8x8xf32>
    %81 = math.exp %80 : vector<8x8xf32>
    %cst_28 = arith.constant dense<0.000000e+00> : vector<8xf32>
    %82 = vector.multi_reduction <add>, %81, %cst_28 [1] : vector<8x8xf32> to vector<8xf32>
    %83 = vector.shape_cast %82 : vector<8xf32> to vector<8x1xf32>
    %84 = tpu.reciprocal %83 {approx = true} : vector<8x1xf32> -> vector<8x1xf32>
    %85 = vector.broadcast %84 : vector<8x1xf32> to vector<8x8xf32>
    %86 = arith.mulf %81, %85 : vector<8x8xf32>
    %cst_29 = arith.constant dense<0.000000e+00> : vector<8x8xf32>
    %87 = tpu.matmul %86, %71, %cst_29 {dimension_numbers = #tpu.dot_dimension_numbers<[1], [0], [0], [1], [0, 0, 1, 1], [], []>} : vector<8x8xf32>, vector<8x8xf32>, vector<8x8xf32> -> vector<8x8xf32>
    %88 = tpu.concatenate %30, %49, %68, %87 in 1 : vector<8x8xf32>, vector<8x8xf32>, vector<8x8xf32>, vector<8x8xf32> -> vector<8x32xf32>
    %c1 = arith.constant 1 : index
    %c0_30 = arith.constant 0 : index
    %89 = vector.load %arg2[%c1, %c0_30] : memref<2x8xf32, #tpu.memory_space<vmem>>, vector<1x8xf32>
    %90 = vector.extract_strided_slice %10 {offsets = [8, 0], sizes = [8, 8], strides = [1, 1]} : vector<16x96xf32> to vector<8x8xf32>
    %91 = vector.extract_strided_slice %10 {offsets = [8, 32], sizes = [8, 8], strides = [1, 1]} : vector<16x96xf32> to vector<8x8xf32>
    %92 = vector.extract_strided_slice %10 {offsets = [8, 64], sizes = [8, 8], strides = [1, 1]} : vector<16x96xf32> to vector<8x8xf32>
    "tpu.trace_start"() <{level = 10 : i32, message = "qd,kd->qk"}> : () -> ()
    %cst_31 = arith.constant dense<0.000000e+00> : vector<8x8xf32>
    %93 = tpu.matmul %90, %91, %cst_31 {dimension_numbers = #tpu.dot_dimension_numbers<[1], [1], [0], [0], [0, 0, 1, 0], [], []>} : vector<8x8xf32>, vector<8x8xf32>, vector<8x8xf32> -> vector<8x8xf32>
    "tpu.trace_stop"() : () -> ()
    %cst_32 = arith.constant 0.353553385 : f32
    %94 = vector.broadcast %cst_32 : f32 to vector<8x8xf32>
    %95 = arith.mulf %93, %94 : vector<8x8xf32>
    %96 = vector.broadcast %89 : vector<1x8xf32> to vector<8x8xf32>
    %97 = arith.addf %95, %96 : vector<8x8xf32>
    %cst_33 = arith.constant dense<0xFF800000> : vector<8xf32>
    %98 = vector.multi_reduction <maximumf>, %97, %cst_33 [1] : vector<8x8xf32> to vector<8xf32>
    %99 = vector.shape_cast %98 : vector<8xf32> to vector<8x1xf32>
    %100 = vector.broadcast %99 : vector<8x1xf32> to vector<8x8xf32>
    %101 = arith.subf %97, %100 : vector<8x8xf32>
    %102 = math.exp %101 : vector<8x8xf32>
    %cst_34 = arith.constant dense<0.000000e+00> : vector<8xf32>
    %103 = vector.multi_reduction <add>, %102, %cst_34 [1] : vector<8x8xf32> to vector<8xf32>
    %104 = vector.shape_cast %103 : vector<8xf32> to vector<8x1xf32>
    %105 = tpu.reciprocal %104 {approx = true} : vector<8x1xf32> -> vector<8x1xf32>
    %106 = vector.broadcast %105 : vector<8x1xf32> to vector<8x8xf32>
    %107 = arith.mulf %102, %106 : vector<8x8xf32>
    %cst_35 = arith.constant dense<0.000000e+00> : vector<8x8xf32>
    %108 = tpu.matmul %107, %92, %cst_35 {dimension_numbers = #tpu.dot_dimension_numbers<[1], [0], [0], [1], [0, 0, 1, 1], [], []>} : vector<8x8xf32>, vector<8x8xf32>, vector<8x8xf32> -> vector<8x8xf32>
    %109 = vector.extract_strided_slice %10 {offsets = [8, 8], sizes = [8, 8], strides = [1, 1]} : vector<16x96xf32> to vector<8x8xf32>
    %110 = vector.extract_strided_slice %10 {offsets = [8, 40], sizes = [8, 8], strides = [1, 1]} : vector<16x96xf32> to vector<8x8xf32>
    %111 = vector.extract_strided_slice %10 {offsets = [8, 72], sizes = [8, 8], strides = [1, 1]} : vector<16x96xf32> to vector<8x8xf32>
    "tpu.trace_start"() <{level = 10 : i32, message = "qd,kd->qk"}> : () -> ()
    %cst_36 = arith.constant dense<0.000000e+00> : vector<8x8xf32>
    %112 = tpu.matmul %109, %110, %cst_36 {dimension_numbers = #tpu.dot_dimension_numbers<[1], [1], [0], [0], [0, 0, 1, 0], [], []>} : vector<8x8xf32>, vector<8x8xf32>, vector<8x8xf32> -> vector<8x8xf32>
    "tpu.trace_stop"() : () -> ()
    %cst_37 = arith.constant 0.353553385 : f32
    %113 = vector.broadcast %cst_37 : f32 to vector<8x8xf32>
    %114 = arith.mulf %112, %113 : vector<8x8xf32>
    %115 = vector.broadcast %89 : vector<1x8xf32> to vector<8x8xf32>
    %116 = arith.addf %114, %115 : vector<8x8xf32>
    %cst_38 = arith.constant dense<0xFF800000> : vector<8xf32>
    %117 = vector.multi_reduction <maximumf>, %116, %cst_38 [1] : vector<8x8xf32> to vector<8xf32>
    %118 = vector.shape_cast %117 : vector<8xf32> to vector<8x1xf32>
    %119 = vector.broadcast %118 : vector<8x1xf32> to vector<8x8xf32>
    %120 = arith.subf %116, %119 : vector<8x8xf32>
    %121 = math.exp %120 : vector<8x8xf32>
    %cst_39 = arith.constant dense<0.000000e+00> : vector<8xf32>
    %122 = vector.multi_reduction <add>, %121, %cst_39 [1] : vector<8x8xf32> to vector<8xf32>
    %123 = vector.shape_cast %122 : vector<8xf32> to vector<8x1xf32>
    %124 = tpu.reciprocal %123 {approx = true} : vector<8x1xf32> -> vector<8x1xf32>
    %125 = vector.broadcast %124 : vector<8x1xf32> to vector<8x8xf32>
    %126 = arith.mulf %121, %125 : vector<8x8xf32>
    %cst_40 = arith.constant dense<0.000000e+00> : vector<8x8xf32>
    %127 = tpu.matmul %126, %111, %cst_40 {dimension_numbers = #tpu.dot_dimension_numbers<[1], [0], [0], [1], [0, 0, 1, 1], [], []>} : vector<8x8xf32>, vector<8x8xf32>, vector<8x8xf32> -> vector<8x8xf32>
    %128 = vector.extract_strided_slice %10 {offsets = [8, 16], sizes = [8, 8], strides = [1, 1]} : vector<16x96xf32> to vector<8x8xf32>
    %129 = vector.extract_strided_slice %10 {offsets = [8, 48], sizes = [8, 8], strides = [1, 1]} : vector<16x96xf32> to vector<8x8xf32>
    %130 = vector.extract_strided_slice %10 {offsets = [8, 80], sizes = [8, 8], strides = [1, 1]} : vector<16x96xf32> to vector<8x8xf32>
    "tpu.trace_start"() <{level = 10 : i32, message = "qd,kd->qk"}> : () -> ()
    %cst_41 = arith.constant dense<0.000000e+00> : vector<8x8xf32>
    %131 = tpu.matmul %128, %129, %cst_41 {dimension_numbers = #tpu.dot_dimension_numbers<[1], [1], [0], [0], [0, 0, 1, 0], [], []>} : vector<8x8xf32>, vector<8x8xf32>, vector<8x8xf32> -> vector<8x8xf32>
    "tpu.trace_stop"() : () -> ()
    %cst_42 = arith.constant 0.353553385 : f32
    %132 = vector.broadcast %cst_42 : f32 to vector<8x8xf32>
    %133 = arith.mulf %131, %132 : vector<8x8xf32>
    %134 = vector.broadcast %89 : vector<1x8xf32> to vector<8x8xf32>
    %135 = arith.addf %133, %134 : vector<8x8xf32>
    %cst_43 = arith.constant dense<0xFF800000> : vector<8xf32>
    %136 = vector.multi_reduction <maximumf>, %135, %cst_43 [1] : vector<8x8xf32> to vector<8xf32>
    %137 = vector.shape_cast %136 : vector<8xf32> to vector<8x1xf32>
    %138 = vector.broadcast %137 : vector<8x1xf32> to vector<8x8xf32>
    %139 = arith.subf %135, %138 : vector<8x8xf32>
    %140 = math.exp %139 : vector<8x8xf32>
    %cst_44 = arith.constant dense<0.000000e+00> : vector<8xf32>
    %141 = vector.multi_reduction <add>, %140, %cst_44 [1] : vector<8x8xf32> to vector<8xf32>
    %142 = vector.shape_cast %141 : vector<8xf32> to vector<8x1xf32>
    %143 = tpu.reciprocal %142 {approx = true} : vector<8x1xf32> -> vector<8x1xf32>
    %144 = vector.broadcast %143 : vector<8x1xf32> to vector<8x8xf32>
    %145 = arith.mulf %140, %144 : vector<8x8xf32>
    %cst_45 = arith.constant dense<0.000000e+00> : vector<8x8xf32>
    %146 = tpu.matmul %145, %130, %cst_45 {dimension_numbers = #tpu.dot_dimension_numbers<[1], [0], [0], [1], [0, 0, 1, 1], [], []>} : vector<8x8xf32>, vector<8x8xf32>, vector<8x8xf32> -> vector<8x8xf32>
    %147 = vector.extract_strided_slice %10 {offsets = [8, 24], sizes = [8, 8], strides = [1, 1]} : vector<16x96xf32> to vector<8x8xf32>
    %148 = vector.extract_strided_slice %10 {offsets = [8, 56], sizes = [8, 8], strides = [1, 1]} : vector<16x96xf32> to vector<8x8xf32>
    %149 = vector.extract_strided_slice %10 {offsets = [8, 88], sizes = [8, 8], strides = [1, 1]} : vector<16x96xf32> to vector<8x8xf32>
    "tpu.trace_start"() <{level = 10 : i32, message = "qd,kd->qk"}> : () -> ()
    %cst_46 = arith.constant dense<0.000000e+00> : vector<8x8xf32>
    %150 = tpu.matmul %147, %148, %cst_46 {dimension_numbers = #tpu.dot_dimension_numbers<[1], [1], [0], [0], [0, 0, 1, 0], [], []>} : vector<8x8xf32>, vector<8x8xf32>, vector<8x8xf32> -> vector<8x8xf32>
    "tpu.trace_stop"() : () -> ()
    %cst_47 = arith.constant 0.353553385 : f32
    %151 = vector.broadcast %cst_47 : f32 to vector<8x8xf32>
    %152 = arith.mulf %150, %151 : vector<8x8xf32>
    %153 = vector.broadcast %89 : vector<1x8xf32> to vector<8x8xf32>
    %154 = arith.addf %152, %153 : vector<8x8xf32>
    %cst_48 = arith.constant dense<0xFF800000> : vector<8xf32>
    %155 = vector.multi_reduction <maximumf>, %154, %cst_48 [1] : vector<8x8xf32> to vector<8xf32>
    %156 = vector.shape_cast %155 : vector<8xf32> to vector<8x1xf32>
    %157 = vector.broadcast %156 : vector<8x1xf32> to vector<8x8xf32>
    %158 = arith.subf %154, %157 : vector<8x8xf32>
    %159 = math.exp %158 : vector<8x8xf32>
    %cst_49 = arith.constant dense<0.000000e+00> : vector<8xf32>
    %160 = vector.multi_reduction <add>, %159, %cst_49 [1] : vector<8x8xf32> to vector<8xf32>
    %161 = vector.shape_cast %160 : vector<8xf32> to vector<8x1xf32>
    %162 = tpu.reciprocal %161 {approx = true} : vector<8x1xf32> -> vector<8x1xf32>
    %163 = vector.broadcast %162 : vector<8x1xf32> to vector<8x8xf32>
    %164 = arith.mulf %159, %163 : vector<8x8xf32>
    %cst_50 = arith.constant dense<0.000000e+00> : vector<8x8xf32>
    %165 = tpu.matmul %164, %149, %cst_50 {dimension_numbers = #tpu.dot_dimension_numbers<[1], [0], [0], [1], [0, 0, 1, 1], [], []>} : vector<8x8xf32>, vector<8x8xf32>, vector<8x8xf32> -> vector<8x8xf32>
    %166 = tpu.concatenate %108, %127, %146, %165 in 1 : vector<8x8xf32>, vector<8x8xf32>, vector<8x8xf32>, vector<8x8xf32> -> vector<8x32xf32>
    %167 = tpu.concatenate %88, %166 in 0 : vector<8x32xf32>, vector<8x32xf32> -> vector<16x32xf32>
    %c0_51 = arith.constant 0 : index
    %c0_52 = arith.constant 0 : index
    %c0_53 = arith.constant 0 : index
    %168 = vector.load %arg7[%c0_51, %c0_52, %c0_53] : memref<1x32x32xf32, #tpu.memory_space<vmem>>, vector<1x32x32xf32>
    %169 = vector.shape_cast %168 : vector<1x32x32xf32> to vector<32x32xf32>
    %cst_54 = arith.constant dense<0.000000e+00> : vector<16x32xf32>
    %170 = tpu.matmul %167, %169, %cst_54 {dimension_numbers = #tpu.dot_dimension_numbers<[1], [0], [0], [1], [0, 0, 1, 1], [], []>} : vector<16x32xf32>, vector<32x32xf32>, vector<16x32xf32> -> vector<16x32xf32>
    %c0_55 = arith.constant 0 : index
    %c0_56 = arith.constant 0 : index
    %c0_57 = arith.constant 0 : index
    %171 = vector.load %arg8[%c0_55, %c0_56, %c0_57] : memref<1x1x32xf32, #tpu.memory_space<vmem>>, vector<1x1x32xf32>
    %172 = vector.shape_cast %171 : vector<1x1x32xf32> to vector<1x32xf32>
    %173 = vector.broadcast %172 : vector<1x32xf32> to vector<16x32xf32>
    %174 = arith.addf %170, %173 : vector<16x32xf32>
    %175 = arith.addf %3, %174 : vector<16x32xf32>
    %c0_58 = arith.constant 0 : index
    %c0_59 = arith.constant 0 : index
    %c0_60 = arith.constant 0 : index
    %176 = vector.load %arg9[%c0_58, %c0_59, %c0_60] : memref<1x1x32xf32, #tpu.memory_space<vmem>>, vector<1x1x32xf32>
    %177 = vector.shape_cast %176 : vector<1x1x32xf32> to vector<1x32xf32>
    %c0_61 = arith.constant 0 : index
    %c0_62 = arith.constant 0 : index
    %c0_63 = arith.constant 0 : index
    %178 = vector.load %arg10[%c0_61, %c0_62, %c0_63] : memref<1x1x32xf32, #tpu.memory_space<vmem>>, vector<1x1x32xf32>
    %179 = vector.shape_cast %178 : vector<1x1x32xf32> to vector<1x32xf32>
    %cst_64 = arith.constant dense<0.000000e+00> : vector<16xf32>
    %180 = vector.multi_reduction <add>, %175, %cst_64 [1] : vector<16x32xf32> to vector<16xf32>
    %181 = vector.shape_cast %180 : vector<16xf32> to vector<16x1xf32>
    %cst_65 = arith.constant 3.200000e+01 : f32
    %182 = vector.broadcast %cst_65 : f32 to vector<16x1xf32>
    %183 = arith.divf %181, %182 : vector<16x1xf32>
    %184 = vector.broadcast %183 : vector<16x1xf32> to vector<16x32xf32>
    %185 = arith.subf %175, %184 : vector<16x32xf32>
    %186 = arith.mulf %185, %185 : vector<16x32xf32>
    %cst_66 = arith.constant dense<0.000000e+00> : vector<16xf32>
    %187 = vector.multi_reduction <add>, %186, %cst_66 [1] : vector<16x32xf32> to vector<16xf32>
    %188 = vector.shape_cast %187 : vector<16xf32> to vector<16x1xf32>
    %cst_67 = arith.constant 3.200000e+01 : f32
    %189 = vector.broadcast %cst_67 : f32 to vector<16x1xf32>
    %190 = arith.divf %188, %189 : vector<16x1xf32>
    %191 = vector.broadcast %183 : vector<16x1xf32> to vector<16x32xf32>
    %192 = arith.subf %175, %191 : vector<16x32xf32>
    %cst_68 = arith.constant 9.99999996E-13 : f32
    %193 = vector.broadcast %cst_68 : f32 to vector<16x1xf32>
    %194 = arith.addf %190, %193 : vector<16x1xf32>
    %195 = math.rsqrt %194 : vector<16x1xf32>
    %196 = vector.broadcast %195 : vector<16x1xf32> to vector<16x32xf32>
    %197 = arith.mulf %192, %196 : vector<16x32xf32>
    %198 = vector.broadcast %177 : vector<1x32xf32> to vector<16x32xf32>
    %199 = arith.mulf %197, %198 : vector<16x32xf32>
    %200 = vector.broadcast %179 : vector<1x32xf32> to vector<16x32xf32>
    %201 = arith.addf %199, %200 : vector<16x32xf32>
    %c0_69 = arith.constant 0 : index
    %c0_70 = arith.constant 0 : index
    %c0_71 = arith.constant 0 : index
    %202 = vector.load %arg11[%c0_69, %c0_70, %c0_71] : memref<1x32x64xf32, #tpu.memory_space<vmem>>, vector<1x32x64xf32>
    %203 = vector.shape_cast %202 : vector<1x32x64xf32> to vector<32x64xf32>
    %cst_72 = arith.constant dense<0.000000e+00> : vector<16x64xf32>
    %204 = tpu.matmul %201, %203, %cst_72 {dimension_numbers = #tpu.dot_dimension_numbers<[1], [0], [0], [1], [0, 0, 1, 1], [], []>} : vector<16x32xf32>, vector<32x64xf32>, vector<16x64xf32> -> vector<16x64xf32>
    %c0_73 = arith.constant 0 : index
    %c0_74 = arith.constant 0 : index
    %c0_75 = arith.constant 0 : index
    %205 = vector.load %arg12[%c0_73, %c0_74, %c0_75] : memref<1x1x64xf32, #tpu.memory_space<vmem>>, vector<1x1x64xf32>
    %206 = vector.shape_cast %205 : vector<1x1x64xf32> to vector<1x64xf32>
    %207 = vector.broadcast %206 : vector<1x64xf32> to vector<16x64xf32>
    %208 = arith.addf %204, %207 : vector<16x64xf32>
    %209 = arith.mulf %208, %208 : vector<16x64xf32>
    %210 = arith.mulf %208, %209 : vector<16x64xf32>
    %cst_76 = arith.constant 4.471500e-02 : f32
    %211 = vector.broadcast %cst_76 : f32 to vector<16x64xf32>
    %212 = arith.mulf %211, %210 : vector<16x64xf32>
    %213 = arith.addf %208, %212 : vector<16x64xf32>
    %cst_77 = arith.constant 0.797884583 : f32
    %214 = vector.broadcast %cst_77 : f32 to vector<16x64xf32>
    %215 = arith.mulf %214, %213 : vector<16x64xf32>
    %216 = math.tanh %215 : vector<16x64xf32>
    %cst_78 = arith.constant 1.000000e+00 : f32
    %217 = vector.broadcast %cst_78 : f32 to vector<16x64xf32>
    %218 = arith.addf %217, %216 : vector<16x64xf32>
    %cst_79 = arith.constant 5.000000e-01 : f32
    %219 = vector.broadcast %cst_79 : f32 to vector<16x64xf32>
    %220 = arith.mulf %219, %218 : vector<16x64xf32>
    %221 = arith.mulf %208, %220 : vector<16x64xf32>
    %c0_80 = arith.constant 0 : index
    %c0_81 = arith.constant 0 : index
    %c0_82 = arith.constant 0 : index
    %222 = vector.load %arg13[%c0_80, %c0_81, %c0_82] : memref<1x64x32xf32, #tpu.memory_space<vmem>>, vector<1x64x32xf32>
    %223 = vector.shape_cast %222 : vector<1x64x32xf32> to vector<64x32xf32>
    %cst_83 = arith.constant dense<0.000000e+00> : vector<16x32xf32>
    %224 = tpu.matmul %221, %223, %cst_83 {dimension_numbers = #tpu.dot_dimension_numbers<[1], [0], [0], [1], [0, 0, 1, 1], [], []>} : vector<16x64xf32>, vector<64x32xf32>, vector<16x32xf32> -> vector<16x32xf32>
    %c0_84 = arith.constant 0 : index
    %c0_85 = arith.constant 0 : index
    %c0_86 = arith.constant 0 : index
    %225 = vector.load %arg14[%c0_84, %c0_85, %c0_86] : memref<1x1x32xf32, #tpu.memory_space<vmem>>, vector<1x1x32xf32>
    %226 = vector.shape_cast %225 : vector<1x1x32xf32> to vector<1x32xf32>
    %227 = vector.broadcast %226 : vector<1x32xf32> to vector<16x32xf32>
    %228 = arith.addf %224, %227 : vector<16x32xf32>
    %229 = arith.addf %201, %228 : vector<16x32xf32>
    %c0_87 = arith.constant 0 : index
    %c0_88 = arith.constant 0 : index
    %c0_89 = arith.constant 0 : index
    %230 = vector.load %arg15[%c0_87, %c0_88, %c0_89] : memref<1x1x32xf32, #tpu.memory_space<vmem>>, vector<1x1x32xf32>
    %231 = vector.shape_cast %230 : vector<1x1x32xf32> to vector<1x32xf32>
    %c0_90 = arith.constant 0 : index
    %c0_91 = arith.constant 0 : index
    %c0_92 = arith.constant 0 : index
    %232 = vector.load %arg16[%c0_90, %c0_91, %c0_92] : memref<1x1x32xf32, #tpu.memory_space<vmem>>, vector<1x1x32xf32>
    %233 = vector.shape_cast %232 : vector<1x1x32xf32> to vector<1x32xf32>
    %cst_93 = arith.constant dense<0.000000e+00> : vector<16xf32>
    %234 = vector.multi_reduction <add>, %229, %cst_93 [1] : vector<16x32xf32> to vector<16xf32>
    %235 = vector.shape_cast %234 : vector<16xf32> to vector<16x1xf32>
    %cst_94 = arith.constant 3.200000e+01 : f32
    %236 = vector.broadcast %cst_94 : f32 to vector<16x1xf32>
    %237 = arith.divf %235, %236 : vector<16x1xf32>
    %238 = vector.broadcast %237 : vector<16x1xf32> to vector<16x32xf32>
    %239 = arith.subf %229, %238 : vector<16x32xf32>
    %240 = arith.mulf %239, %239 : vector<16x32xf32>
    %cst_95 = arith.constant dense<0.000000e+00> : vector<16xf32>
    %241 = vector.multi_reduction <add>, %240, %cst_95 [1] : vector<16x32xf32> to vector<16xf32>
    %242 = vector.shape_cast %241 : vector<16xf32> to vector<16x1xf32>
    %cst_96 = arith.constant 3.200000e+01 : f32
    %243 = vector.broadcast %cst_96 : f32 to vector<16x1xf32>
    %244 = arith.divf %242, %243 : vector<16x1xf32>
    %245 = vector.broadcast %237 : vector<16x1xf32> to vector<16x32xf32>
    %246 = arith.subf %229, %245 : vector<16x32xf32>
    %cst_97 = arith.constant 9.99999996E-13 : f32
    %247 = vector.broadcast %cst_97 : f32 to vector<16x1xf32>
    %248 = arith.addf %244, %247 : vector<16x1xf32>
    %249 = math.rsqrt %248 : vector<16x1xf32>
    %250 = vector.broadcast %249 : vector<16x1xf32> to vector<16x32xf32>
    %251 = arith.mulf %246, %250 : vector<16x32xf32>
    %252 = vector.broadcast %231 : vector<1x32xf32> to vector<16x32xf32>
    %253 = arith.mulf %251, %252 : vector<16x32xf32>
    %254 = vector.broadcast %233 : vector<1x32xf32> to vector<16x32xf32>
    %255 = arith.addf %253, %254 : vector<16x32xf32>
    %c0_98 = arith.constant 0 : index
    %c0_99 = arith.constant 0 : index
    %256 = vector.load %arg17[%c0_98, %c0_99] : memref<16x32xf32, #tpu.memory_space<vmem>>, vector<16x32xf32>
    tpu.vector_store %arg17[%c0_98, %c0_99], %255 {strides = array<i32>} : memref<16x32xf32, #tpu.memory_space<vmem>>, vector<16x32xf32>,
    return
  }
  func.func @transform_0(%arg0: i32) -> (i32, i32) {
    %c0_i32 = arith.constant 0 : i32
    %c0_i32_0 = arith.constant 0 : i32
    %c0_i32_1 = arith.constant 0 : i32
    return %c0_i32, %c0_i32_0 : i32, i32
  }
  func.func @transform_1(%arg0: i32) -> (i32, i32) {
    %c0_i32 = arith.constant 0 : i32
    %c0_i32_0 = arith.constant 0 : i32
    %c0_i32_1 = arith.constant 0 : i32
    return %c0_i32, %c0_i32_0 : i32, i32
  }
  func.func @transform_2(%arg0: i32) -> (i32, i32) {
    %c0_i32 = arith.constant 0 : i32
    %c0_i32_0 = arith.constant 0 : i32
    %c0_i32_1 = arith.constant 0 : i32
    return %c0_i32, %c0_i32_0 : i32, i32
  }
  func.func @transform_3(%arg0: i32) -> (i32, i32) {
    %c0_i32 = arith.constant 0 : i32
    %c0_i32_0 = arith.constant 0 : i32
    %c0_i32_1 = arith.constant 0 : i32
    return %c0_i32, %c0_i32_0 : i32, i32
  }
  func.func @transform_4(%arg0: i32) -> (i32, i32, i32) {
    %c0_i32 = arith.constant 0 : i32
    %c0_i32_0 = arith.constant 0 : i32
    %c0_i32_1 = arith.constant 0 : i32
    return %arg0, %c0_i32, %c0_i32_0 : i32, i32, i32
  }
  func.func @transform_5(%arg0: i32) -> (i32, i32, i32) {
    %c0_i32 = arith.constant 0 : i32
    %c0_i32_0 = arith.constant 0 : i32
    %c0_i32_1 = arith.constant 0 : i32
    return %arg0, %c0_i32, %c0_i32_0 : i32, i32, i32
  }
  func.func @transform_6(%arg0: i32) -> (i32, i32, i32) {
    %c0_i32 = arith.constant 0 : i32
    %c0_i32_0 = arith.constant 0 : i32
    %c0_i32_1 = arith.constant 0 : i32
    return %arg0, %c0_i32, %c0_i32_0 : i32, i32, i32
  }
  func.func @transform_7(%arg0: i32) -> (i32, i32, i32) {
    %c0_i32 = arith.constant 0 : i32
    %c0_i32_0 = arith.constant 0 : i32
    %c0_i32_1 = arith.constant 0 : i32
    return %arg0, %c0_i32, %c0_i32_0 : i32, i32, i32
  }
  func.func @transform_8(%arg0: i32) -> (i32, i32, i32) {
    %c0_i32 = arith.constant 0 : i32
    %c0_i32_0 = arith.constant 0 : i32
    %c0_i32_1 = arith.constant 0 : i32
    return %arg0, %c0_i32, %c0_i32_0 : i32, i32, i32
  }
  func.func @transform_9(%arg0: i32) -> (i32, i32, i32) {
    %c0_i32 = arith.constant 0 : i32
    %c0_i32_0 = arith.constant 0 : i32
    %c0_i32_1 = arith.constant 0 : i32
    return %arg0, %c0_i32, %c0_i32_0 : i32, i32, i32
  }
  func.func @transform_10(%arg0: i32) -> (i32, i32, i32) {
    %c0_i32 = arith.constant 0 : i32
    %c0_i32_0 = arith.constant 0 : i32
    %c0_i32_1 = arith.constant 0 : i32
    return %arg0, %c0_i32, %c0_i32_0 : i32, i32, i32
  }
  func.func @transform_11(%arg0: i32) -> (i32, i32, i32) {
    %c0_i32 = arith.constant 0 : i32
    %c0_i32_0 = arith.constant 0 : i32
    %c0_i32_1 = arith.constant 0 : i32
    return %arg0, %c0_i32, %c0_i32_0 : i32, i32, i32
  }
  func.func @transform_12(%arg0: i32) -> (i32, i32, i32) {
    %c0_i32 = arith.constant 0 : i32
    %c0_i32_0 = arith.constant 0 : i32
    %c0_i32_1 = arith.constant 0 : i32
    return %arg0, %c0_i32, %c0_i32_0 : i32, i32, i32
  }
  func.func @transform_13(%arg0: i32) -> (i32, i32, i32) {
    %c0_i32 = arith.constant 0 : i32
    %c0_i32_0 = arith.constant 0 : i32
    %c0_i32_1 = arith.constant 0 : i32
    return %arg0, %c0_i32, %c0_i32_0 : i32, i32, i32
  }
  func.func @transform_14(%arg0: i32) -> (i32, i32, i32) {
    %c0_i32 = arith.constant 0 : i32
    %c0_i32_0 = arith.constant 0 : i32
    %c0_i32_1 = arith.constant 0 : i32
    return %arg0, %c0_i32, %c0_i32_0 : i32, i32, i32
  }
  func.func @transform_15(%arg0: i32) -> (i32, i32, i32) {
    %c0_i32 = arith.constant 0 : i32
    %c0_i32_0 = arith.constant 0 : i32
    %c0_i32_1 = arith.constant 0 : i32
    return %arg0, %c0_i32, %c0_i32_0 : i32, i32, i32
  }
  func.func @transform_16(%arg0: i32) -> (i32, i32) {
    %c0_i32 = arith.constant 0 : i32
    %c0_i32_0 = arith.constant 0 : i32
    %c0_i32_1 = arith.constant 0 : i32
    return %c0_i32, %c0_i32_0 : i32, i32
  }
}

</mosaic_0001>

<llo_original>
// kernel: tpu_custom_call.1
$region0: #{tpu_custom_call.1}
  #allocation0 [shape = 'u32[]', space=smem, size = 0x4, offset = 0x4, fixed_abs, tag = 'smem constant byte address 0x4 - core index']
  #allocation1 [shape = 'u32[144,128]{1,0:T(1,128)}', space=vmem, size = 0x12000, scoped, tag = 'internal scratch']
  %s0 = inlined_call_operand.hbm [shape: f32[16,32], index: 0, kind: input, shape index: {}]
  %s1 = inlined_call_operand.vmem [shape: f32[2,8], index: 1, kind: input, shape index: {}]
  %s2 = inlined_call_operand.hbm [shape: f32[1,32], index: 2, kind: input, shape index: {}]
  %s3 = inlined_call_operand.hbm [shape: f32[1,32], index: 3, kind: input, shape index: {}]
  %s4 = inlined_call_operand.vmem [shape: f32[2,32,96], index: 4, kind: input, shape index: {}]
  %s5 = inlined_call_operand.vmem [shape: f32[2,1,96], index: 5, kind: input, shape index: {}]
  %s6 = inlined_call_operand.vmem [shape: f32[2,32,32], index: 6, kind: input, shape index: {}]
  %s7 = inlined_call_operand.vmem [shape: f32[2,1,32], index: 7, kind: input, shape index: {}]
  %s8 = inlined_call_operand.vmem [shape: f32[2,1,32], index: 8, kind: input, shape index: {}]
  %s9 = inlined_call_operand.vmem [shape: f32[2,1,32], index: 9, kind: input, shape index: {}]
  %s10 = inlined_call_operand.vmem [shape: f32[2,32,64], index: 10, kind: input, shape index: {}]
  %s11 = inlined_call_operand.vmem [shape: f32[2,1,64], index: 11, kind: input, shape index: {}]
  %s12 = inlined_call_operand.vmem [shape: f32[2,64,32], index: 12, kind: input, shape index: {}]
  %s13 = inlined_call_operand.vmem [shape: f32[2,1,32], index: 13, kind: input, shape index: {}]
  %s14 = inlined_call_operand.vmem [shape: f32[2,1,32], index: 14, kind: input, shape index: {}]
  %s15 = inlined_call_operand.vmem [shape: f32[2,1,32], index: 15, kind: input, shape index: {}]
  %s16 = inlined_call_operand.hbm [shape: f32[16,32], index: 16, kind: output, shape index: {}]
  %s17 = sld [smem:[#allocation0]]
  $region113: #{tpu_custom_call.1} parent=0
    _
  %s19 = ssub.s32 1, %s17
  %s20 = scalar_select 0, %s19, %s17
  $region1: #{tpu_custom_call.1} parent=0
    #allocation2 [shape = 'u8[8192]{0}', space=vmem, size = 0x2000, scoped, tag = 'input window, operand 0, single buffered']
    #allocation3 [shape = 's32[2]{0}', space=sflag, size = 0x8, scoped, tag = 'scoped memory for tpu_custom_call.1']
    #allocation4 [shape = 's32[2]{0}', space=sflag, size = 0x8, scoped, tag = 'scoped memory for tpu_custom_call.1']
    #allocation5 [shape = 'u8[512]{0}', space=vmem, size = 0x400, scoped, tag = 'input window, operand 2, single buffered']
    #allocation6 [shape = 's32[1]{0}', space=sflag, size = 0x4, scoped, tag = 'scoped memory for tpu_custom_call.1']
    #allocation7 [shape = 'u8[512]{0}', space=vmem, size = 0x400, scoped, tag = 'input window, operand 3, single buffered']
    #allocation8 [shape = 'u8[8192]{0}', space=vmem, size = 0x2000, scoped, tag = 'output window, operand 0, single buffered']
    %21 = vsyncpa [#allocation3], 0
    %22 = vsyncpa [#allocation6], 0
    %23 = vsyncpa [#allocation4], 0
    loop: start=0, step=1, limit=4
    $region2: #{tpu_custom_call.1} parent=1 // loop_pre_header
      _
    $region3: #{tpu_custom_call.1} parent=1 // loop_header
      %s25 = sphi 0, %s29
      %p26 = scmp.ge.s32.totalorder %s25, 4
      %s33 = sphi 0, %s33
      %s35 = sphi 0, %s33
      %s36 = sphi 0, %s35
      %s50 = sphi 0, %s36
      %s54 = sphi 0, %s54
      %s56 = sphi 0, %s54
      %s57 = sphi 0, %s56
      %s71 = sphi 0, %s57
      %s75 = sphi 0, %s75
      %s77 = sphi 0, %s75
      %s78 = sphi 0, %s77
      %s92 = sphi 0, %s78
      %s96 = sphi 0, %s96
      %s98 = sphi 0, %s96
      %s99 = sphi 0, %s98
      %s113 = sphi 0, %s99
      %s119 = sphi 0, %s121
      %s122 = sphi 0, %s119
      %s123 = sphi 0, %s122
      %s139 = sphi 0, %s123
      %s145 = sphi 0, %s147
      %s148 = sphi 0, %s145
      %s149 = sphi 0, %s148
      %s165 = sphi 0, %s149
      %s171 = sphi 0, %s173
      %s174 = sphi 0, %s171
      %s175 = sphi 0, %s174
      %s191 = sphi 0, %s175
      %s197 = sphi 0, %s199
      %s200 = sphi 0, %s197
      %s201 = sphi 0, %s200
      %s217 = sphi 0, %s201
      %s223 = sphi 0, %s225
      %s226 = sphi 0, %s223
      %s227 = sphi 0, %s226
      %s243 = sphi 0, %s227
      %s249 = sphi 0, %s251
      %s252 = sphi 0, %s249
      %s253 = sphi 0, %s252
      %s269 = sphi 0, %s253
      %s275 = sphi 0, %s277
      %s278 = sphi 0, %s275
      %s279 = sphi 0, %s278
      %s295 = sphi 0, %s279
      %s301 = sphi 0, %s303
      %s304 = sphi 0, %s301
      %s305 = sphi 0, %s304
      %s321 = sphi 0, %s305
      %s327 = sphi 0, %s329
      %s330 = sphi 0, %s327
      %s331 = sphi 0, %s330
      %s347 = sphi 0, %s331
      %s353 = sphi 0, %s355
      %s356 = sphi 0, %s353
      %s357 = sphi 0, %s356
      %s373 = sphi 0, %s357
      %s379 = sphi 0, %s381
      %s382 = sphi 0, %s379
      %s383 = sphi 0, %s382
      %s399 = sphi 0, %s383
      %s405 = sphi 0, %s407
      %s408 = sphi 0, %s405
      %s409 = sphi 0, %s408
      %s425 = sphi 0, %s409
      %s429 = sphi 0, %s429
      %s431 = sphi 0, %s429
      %s432 = sphi 0, %s431
      %s446 = sphi 0, %s432
    $region4: #{tpu_custom_call.1} parent=1 // loop_header_branch
      %28 = sbr.rel (%p26) target = $region8
    $region5: #{tpu_custom_call.1} parent=1 // loop_body
      %s30 = ssub.s32 %s25, 1
      %s31 = ssub.s32 %s25, 2
      %s32 = sadd.s32 %s25, 1
      %s34 = sadd.s32 %s33, 1
      %p37 = scmp.eq.s32.totalorder %s25, 1
      %p38 = scmp.ne.s32.totalorder %s33, %s35
      %p39 = scmp.eq.s32.totalorder %s25, 0
      %p40 = por %p38, %p39
      %p41 = scmp.ne.s32.totalorder %s33, %s35
      %p42 = scmp.eq.s32.totalorder %s30, 1
      %p43 = por %p41, %p42
      %p44 = scmp.ne.s32.totalorder %s35, %s36
      %p45 = scmp.eq.s32.totalorder %s30, 0
      %p46 = por %p44, %p45
      %p47 = scmp.ne.s32.totalorder %s35, %s36
      %p48 = scmp.eq.s32.totalorder %s31, 1
      %p49 = por %p47, %p48
      %p51 = scmp.ne.s32.totalorder %s36, %s50
      %p52 = scmp.eq.s32.totalorder %s31, 0
      %p53 = por %p51, %p52
      %s55 = sadd.s32 %s54, 1
      %p58 = scmp.eq.s32.totalorder %s25, 1
      %p59 = scmp.ne.s32.totalorder %s54, %s56
      %p60 = scmp.eq.s32.totalorder %s25, 0
      %p61 = por %p59, %p60
      %p62 = scmp.ne.s32.totalorder %s54, %s56
      %p63 = scmp.eq.s32.totalorder %s30, 1
      %p64 = por %p62, %p63
      %p65 = scmp.ne.s32.totalorder %s56, %s57
      %p66 = scmp.eq.s32.totalorder %s30, 0
      %p67 = por %p65, %p66
      %p68 = scmp.ne.s32.totalorder %s56, %s57
      %p69 = scmp.eq.s32.totalorder %s31, 1
      %p70 = por %p68, %p69
      %p72 = scmp.ne.s32.totalorder %s57, %s71
      %p73 = scmp.eq.s32.totalorder %s31, 0
      %p74 = por %p72, %p73
      %s76 = sadd.s32 %s75, 1
      %p79 = scmp.eq.s32.totalorder %s25, 1
      %p80 = scmp.ne.s32.totalorder %s75, %s77
      %p81 = scmp.eq.s32.totalorder %s25, 0
      %p82 = por %p80, %p81
      %p83 = scmp.ne.s32.totalorder %s75, %s77
      %p84 = scmp.eq.s32.totalorder %s30, 1
      %p85 = por %p83, %p84
      %p86 = scmp.ne.s32.totalorder %s77, %s78
      %p87 = scmp.eq.s32.totalorder %s30, 0
      %p88 = por %p86, %p87
      %p89 = scmp.ne.s32.totalorder %s77, %s78
      %p90 = scmp.eq.s32.totalorder %s31, 1
      %p91 = por %p89, %p90
      %p93 = scmp.ne.s32.totalorder %s78, %s92
      %p94 = scmp.eq.s32.totalorder %s31, 0
      %p95 = por %p93, %p94
      %s97 = sadd.s32 %s96, 1
      %p100 = scmp.eq.s32.totalorder %s25, 1
      %p101 = scmp.ne.s32.totalorder %s96, %s98
      %p102 = scmp.eq.s32.totalorder %s25, 0
      %p103 = por %p101, %p102
      %p104 = scmp.ne.s32.totalorder %s96, %s98
      %p105 = scmp.eq.s32.totalorder %s30, 1
      %p106 = por %p104, %p105
      %p107 = scmp.ne.s32.totalorder %s98, %s99
      %p108 = scmp.eq.s32.totalorder %s30, 0
      %p109 = por %p107, %p108
      %p110 = scmp.ne.s32.totalorder %s98, %s99
      %p111 = scmp.eq.s32.totalorder %s31, 1
      %p112 = por %p110, %p111
      %p114 = scmp.ne.s32.totalorder %s99, %s113
      %p115 = scmp.eq.s32.totalorder %s31, 0
      %p116 = por %p114, %p115
      %s117 = ssub.s32 %s25, %s32
      %p118 = scmp.eq.s32.totalorder %s117, 0
      %s120 = sadd.s32 %s119, 1
      %s121 = scalar_select %p118, %s119, %s120
      %p124 = pneg %p118
      %p125 = scmp.eq.s32.totalorder %s25, 1
      %p126 = por %p124, %p125
      %p127 = scmp.ne.s32.totalorder %s119, %s122
      %p128 = scmp.eq.s32.totalorder %s25, 0
      %p129 = por %p127, %p128
      %p130 = scmp.ne.s32.totalorder %s119, %s122
      %p131 = scmp.eq.s32.totalorder %s30, 1
      %p132 = por %p130, %p131
      %p133 = scmp.ne.s32.totalorder %s122, %s123
      %p134 = scmp.eq.s32.totalorder %s30, 0
      %p135 = por %p133, %p134
      %p136 = scmp.ne.s32.totalorder %s122, %s123
      %p137 = scmp.eq.s32.totalorder %s31, 1
      %p138 = por %p136, %p137
      %p140 = scmp.ne.s32.totalorder %s123, %s139
      %p141 = scmp.eq.s32.totalorder %s31, 0
      %p142 = por %p140, %p141
      %s143 = ssub.s32 %s25, %s32
      %p144 = scmp.eq.s32.totalorder %s143, 0
      %s146 = sadd.s32 %s145, 1
      %s147 = scalar_select %p144, %s145, %s146
      %p150 = pneg %p144
      %p151 = scmp.eq.s32.totalorder %s25, 1
      %p152 = por %p150, %p151
      %p153 = scmp.ne.s32.totalorder %s145, %s148
      %p154 = scmp.eq.s32.totalorder %s25, 0
      %p155 = por %p153, %p154
      %p156 = scmp.ne.s32.totalorder %s145, %s148
      %p157 = scmp.eq.s32.totalorder %s30, 1
      %p158 = por %p156, %p157
      %p159 = scmp.ne.s32.totalorder %s148, %s149
      %p160 = scmp.eq.s32.totalorder %s30, 0
      %p161 = por %p159, %p160
      %p162 = scmp.ne.s32.totalorder %s148, %s149
      %p163 = scmp.eq.s32.totalorder %s31, 1
      %p164 = por %p162, %p163
      %p166 = scmp.ne.s32.totalorder %s149, %s165
      %p167 = scmp.eq.s32.totalorder %s31, 0
      %p168 = por %p166, %p167
      %s169 = ssub.s32 %s25, %s32
      %p170 = scmp.eq.s32.totalorder %s169, 0
      %s172 = sadd.s32 %s171, 1
      %s173 = scalar_select %p170, %s171, %s172
      %p176 = pneg %p170
      %p177 = scmp.eq.s32.totalorder %s25, 1
      %p178 = por %p176, %p177
      %p179 = scmp.ne.s32.totalorder %s171, %s174
      %p180 = scmp.eq.s32.totalorder %s25, 0
      %p181 = por %p179, %p180
      %p182 = scmp.ne.s32.totalorder %s171, %s174
      %p183 = scmp.eq.s32.totalorder %s30, 1
      %p184 = por %p182, %p183
      %p185 = scmp.ne.s32.totalorder %s174, %s175
      %p186 = scmp.eq.s32.totalorder %s30, 0
      %p187 = por %p185, %p186
      %p188 = scmp.ne.s32.totalorder %s174, %s175
      %p189 = scmp.eq.s32.totalorder %s31, 1
      %p190 = por %p188, %p189
      %p192 = scmp.ne.s32.totalorder %s175, %s191
      %p193 = scmp.eq.s32.totalorder %s31, 0
      %p194 = por %p192, %p193
      %s195 = ssub.s32 %s25, %s32
      %p196 = scmp.eq.s32.totalorder %s195, 0
      %s198 = sadd.s32 %s197, 1
      %s199 = scalar_select %p196, %s197, %s198
      %p202 = pneg %p196
      %p203 = scmp.eq.s32.totalorder %s25, 1
      %p204 = por %p202, %p203
      %p205 = scmp.ne.s32.totalorder %s197, %s200
      %p206 = scmp.eq.s32.totalorder %s25, 0
      %p207 = por %p205, %p206
      %p208 = scmp.ne.s32.totalorder %s197, %s200
      %p209 = scmp.eq.s32.totalorder %s30, 1
      %p210 = por %p208, %p209
      %p211 = scmp.ne.s32.totalorder %s200, %s201
      %p212 = scmp.eq.s32.totalorder %s30, 0
      %p213 = por %p211, %p212
      %p214 = scmp.ne.s32.totalorder %s200, %s201
      %p215 = scmp.eq.s32.totalorder %s31, 1
      %p216 = por %p214, %p215
      %p218 = scmp.ne.s32.totalorder %s201, %s217
      %p219 = scmp.eq.s32.totalorder %s31, 0
      %p220 = por %p218, %p219
      %s221 = ssub.s32 %s25, %s32
      %p222 = scmp.eq.s32.totalorder %s221, 0
      %s224 = sadd.s32 %s223, 1
      %s225 = scalar_select %p222, %s223, %s224
      %p228 = pneg %p222
      %p229 = scmp.eq.s32.totalorder %s25, 1
      %p230 = por %p228, %p229
      %p231 = scmp.ne.s32.totalorder %s223, %s226
      %p232 = scmp.eq.s32.totalorder %s25, 0
      %p233 = por %p231, %p232
      %p234 = scmp.ne.s32.totalorder %s223, %s226
      %p235 = scmp.eq.s32.totalorder %s30, 1
      %p236 = por %p234, %p235
      %p237 = scmp.ne.s32.totalorder %s226, %s227
      %p238 = scmp.eq.s32.totalorder %s30, 0
      %p239 = por %p237, %p238
      %p240 = scmp.ne.s32.totalorder %s226, %s227
      %p241 = scmp.eq.s32.totalorder %s31, 1
      %p242 = por %p240, %p241
      %p244 = scmp.ne.s32.totalorder %s227, %s243
      %p245 = scmp.eq.s32.totalorder %s31, 0
      %p246 = por %p244, %p245
      %s247 = ssub.s32 %s25, %s32
      %p248 = scmp.eq.s32.totalorder %s247, 0
      %s250 = sadd.s32 %s249, 1
      %s251 = scalar_select %p248, %s249, %s250
      %p254 = pneg %p248
      %p255 = scmp.eq.s32.totalorder %s25, 1
      %p256 = por %p254, %p255
      %p257 = scmp.ne.s32.totalorder %s249, %s252
      %p258 = scmp.eq.s32.totalorder %s25, 0
      %p259 = por %p257, %p258
      %p260 = scmp.ne.s32.totalorder %s249, %s252
      %p261 = scmp.eq.s32.totalorder %s30, 1
      %p262 = por %p260, %p261
      %p263 = scmp.ne.s32.totalorder %s252, %s253
      %p264 = scmp.eq.s32.totalorder %s30, 0
      %p265 = por %p263, %p264
      %p266 = scmp.ne.s32.totalorder %s252, %s253
      %p267 = scmp.eq.s32.totalorder %s31, 1
      %p268 = por %p266, %p267
      %p270 = scmp.ne.s32.totalorder %s253, %s269
      %p271 = scmp.eq.s32.totalorder %s31, 0
      %p272 = por %p270, %p271
      %s273 = ssub.s32 %s25, %s32
      %p274 = scmp.eq.s32.totalorder %s273, 0
      %s276 = sadd.s32 %s275, 1
      %s277 = scalar_select %p274, %s275, %s276
      %p280 = pneg %p274
      %p281 = scmp.eq.s32.totalorder %s25, 1
      %p282 = por %p280, %p281
      %p283 = scmp.ne.s32.totalorder %s275, %s278
      %p284 = scmp.eq.s32.totalorder %s25, 0
      %p285 = por %p283, %p284
      %p286 = scmp.ne.s32.totalorder %s275, %s278
      %p287 = scmp.eq.s32.totalorder %s30, 1
      %p288 = por %p286, %p287
      %p289 = scmp.ne.s32.totalorder %s278, %s279
      %p290 = scmp.eq.s32.totalorder %s30, 0
      %p291 = por %p289, %p290
      %p292 = scmp.ne.s32.totalorder %s278, %s279
      %p293 = scmp.eq.s32.totalorder %s31, 1
      %p294 = por %p292, %p293
      %p296 = scmp.ne.s32.totalorder %s279, %s295
      %p297 = scmp.eq.s32.totalorder %s31, 0
      %p298 = por %p296, %p297
      %s299 = ssub.s32 %s25, %s32
      %p300 = scmp.eq.s32.totalorder %s299, 0
      %s302 = sadd.s32 %s301, 1
      %s303 = scalar_select %p300, %s301, %s302
      %p306 = pneg %p300
      %p307 = scmp.eq.s32.totalorder %s25, 1
      %p308 = por %p306, %p307
      %p309 = scmp.ne.s32.totalorder %s301, %s304
      %p310 = scmp.eq.s32.totalorder %s25, 0
      %p311 = por %p309, %p310
      %p312 = scmp.ne.s32.totalorder %s301, %s304
      %p313 = scmp.eq.s32.totalorder %s30, 1
      %p314 = por %p312, %p313
      %p315 = scmp.ne.s32.totalorder %s304, %s305
      %p316 = scmp.eq.s32.totalorder %s30, 0
      %p317 = por %p315, %p316
      %p318 = scmp.ne.s32.totalorder %s304, %s305
      %p319 = scmp.eq.s32.totalorder %s31, 1
      %p320 = por %p318, %p319
      %p322 = scmp.ne.s32.totalorder %s305, %s321
      %p323 = scmp.eq.s32.totalorder %s31, 0
      %p324 = por %p322, %p323
      %s325 = ssub.s32 %s25, %s32
      %p326 = scmp.eq.s32.totalorder %s325, 0
      %s328 = sadd.s32 %s327, 1
      %s329 = scalar_select %p326, %s327, %s328
      %p332 = pneg %p326
      %p333 = scmp.eq.s32.totalorder %s25, 1
      %p334 = por %p332, %p333
      %p335 = scmp.ne.s32.totalorder %s327, %s330
      %p336 = scmp.eq.s32.totalorder %s25, 0
      %p337 = por %p335, %p336
      %p338 = scmp.ne.s32.totalorder %s327, %s330
      %p339 = scmp.eq.s32.totalorder %s30, 1
      %p340 = por %p338, %p339
      %p341 = scmp.ne.s32.totalorder %s330, %s331
      %p342 = scmp.eq.s32.totalorder %s30, 0
      %p343 = por %p341, %p342
      %p344 = scmp.ne.s32.totalorder %s330, %s331
      %p345 = scmp.eq.s32.totalorder %s31, 1
      %p346 = por %p344, %p345
      %p348 = scmp.ne.s32.totalorder %s331, %s347
      %p349 = scmp.eq.s32.totalorder %s31, 0
      %p350 = por %p348, %p349
      %s351 = ssub.s32 %s25, %s32
      %p352 = scmp.eq.s32.totalorder %s351, 0
      %s354 = sadd.s32 %s353, 1
      %s355 = scalar_select %p352, %s353, %s354
      %p358 = pneg %p352
      %p359 = scmp.eq.s32.totalorder %s25, 1
      %p360 = por %p358, %p359
      %p361 = scmp.ne.s32.totalorder %s353, %s356
      %p362 = scmp.eq.s32.totalorder %s25, 0
      %p363 = por %p361, %p362
      %p364 = scmp.ne.s32.totalorder %s353, %s356
      %p365 = scmp.eq.s32.totalorder %s30, 1
      %p366 = por %p364, %p365
      %p367 = scmp.ne.s32.totalorder %s356, %s357
      %p368 = scmp.eq.s32.totalorder %s30, 0
      %p369 = por %p367, %p368
      %p370 = scmp.ne.s32.totalorder %s356, %s357
      %p371 = scmp.eq.s32.totalorder %s31, 1
      %p372 = por %p370, %p371
      %p374 = scmp.ne.s32.totalorder %s357, %s373
      %p375 = scmp.eq.s32.totalorder %s31, 0
      %p376 = por %p374, %p375
      %s377 = ssub.s32 %s25, %s32
      %p378 = scmp.eq.s32.totalorder %s377, 0
      %s380 = sadd.s32 %s379, 1
      %s381 = scalar_select %p378, %s379, %s380
      %p384 = pneg %p378
      %p385 = scmp.eq.s32.totalorder %s25, 1
      %p386 = por %p384, %p385
      %p387 = scmp.ne.s32.totalorder %s379, %s382
      %p388 = scmp.eq.s32.totalorder %s25, 0
      %p389 = por %p387, %p388
      %p390 = scmp.ne.s32.totalorder %s379, %s382
      %p391 = scmp.eq.s32.totalorder %s30, 1
      %p392 = por %p390, %p391
      %p393 = scmp.ne.s32.totalorder %s382, %s383
      %p394 = scmp.eq.s32.totalorder %s30, 0
      %p395 = por %p393, %p394
      %p396 = scmp.ne.s32.totalorder %s382, %s383
      %p397 = scmp.eq.s32.totalorder %s31, 1
      %p398 = por %p396, %p397
      %p400 = scmp.ne.s32.totalorder %s383, %s399
      %p401 = scmp.eq.s32.totalorder %s31, 0
      %p402 = por %p400, %p401
      %s403 = ssub.s32 %s25, %s32
      %p404 = scmp.eq.s32.totalorder %s403, 0
      %s406 = sadd.s32 %s405, 1
      %s407 = scalar_select %p404, %s405, %s406
      %p410 = pneg %p404
      %p411 = scmp.eq.s32.totalorder %s25, 1
      %p412 = por %p410, %p411
      %p413 = scmp.ne.s32.totalorder %s405, %s408
      %p414 = scmp.eq.s32.totalorder %s25, 0
      %p415 = por %p413, %p414
      %p416 = scmp.ne.s32.totalorder %s405, %s408
      %p417 = scmp.eq.s32.totalorder %s30, 1
      %p418 = por %p416, %p417
      %p419 = scmp.ne.s32.totalorder %s408, %s409
      %p420 = scmp.eq.s32.totalorder %s30, 0
      %p421 = por %p419, %p420
      %p422 = scmp.ne.s32.totalorder %s408, %s409
      %p423 = scmp.eq.s32.totalorder %s31, 1
      %p424 = por %p422, %p423
      %p426 = scmp.ne.s32.totalorder %s409, %s425
      %p427 = scmp.eq.s32.totalorder %s31, 0
      %p428 = por %p426, %p427
      %s430 = sadd.s32 %s429, 1
      %p433 = scmp.eq.s32.totalorder %s25, 1
      %p434 = scmp.ne.s32.totalorder %s429, %s431
      %p435 = scmp.eq.s32.totalorder %s25, 0
      %p436 = por %p434, %p435
      %p437 = scmp.ne.s32.totalorder %s429, %s431
      %p438 = scmp.eq.s32.totalorder %s30, 1
      %p439 = por %p437, %p438
      %p440 = scmp.ne.s32.totalorder %s431, %s432
      %p441 = scmp.eq.s32.totalorder %s30, 0
      %p442 = por %p440, %p441
      %p443 = scmp.ne.s32.totalorder %s431, %s432
      %p444 = scmp.eq.s32.totalorder %s31, 1
      %p445 = por %p443, %p444
      %p447 = scmp.ne.s32.totalorder %s432, %s446
      %p448 = scmp.eq.s32.totalorder %s31, 0
      %p449 = por %p447, %p448
      %p450 = scmp.le.s32.totalorder 1, %s25
      %p451 = scmp.lt.s32.totalorder %s25, 3
      %p452 = pnand %p450, %p451
      %p453 = pneg %p452
      // Predicated region
      $region9: #{tpu_custom_call.1} parent=5 // pred_check
        _
      $region10: #{tpu_custom_call.1} parent=5 // pred_check_branch
        %455 = sbr.rel (%p452) target = $region12
      $region11: #{tpu_custom_call.1} parent=5 // pred_region
        %s456 = ssub.s32 %s25, 1
        // Predicated region
        $region13: #{tpu_custom_call.1} parent=11 // pred_check
          %p457 = pneg %p46
        $region14: #{tpu_custom_call.1} parent=11 // pred_check_branch
          %459 = sbr.rel (%p457) target = $region16
        $region15: #{tpu_custom_call.1} parent=11 // pred_region
          %s461 = ssub.s32 256, 256
          %462 = vsyncadd [#allocation3], %s461
          %s463 = sshll.u32 [#allocation2], 4
          %s464 = int_to_ptr.vmem [resolvable:$true] %s463
          %469 = dma.hbm_to_vmem [thread:$0]  %s0, 256, %s464, [#allocation3], 128, 128, 8
        $region16: #{tpu_custom_call.1} parent=11 // pred_fallthru
          _
        // Predicated region
        $region17: #{tpu_custom_call.1} parent=11 // pred_check
          %p470 = pneg %p67
        $region18: #{tpu_custom_call.1} parent=11 // pred_check_branch
          %472 = sbr.rel (%p470) target = $region20
        $region19: #{tpu_custom_call.1} parent=11 // pred_region
          _
        $region20: #{tpu_custom_call.1} parent=11 // pred_fallthru
          _
        // Predicated region
        $region21: #{tpu_custom_call.1} parent=11 // pred_check
          %p473 = pneg %p88
        $region22: #{tpu_custom_call.1} parent=11 // pred_check_branch
          %475 = sbr.rel (%p473) target = $region24
        $region23: #{tpu_custom_call.1} parent=11 // pred_region
          %s477 = ssub.s32 16, 16
          %478 = vsyncadd [#allocation6], %s477
          %s480 = sshll.u32 [#allocation5], 4
          %s481 = int_to_ptr.vmem [resolvable:$true] %s480
          %483 = dma.hbm_to_vmem [thread:$0]  %s2, 16, %s481, [#allocation6]
        $region24: #{tpu_custom_call.1} parent=11 // pred_fallthru
          _
        // Predicated region
        $region25: #{tpu_custom_call.1} parent=11 // pred_check
          %p484 = pneg %p109
        $region26: #{tpu_custom_call.1} parent=11 // pred_check_branch
          %486 = sbr.rel (%p484) target = $region28
        $region27: #{tpu_custom_call.1} parent=11 // pred_region
          %s488 = ssub.s32 16, 16
          %489 = vsyncadd [#allocation6], %s488
          %s491 = sshll.u32 [#allocation7], 4
          %s492 = int_to_ptr.vmem [resolvable:$true] %s491
          %494 = dma.hbm_to_vmem [thread:$0]  %s3, 16, %s492, [#allocation6]
        $region28: #{tpu_custom_call.1} parent=11 // pred_fallthru
          _
      $region12: #{tpu_custom_call.1} parent=5 // pred_fallthru
        _
      %p495 = scmp.lt.s32.totalorder %s25, 2
      // Predicated region
      $region29: #{tpu_custom_call.1} parent=5 // pred_check
        %p496 = pneg %p495
      $region30: #{tpu_custom_call.1} parent=5 // pred_check_branch
        %498 = sbr.rel (%p496) target = $region32
      $region31: #{tpu_custom_call.1} parent=5 // pred_region
        // Predicated region
        $region33: #{tpu_custom_call.1} parent=31 // pred_check
          %p499 = pneg %p129
        $region34: #{tpu_custom_call.1} parent=31 // pred_check_branch
          %501 = sbr.rel (%p499) target = $region36
        $region35: #{tpu_custom_call.1} parent=31 // pred_region
          %p502 = scmp.lt.s32.totalorder %s25, 1
          %s503 = scalar_select %p502, %s25, 1
          %s504 = smul.addr %s503, 4
          %s505 = smul.addr %s504, 8
          %s506 = scalar_lea.vmem %s4, %s505
        $region36: #{tpu_custom_call.1} parent=31 // pred_fallthru
          _
        // Predicated region
        $region37: #{tpu_custom_call.1} parent=31 // pred_check
          %p507 = pneg %p155
        $region38: #{tpu_custom_call.1} parent=31 // pred_check_branch
          %509 = sbr.rel (%p507) target = $region40
        $region39: #{tpu_custom_call.1} parent=31 // pred_region
          %p510 = scmp.lt.s32.totalorder %s25, 1
          %s511 = scalar_select %p510, %s25, 1
          %s512 = scalar_lea.vmem %s5, %s511
        $region40: #{tpu_custom_call.1} parent=31 // pred_fallthru
          _
        // Predicated region
        $region41: #{tpu_custom_call.1} parent=31 // pred_check
          %p513 = pneg %p181
        $region42: #{tpu_custom_call.1} parent=31 // pred_check_branch
          %515 = sbr.rel (%p513) target = $region44
        $region43: #{tpu_custom_call.1} parent=31 // pred_region
          %p516 = scmp.lt.s32.totalorder %s25, 1
          %s517 = scalar_select %p516, %s25, 1
          %s518 = smul.addr %s517, 4
          %s519 = smul.addr %s518, 8
          %s520 = scalar_lea.vmem %s6, %s519
        $region44: #{tpu_custom_call.1} parent=31 // pred_fallthru
          _
        // Predicated region
        $region45: #{tpu_custom_call.1} parent=31 // pred_check
          %p521 = pneg %p207
        $region46: #{tpu_custom_call.1} parent=31 // pred_check_branch
          %523 = sbr.rel (%p521) target = $region48
        $region47: #{tpu_custom_call.1} parent=31 // pred_region
          %p524 = scmp.lt.s32.totalorder %s25, 1
          %s525 = scalar_select %p524, %s25, 1
          %s526 = scalar_lea.vmem %s7, %s525
        $region48: #{tpu_custom_call.1} parent=31 // pred_fallthru
          _
        // Predicated region
        $region49: #{tpu_custom_call.1} parent=31 // pred_check
          %p527 = pneg %p233
        $region50: #{tpu_custom_call.1} parent=31 // pred_check_branch
          %529 = sbr.rel (%p527) target = $region52
        $region51: #{tpu_custom_call.1} parent=31 // pred_region
          %p530 = scmp.lt.s32.totalorder %s25, 1
          %s531 = scalar_select %p530, %s25, 1
          %s532 = scalar_lea.vmem %s8, %s531
        $region52: #{tpu_custom_call.1} parent=31 // pred_fallthru
          _
        // Predicated region
        $region53: #{tpu_custom_call.1} parent=31 // pred_check
          %p533 = pneg %p259
        $region54: #{tpu_custom_call.1} parent=31 // pred_check_branch
          %535 = sbr.rel (%p533) target = $region56
        $region55: #{tpu_custom_call.1} parent=31 // pred_region
          %p536 = scmp.lt.s32.totalorder %s25, 1
          %s537 = scalar_select %p536, %s25, 1
          %s538 = scalar_lea.vmem %s9, %s537
        $region56: #{tpu_custom_call.1} parent=31 // pred_fallthru
          _
        // Predicated region
        $region57: #{tpu_custom_call.1} parent=31 // pred_check
          %p539 = pneg %p285
        $region58: #{tpu_custom_call.1} parent=31 // pred_check_branch
          %541 = sbr.rel (%p539) target = $region60
        $region59: #{tpu_custom_call.1} parent=31 // pred_region
          %p542 = scmp.lt.s32.totalorder %s25, 1
          %s543 = scalar_select %p542, %s25, 1
          %s544 = smul.addr %s543, 4
          %s545 = smul.addr %s544, 8
          %s546 = scalar_lea.vmem %s10, %s545
        $region60: #{tpu_custom_call.1} parent=31 // pred_fallthru
          _
        // Predicated region
        $region61: #{tpu_custom_call.1} parent=31 // pred_check
          %p547 = pneg %p311
        $region62: #{tpu_custom_call.1} parent=31 // pred_check_branch
          %549 = sbr.rel (%p547) target = $region64
        $region63: #{tpu_custom_call.1} parent=31 // pred_region
          %p550 = scmp.lt.s32.totalorder %s25, 1
          %s551 = scalar_select %p550, %s25, 1
          %s552 = scalar_lea.vmem %s11, %s551
        $region64: #{tpu_custom_call.1} parent=31 // pred_fallthru
          _
        // Predicated region
        $region65: #{tpu_custom_call.1} parent=31 // pred_check
          %p553 = pneg %p337
        $region66: #{tpu_custom_call.1} parent=31 // pred_check_branch
          %555 = sbr.rel (%p553) target = $region68
        $region67: #{tpu_custom_call.1} parent=31 // pred_region
          %p556 = scmp.lt.s32.totalorder %s25, 1
          %s557 = scalar_select %p556, %s25, 1
          %s558 = smul.addr %s557, 8
          %s559 = smul.addr %s558, 8
          %s560 = scalar_lea.vmem %s12, %s559
        $region68: #{tpu_custom_call.1} parent=31 // pred_fallthru
          _
        // Predicated region
        $region69: #{tpu_custom_call.1} parent=31 // pred_check
          %p561 = pneg %p363
        $region70: #{tpu_custom_call.1} parent=31 // pred_check_branch
          %563 = sbr.rel (%p561) target = $region72
        $region71: #{tpu_custom_call.1} parent=31 // pred_region
          %p564 = scmp.lt.s32.totalorder %s25, 1
          %s565 = scalar_select %p564, %s25, 1
          %s566 = scalar_lea.vmem %s13, %s565
        $region72: #{tpu_custom_call.1} parent=31 // pred_fallthru
          _
        // Predicated region
        $region73: #{tpu_custom_call.1} parent=31 // pred_check
          %p567 = pneg %p389
        $region74: #{tpu_custom_call.1} parent=31 // pred_check_branch
          %569 = sbr.rel (%p567) target = $region76
        $region75: #{tpu_custom_call.1} parent=31 // pred_region
          %p570 = scmp.lt.s32.totalorder %s25, 1
          %s571 = scalar_select %p570, %s25, 1
          %s572 = scalar_lea.vmem %s14, %s571
        $region76: #{tpu_custom_call.1} parent=31 // pred_fallthru
          _
        // Predicated region
        $region77: #{tpu_custom_call.1} parent=31 // pred_check
          %p573 = pneg %p415
        $region78: #{tpu_custom_call.1} parent=31 // pred_check_branch
          %575 = sbr.rel (%p573) target = $region80
        $region79: #{tpu_custom_call.1} parent=31 // pred_region
          %p576 = scmp.lt.s32.totalorder %s25, 1
          %s577 = scalar_select %p576, %s25, 1
          %s578 = scalar_lea.vmem %s15, %s577
        $region80: #{tpu_custom_call.1} parent=31 // pred_fallthru
          _
      $region32: #{tpu_custom_call.1} parent=5 // pred_fallthru
        _
      %p579 = scmp.le.s32.totalorder 1, %s25
      %p580 = scmp.lt.s32.totalorder %s25, 3
      %p581 = pnand %p579, %p580
      %p582 = pneg %p581
      // Predicated region
      $region81: #{tpu_custom_call.1} parent=5 // pred_check
        _
      $region82: #{tpu_custom_call.1} parent=5 // pred_check_branch
        %584 = sbr.rel (%p581) target = $region84
      $region83: #{tpu_custom_call.1} parent=5 // pred_region
        %s585 = ssub.s32 %s25, 1
        // Predicated region
        $region85: #{tpu_custom_call.1} parent=83 // pred_check
          %p586 = pneg %p46
        $region86: #{tpu_custom_call.1} parent=83 // pred_check_branch
          %588 = sbr.rel (%p586) target = $region88
        $region87: #{tpu_custom_call.1} parent=83 // pred_region
          %589 = dma.done [#allocation3], 256
        $region88: #{tpu_custom_call.1} parent=83 // pred_fallthru
          _
        // Predicated region
        $region89: #{tpu_custom_call.1} parent=83 // pred_check
          %p590 = pneg %p88
        $region90: #{tpu_custom_call.1} parent=83 // pred_check_branch
          %592 = sbr.rel (%p590) target = $region92
        $region91: #{tpu_custom_call.1} parent=83 // pred_region
          %593 = dma.done [#allocation6], 16
        $region92: #{tpu_custom_call.1} parent=83 // pred_fallthru
          _
        // Predicated region
        $region93: #{tpu_custom_call.1} parent=83 // pred_check
          %p594 = pneg %p109
        $region94: #{tpu_custom_call.1} parent=83 // pred_check_branch
          %596 = sbr.rel (%p594) target = $region96
        $region95: #{tpu_custom_call.1} parent=83 // pred_region
          %597 = dma.done [#allocation6], 16
        $region96: #{tpu_custom_call.1} parent=83 // pred_fallthru
          _
        %p598 = pneg %p46
        %p599 = pneg %p43
        %p600 = pneg %p67
        %p601 = pneg %p64
        %p602 = pneg %p88
        %p603 = pneg %p85
        %p604 = pneg %p109
        %p605 = pneg %p106
        %p606 = scmp.lt.s32.totalorder %s30, 1
        %s607 = scalar_select %p606, %s30, 1
        %s608 = smul.addr %s607, 4
        %s609 = smul.addr %s608, 8
        %s610 = scalar_lea.vmem %s4, %s609
        %p611 = pneg %p135
        %p612 = pneg %p132
        %p613 = scmp.lt.s32.totalorder %s30, 1
        %s614 = scalar_select %p613, %s30, 1
        %s615 = scalar_lea.vmem %s5, %s614
        %p616 = pneg %p161
        %p617 = pneg %p158
        %p618 = scmp.lt.s32.totalorder %s30, 1
        %s619 = scalar_select %p618, %s30, 1
        %s620 = smul.addr %s619, 4
        %s621 = smul.addr %s620, 8
        %s622 = scalar_lea.vmem %s6, %s621
        %p623 = pneg %p187
        %p624 = pneg %p184
        %p625 = scmp.lt.s32.totalorder %s30, 1
        %s626 = scalar_select %p625, %s30, 1
        %s627 = scalar_lea.vmem %s7, %s626
        %p628 = pneg %p213
        %p629 = pneg %p210
        %p630 = scmp.lt.s32.totalorder %s30, 1
        %s631 = scalar_select %p630, %s30, 1
        %s632 = scalar_lea.vmem %s8, %s631
        %p633 = pneg %p239
        %p634 = pneg %p236
        %p635 = scmp.lt.s32.totalorder %s30, 1
        %s636 = scalar_select %p635, %s30, 1
        %s637 = scalar_lea.vmem %s9, %s636
        %p638 = pneg %p265
        %p639 = pneg %p262
        %p640 = scmp.lt.s32.totalorder %s30, 1
        %s641 = scalar_select %p640, %s30, 1
        %s642 = smul.addr %s641, 4
        %s643 = smul.addr %s642, 8
        %s644 = scalar_lea.vmem %s10, %s643
        %p645 = pneg %p291
        %p646 = pneg %p288
        %p647 = scmp.lt.s32.totalorder %s30, 1
        %s648 = scalar_select %p647, %s30, 1
        %s649 = scalar_lea.vmem %s11, %s648
        %p650 = pneg %p317
        %p651 = pneg %p314
        %p652 = scmp.lt.s32.totalorder %s30, 1
        %s653 = scalar_select %p652, %s30, 1
        %s654 = smul.addr %s653, 8
        %s655 = smul.addr %s654, 8
        %s656 = scalar_lea.vmem %s12, %s655
        %p657 = pneg %p343
        %p658 = pneg %p340
        %p659 = scmp.lt.s32.totalorder %s30, 1
        %s660 = scalar_select %p659, %s30, 1
        %s661 = scalar_lea.vmem %s13, %s660
        %p662 = pneg %p369
        %p663 = pneg %p366
        %p664 = scmp.lt.s32.totalorder %s30, 1
        %s665 = scalar_select %p664, %s30, 1
        %s666 = scalar_lea.vmem %s14, %s665
        %p667 = pneg %p395
        %p668 = pneg %p392
        %p669 = scmp.lt.s32.totalorder %s30, 1
        %s670 = scalar_select %p669, %s30, 1
        %s671 = scalar_lea.vmem %s15, %s670
        %p672 = pneg %p421
        %p673 = pneg %p418
        %p674 = pneg %p442
        %p675 = pneg %p439
        %p676 = scmp.lt.s32.totalorder %s30, 1
        %s677 = scalar_select %p676, %s30, 1
        %s678 = smul.addr %s677, 4
        %s679 = smul.addr %s678, 8
        %s680 = scalar_lea.vmem %s4, %s679
        %p681 = scmp.lt.s32.totalorder %s30, 1
        %s682 = scalar_select %p681, %s30, 1
        %s683 = scalar_lea.vmem %s5, %s682
        %p684 = scmp.lt.s32.totalorder %s30, 1
        %s685 = scalar_select %p684, %s30, 1
        %s686 = smul.addr %s685, 4
        %s687 = smul.addr %s686, 8
        %s688 = scalar_lea.vmem %s6, %s687
        %p689 = scmp.lt.s32.totalorder %s30, 1
        %s690 = scalar_select %p689, %s30, 1
        %s691 = scalar_lea.vmem %s7, %s690
        %p692 = scmp.lt.s32.totalorder %s30, 1
        %s693 = scalar_select %p692, %s30, 1
        %s694 = scalar_lea.vmem %s8, %s693
        %p695 = scmp.lt.s32.totalorder %s30, 1
        %s696 = scalar_select %p695, %s30, 1
        %s697 = scalar_lea.vmem %s9, %s696
        %p698 = scmp.lt.s32.totalorder %s30, 1
        %s699 = scalar_select %p698, %s30, 1
        %s700 = smul.addr %s699, 4
        %s701 = smul.addr %s700, 8
        %s702 = scalar_lea.vmem %s10, %s701
        %p703 = scmp.lt.s32.totalorder %s30, 1
        %s704 = scalar_select %p703, %s30, 1
        %s705 = scalar_lea.vmem %s11, %s704
        %p706 = scmp.lt.s32.totalorder %s30, 1
        %s707 = scalar_select %p706, %s30, 1
        %s708 = smul.addr %s707, 8
        %s709 = smul.addr %s708, 8
        %s710 = scalar_lea.vmem %s12, %s709
        %p711 = scmp.lt.s32.totalorder %s30, 1
        %s712 = scalar_select %p711, %s30, 1
        %s713 = scalar_lea.vmem %s13, %s712
        %p714 = scmp.lt.s32.totalorder %s30, 1
        %s715 = scalar_select %p714, %s30, 1
        %s716 = scalar_lea.vmem %s14, %s715
        %p717 = scmp.lt.s32.totalorder %s30, 1
        %s718 = scalar_select %p717, %s30, 1
        %s719 = scalar_lea.vmem %s15, %s718
        %p720 = scmp.eq.s32.totalorder %s30, 0
        // Predicated region
        $region97: #{tpu_custom_call.1} parent=83 // pred_check
          %p721 = pneg %p720
        $region98: #{tpu_custom_call.1} parent=83 // pred_check_branch
          %723 = sbr.rel (%p721) target = $region100
        $region99: #{tpu_custom_call.1} parent=83 // pred_region
          %v724 = vld [vmem:[#allocation2] sm:$0xff]
          %v725 = vld [vmem:[#allocation2 + $0x8] sm:$0xff]
          %v726 = vld [vmem:[#allocation5] sm:$0x1]
          %v727 = vld [vmem:[#allocation7] sm:$0x1]
          %vm728 = vcmask 261120
          %v729 = vsel %vm728, %v724, 0.0
          %730 = vadd.xlane.f32.xlu0 %v729
          %v731 = vpop.xlane.xlu0 %730
          %v732 = vsel %vm728, %v725, 0.0
          %733 = vadd.xlane.f32.xlu0 %v732
          %v734 = vpop.xlane.xlu0 %733
          %v735 = vrcp.pop 32.0
          %v736 = vmul.f32 %v731, %v735
          %v737 = vmul.f32 %v734, %v735
          %v738 = vsub.f32 %v724, %v736
          %v739 = vsub.f32 %v725, %v737
          %v740 = vmul.f32 %v738, %v738
          %v741 = vmul.f32 %v739, %v739
          %v742 = vsel %vm728, %v740, 0.0
          %743 = vadd.xlane.f32.xlu0 %v742
          %v744 = vpop.xlane.xlu0 %743
          %v745 = vsel %vm728, %v741, 0.0
          %746 = vadd.xlane.f32.xlu0 %v745
          %v747 = vpop.xlane.xlu0 %746
          %v748 = vmul.f32 %v744, %v735
          %v749 = vmul.f32 %v747, %v735
          %v750 = vadd.f32 %v748, 1e-12
          %v751 = vadd.f32 %v749, 1e-12
          %v752 = vrsqrt.pop %v750
          %v753 = vrsqrt.pop %v751
          %v754 = vmul.f32 %v738, %v752
          %v755 = vmul.f32 %v739, %v753
          %v757 = vlaneseq
          %v758 = vshrl.u32 %v757, 7
          %v759 = vsub.s32 0, %v758
          %v760 = vrot.slane %v726, %v759
          %v762 = vmul.f32 %v754, %v760
          %v763 = vmul.f32 %v755, %v760
          %v765 = vlaneseq
          %v766 = vshrl.u32 %v765, 7
          %v767 = vsub.s32 0, %v766
          %v768 = vrot.slane %v727, %v767
          %v770 = vadd.f32 %v762, %v768
          %v771 = vadd.f32 %v763, %v768
          %772 = vst.msk [vmem:[#allocation8] sm:$0xff] %vm728, %v770
          %773 = vst.msk [vmem:[#allocation8 + $0x8] sm:$0xff] %vm728, %v771
        $region100: #{tpu_custom_call.1} parent=83 // pred_fallthru
          _
        %v774 = vld [vmem:[#allocation8] sm:$0xff]
        %v775 = vld [vmem:[#allocation8 + $0x8] sm:$0xff]
        %v776 = vld [vmem:[%s680] sm:$0xff]
        %v777 = vld [vmem:[%s680 + $0x8] sm:$0xff]
        %v778 = vld [vmem:[%s680 + $0x10] sm:$0xff]
        %v779 = vld [vmem:[%s680 + $0x18] sm:$0xff]
        %v780 = vld [vmem:[%s683] sm:$0x1]
        %v782 = vlaneseq
        %v783 = vshrl.u32 %v782, 7
        %v784 = vsub.s32 0, %v783
        %v785 = vrot.slane %v780, %v784
        %vm787 = vcmask 261120
        %v789 = vsel %vm787, %v774, 0
        %v792 = vsel %vm787, %v775, 0
        %794 = vmatprep.subr.mxu0 0.0
        %795 = vmatpush1.msra.mxu0 %v776
        %796 = vmatprep.subr.mxu0 0.0
        %797 = vmatpush1.msra.mxu0 %v777
        %798 = vmatprep.subr.mxu0 0.0
        %799 = vmatpush1.msra.mxu0 %v778
        %800 = vmatprep.subr.mxu0 0.0
        %801 = vmatpush1.msra.mxu0 %v779
        %802 = vmatprep.subr.mxu0 0.0
        %803 = vmatpush1.msra.mxu0 0.0
        %804 = vmatprep.subr.mxu0 0.0
        %805 = vmatpush1.msra.mxu0 0.0
        %806 = vmatprep.subr.mxu0 0.0
        %807 = vmatpush1.msra.mxu0 0.0
        %808 = vmatprep.subr.mxu0 0.0
        %809 = vmatpush1.msra.mxu0 0.0
        %810 = vmatprep.subr.mxu0 0.0
        %811 = vmatpush1.msra.mxu0 0.0
        %812 = vmatprep.subr.mxu0 0.0
        %813 = vmatpush1.msra.mxu0 0.0
        %814 = vmatprep.subr.mxu0 0.0
        %815 = vmatpush1.msra.mxu0 0.0
        %816 = vmatprep.subr.mxu0 0.0
        %817 = vmatpush1.msra.mxu0 0.0
        %818 = vmatprep.subr.mxu0 0.0
        %819 = vmatpush1.msra.mxu0 0.0
        %820 = vmatprep.subr.mxu0 0.0
        %821 = vmatpush1.msra.mxu0 0.0
        %822 = vmatprep.subr.mxu0 0.0
        %823 = vmatpush1.msra.mxu0 0.0
        %824 = vmatprep.subr.mxu0 0.0
        %825 = vmatpush1.msra.mxu0 0.0
        %826 = vmatprep.subr.mxu0 0.0
        %827 = vmatpush1.msra.mxu0 0.0
        %828 = vmatprep.subr.mxu0 0.0
        %829 = vmatpush1.msra.mxu0 0.0
        %830 = vmatprep.subr.mxu0 0.0
        %831 = vmatpush1.msra.mxu0 0.0
        %832 = vmatprep.subr.mxu0 0.0
        %833 = vmatpush1.msra.mxu0 0.0
        %834 = vmatprep.subr.mxu0 0.0
        %835 = vmatpush1.msra.mxu0 0.0
        %836 = vmatprep.subr.mxu0 0.0
        %837 = vmatpush1.msra.mxu0 0.0
        %838 = vmatprep.subr.mxu0 0.0
        %839 = vmatpush1.msra.mxu0 0.0
        %840 = vmatprep.subr.mxu0 0.0
        %841 = vmatpush1.msra.mxu0 0.0
        %842 = vmatprep.subr.mxu0 0.0
        %843 = vmatpush1.msra.mxu0 0.0
        %844 = vmatprep.subr.mxu0 0.0
        %845 = vmatpush1.msra.mxu0 0.0
        %846 = vmatprep.subr.mxu0 0.0
        %847 = vmatpush1.msra.mxu0 0.0
        %848 = vmatprep.subr.mxu0 0.0
        %849 = vmatpush1.msra.mxu0 0.0
        %850 = vmatprep.subr.mxu0 0.0
        %851 = vmatpush1.msra.mxu0 0.0
        %852 = vmatprep.subr.mxu0 0.0
        %853 = vmatpush1.msra.mxu0 0.0
        %854 = vmatprep.subr.mxu0 0.0
        %855 = vmatpush1.msra.mxu0 0.0
        %856 = vmatprep.subr.mxu0 0.0
        %857 = vmatpush1.msra.mxu0 0.0
        %858 = vmatprep.mubr.f32.mxu0 0.0
        %859 = vmatmul.mubr.f32.gmra.mrb[0].mxu0 %v789
        %v860 = vpop.f32.mrb[0].mxu0
        %v861 = vadd.f32 %v785, %v860
        %v862 = vpop.f32.mrb[0].mxu0
        %863 = vmatprep.mubr.f32.mxu0 0.0
        %864 = vmatmul.mubr.f32.gmra.mrb[0].mxu0 %v792
        %v865 = vpop.f32.mrb[0].mxu0
        %v866 = vadd.f32 %v785, %v865
        %v867 = vpop.f32.mrb[0].mxu0
        %868 = vdwg.mxu0
        %v869 = vld [vmem:[%s1] sm:$0x1]
        %871 = vrot.lane.b32.xlu0 %v861, 96
        %v872 = vpop.permute.xlu0 %871
        %vm873 = vcmask 64512
        %v874 = vsel %vm873, %v861, 0
        %v876 = vsel %vm873, %v872, 0
        %878 = vmatprep.subr.mxu0 0.0
        %879 = vmatpush1.xpose.msra.mxu0 %v876
        %880 = vmatprep.subr.mxu0 0.0
        %881 = vmatpush1.xpose.msra.mxu0 0.0
        %882 = vmatprep.subr.mxu0 0.0
        %883 = vmatpush1.xpose.msra.mxu0 0.0
        %884 = vmatprep.subr.mxu0 0.0
        %885 = vmatpush1.xpose.msra.mxu0 0.0
        %886 = vmatprep.subr.mxu0 0.0
        %887 = vmatpush1.xpose.msra.mxu0 0.0
        %888 = vmatprep.subr.mxu0 0.0
        %889 = vmatpush1.xpose.msra.mxu0 0.0
        %890 = vmatprep.subr.mxu0 0.0
        %891 = vmatpush1.xpose.msra.mxu0 0.0
        %892 = vmatprep.subr.mxu0 0.0
        %893 = vmatpush1.xpose.msra.mxu0 0.0
        %894 = vmatprep.subr.mxu0 0.0
        %895 = vmatpush1.xpose.msra.mxu0 0.0
        %896 = vmatprep.subr.mxu0 0.0
        %897 = vmatpush1.xpose.msra.mxu0 0.0
        %898 = vmatprep.subr.mxu0 0.0
        %899 = vmatpush1.xpose.msra.mxu0 0.0
        %900 = vmatprep.subr.mxu0 0.0
        %901 = vmatpush1.xpose.msra.mxu0 0.0
        %902 = vmatprep.subr.mxu0 0.0
        %903 = vmatpush1.xpose.msra.mxu0 0.0
        %904 = vmatprep.subr.mxu0 0.0
        %905 = vmatpush1.xpose.msra.mxu0 0.0
        %906 = vmatprep.subr.mxu0 0.0
        %907 = vmatpush1.xpose.msra.mxu0 0.0
        %908 = vmatprep.subr.mxu0 0.0
        %909 = vmatpush1.xpose.msra.mxu0 0.0
        %910 = vmatprep.subr.mxu0 0.0
        %911 = vmatpush1.xpose.msra.mxu0 0.0
        %912 = vmatprep.subr.mxu0 0.0
        %913 = vmatpush1.xpose.msra.mxu0 0.0
        %914 = vmatprep.subr.mxu0 0.0
        %915 = vmatpush1.xpose.msra.mxu0 0.0
        %916 = vmatprep.subr.mxu0 0.0
        %917 = vmatpush1.xpose.msra.mxu0 0.0
        %918 = vmatprep.subr.mxu0 0.0
        %919 = vmatpush1.xpose.msra.mxu0 0.0
        %920 = vmatprep.subr.mxu0 0.0
        %921 = vmatpush1.xpose.msra.mxu0 0.0
        %922 = vmatprep.subr.mxu0 0.0
        %923 = vmatpush1.xpose.msra.mxu0 0.0
        %924 = vmatprep.subr.mxu0 0.0
        %925 = vmatpush1.xpose.msra.mxu0 0.0
        %926 = vmatprep.subr.mxu0 0.0
        %927 = vmatpush1.xpose.msra.mxu0 0.0
        %928 = vmatprep.subr.mxu0 0.0
        %929 = vmatpush1.xpose.msra.mxu0 0.0
        %930 = vmatprep.subr.mxu0 0.0
        %931 = vmatpush1.xpose.msra.mxu0 0.0
        %932 = vmatprep.subr.mxu0 0.0
        %933 = vmatpush1.xpose.msra.mxu0 0.0
        %934 = vmatprep.subr.mxu0 0.0
        %935 = vmatpush1.xpose.msra.mxu0 0.0
        %936 = vmatprep.subr.mxu0 0.0
        %937 = vmatpush1.xpose.msra.mxu0 0.0
        %938 = vmatprep.subr.mxu0 0.0
        %939 = vmatpush1.xpose.msra.mxu0 0.0
        %940 = vmatprep.subr.mxu0 0.0
        %941 = vmatpush1.xpose.msra.mxu0 0.0
        %942 = vmatprep.mubr.f32.mxu0 0.0
        %943 = vmatmul.mubr.f32.gmra.mrb[0].mxu0 %v874
        %v944 = vpop.f32.mrb[0].mxu0
        %v945 = vadd.f32 0.0, %v944
        %v946 = vpop.f32.mrb[0].mxu0
        %947 = vdwg.mxu0
        %v948 = vmul.f32 %v945, 0.35355338
        %v949 = vlaneseq
        %v950 = vshrl.u32 %v949, 7
        %v951 = vsub.s32 0, %v950
        %v952 = vrot.slane %v869, %v951
        %v953 = vadd.f32 %v948, %v952
        %v954 = vsel %vm873, %v953, -inf
        %955 = vmax.xlane.f32.xlu0 %v954
        %v956 = vpop.xlane.xlu0 %955
        %v957 = vsub.f32 %v953, %v956
        %v958 = vmul.f32 %v957, 1.442695
        %v959 = vpow.pop %v958
        %v960 = vsel %vm873, %v959, 0.0
        %961 = vadd.xlane.f32.xlu0 %v960
        %v962 = vpop.xlane.xlu0 %961
        %v963 = vrcp.pop %v962
        %v964 = vmul.f32 %v959, %v963
        %965 = vrot.lane.b32.xlu0 %v861, 64
        %v966 = vpop.permute.xlu0 %965
        %v969 = vsel %vm873, %v964, 0
        %971 = vmatprep.subr.mxu0 0.0
        %972 = vmatpush1.msra.mxu0 %v966
        %973 = vmatprep.subr.mxu0 0.0
        %974 = vmatpush1.msra.mxu0 0.0
        %975 = vmatprep.subr.mxu0 0.0
        %976 = vmatpush1.msra.mxu0 0.0
        %977 = vmatprep.subr.mxu0 0.0
        %978 = vmatpush1.msra.mxu0 0.0
        %979 = vmatprep.subr.mxu0 0.0
        %980 = vmatpush1.msra.mxu0 0.0
        %981 = vmatprep.subr.mxu0 0.0
        %982 = vmatpush1.msra.mxu0 0.0
        %983 = vmatprep.subr.mxu0 0.0
        %984 = vmatpush1.msra.mxu0 0.0
        %985 = vmatprep.subr.mxu0 0.0
        %986 = vmatpush1.msra.mxu0 0.0
        %987 = vmatprep.subr.mxu0 0.0
        %988 = vmatpush1.msra.mxu0 0.0
        %989 = vmatprep.subr.mxu0 0.0
        %990 = vmatpush1.msra.mxu0 0.0
        %991 = vmatprep.subr.mxu0 0.0
        %992 = vmatpush1.msra.mxu0 0.0
        %993 = vmatprep.subr.mxu0 0.0
        %994 = vmatpush1.msra.mxu0 0.0
        %995 = vmatprep.subr.mxu0 0.0
        %996 = vmatpush1.msra.mxu0 0.0
        %997 = vmatprep.subr.mxu0 0.0
        %998 = vmatpush1.msra.mxu0 0.0
        %999 = vmatprep.subr.mxu0 0.0
        %1000 = vmatpush1.msra.mxu0 0.0
        %1001 = vmatprep.subr.mxu0 0.0
        %1002 = vmatpush1.msra.mxu0 0.0
        %1003 = vmatprep.subr.mxu0 0.0
        %1004 = vmatpush1.msra.mxu0 0.0
        %1005 = vmatprep.subr.mxu0 0.0
        %1006 = vmatpush1.msra.mxu0 0.0
        %1007 = vmatprep.subr.mxu0 0.0
        %1008 = vmatpush1.msra.mxu0 0.0
        %1009 = vmatprep.subr.mxu0 0.0
        %1010 = vmatpush1.msra.mxu0 0.0
        %1011 = vmatprep.subr.mxu0 0.0
        %1012 = vmatpush1.msra.mxu0 0.0
        %1013 = vmatprep.subr.mxu0 0.0
        %1014 = vmatpush1.msra.mxu0 0.0
        %1015 = vmatprep.subr.mxu0 0.0
        %1016 = vmatpush1.msra.mxu0 0.0
        %1017 = vmatprep.subr.mxu0 0.0
        %1018 = vmatpush1.msra.mxu0 0.0
        %1019 = vmatprep.subr.mxu0 0.0
        %1020 = vmatpush1.msra.mxu0 0.0
        %1021 = vmatprep.subr.mxu0 0.0
        %1022 = vmatpush1.msra.mxu0 0.0
        %1023 = vmatprep.subr.mxu0 0.0
        %1024 = vmatpush1.msra.mxu0 0.0
        %1025 = vmatprep.subr.mxu0 0.0
        %1026 = vmatpush1.msra.mxu0 0.0
        %1027 = vmatprep.subr.mxu0 0.0
        %1028 = vmatpush1.msra.mxu0 0.0
        %1029 = vmatprep.subr.mxu0 0.0
        %1030 = vmatpush1.msra.mxu0 0.0
        %1031 = vmatprep.subr.mxu0 0.0
        %1032 = vmatpush1.msra.mxu0 0.0
        %1033 = vmatprep.subr.mxu0 0.0
        %1034 = vmatpush1.msra.mxu0 0.0
        %1035 = vmatprep.mubr.f32.mxu0 0.0
        %1036 = vmatmul.mubr.f32.gmra.mrb[0].mxu0 %v969
        %v1037 = vpop.f32.mrb[0].mxu0
        %v1038 = vadd.f32 0.0, %v1037
        %v1039 = vpop.f32.mrb[0].mxu0
        %1040 = vdwg.mxu0
        %1041 = vrot.lane.b32.xlu0 %v861, 120
        %v1042 = vpop.permute.xlu0 %1041
        %1043 = vrot.lane.b32.xlu0 %v861, 88
        %v1044 = vpop.permute.xlu0 %1043
        %v1045 = vsel %vm873, %v1042, 0
        %v1047 = vsel %vm873, %v1044, 0
        %1049 = vmatprep.subr.mxu0 0.0
        %1050 = vmatpush1.xpose.msra.mxu0 %v1047
        %1051 = vmatprep.subr.mxu0 0.0
        %1052 = vmatpush1.xpose.msra.mxu0 0.0
        %1053 = vmatprep.subr.mxu0 0.0
        %1054 = vmatpush1.xpose.msra.mxu0 0.0
        %1055 = vmatprep.subr.mxu0 0.0
        %1056 = vmatpush1.xpose.msra.mxu0 0.0
        %1057 = vmatprep.subr.mxu0 0.0
        %1058 = vmatpush1.xpose.msra.mxu0 0.0
        %1059 = vmatprep.subr.mxu0 0.0
        %1060 = vmatpush1.xpose.msra.mxu0 0.0
        %1061 = vmatprep.subr.mxu0 0.0
        %1062 = vmatpush1.xpose.msra.mxu0 0.0
        %1063 = vmatprep.subr.mxu0 0.0
        %1064 = vmatpush1.xpose.msra.mxu0 0.0
        %1065 = vmatprep.subr.mxu0 0.0
        %1066 = vmatpush1.xpose.msra.mxu0 0.0
        %1067 = vmatprep.subr.mxu0 0.0
        %1068 = vmatpush1.xpose.msra.mxu0 0.0
        %1069 = vmatprep.subr.mxu0 0.0
        %1070 = vmatpush1.xpose.msra.mxu0 0.0
        %1071 = vmatprep.subr.mxu0 0.0
        %1072 = vmatpush1.xpose.msra.mxu0 0.0
        %1073 = vmatprep.subr.mxu0 0.0
        %1074 = vmatpush1.xpose.msra.mxu0 0.0
        %1075 = vmatprep.subr.mxu0 0.0
        %1076 = vmatpush1.xpose.msra.mxu0 0.0
        %1077 = vmatprep.subr.mxu0 0.0
        %1078 = vmatpush1.xpose.msra.mxu0 0.0
        %1079 = vmatprep.subr.mxu0 0.0
        %1080 = vmatpush1.xpose.msra.mxu0 0.0
        %1081 = vmatprep.subr.mxu0 0.0
        %1082 = vmatpush1.xpose.msra.mxu0 0.0
        %1083 = vmatprep.subr.mxu0 0.0
        %1084 = vmatpush1.xpose.msra.mxu0 0.0
        %1085 = vmatprep.subr.mxu0 0.0
        %1086 = vmatpush1.xpose.msra.mxu0 0.0
        %1087 = vmatprep.subr.mxu0 0.0
        %1088 = vmatpush1.xpose.msra.mxu0 0.0
        %1089 = vmatprep.subr.mxu0 0.0
        %1090 = vmatpush1.xpose.msra.mxu0 0.0
        %1091 = vmatprep.subr.mxu0 0.0
        %1092 = vmatpush1.xpose.msra.mxu0 0.0
        %1093 = vmatprep.subr.mxu0 0.0
        %1094 = vmatpush1.xpose.msra.mxu0 0.0
        %1095 = vmatprep.subr.mxu0 0.0
        %1096 = vmatpush1.xpose.msra.mxu0 0.0
        %1097 = vmatprep.subr.mxu0 0.0
        %1098 = vmatpush1.xpose.msra.mxu0 0.0
        %1099 = vmatprep.subr.mxu0 0.0
        %1100 = vmatpush1.xpose.msra.mxu0 0.0
        %1101 = vmatprep.subr.mxu0 0.0
        %1102 = vmatpush1.xpose.msra.mxu0 0.0
        %1103 = vmatprep.subr.mxu0 0.0
        %1104 = vmatpush1.xpose.msra.mxu0 0.0
        %1105 = vmatprep.subr.mxu0 0.0
        %1106 = vmatpush1.xpose.msra.mxu0 0.0
        %1107 = vmatprep.subr.mxu0 0.0
        %1108 = vmatpush1.xpose.msra.mxu0 0.0
        %1109 = vmatprep.subr.mxu0 0.0
        %1110 = vmatpush1.xpose.msra.mxu0 0.0
        %1111 = vmatprep.subr.mxu0 0.0
        %1112 = vmatpush1.xpose.msra.mxu0 0.0
        %1113 = vmatprep.mubr.f32.mxu0 0.0
        %1114 = vmatmul.mubr.f32.gmra.mrb[0].mxu0 %v1045
        %v1115 = vpop.f32.mrb[0].mxu0
        %v1116 = vadd.f32 0.0, %v1115
        %v1117 = vpop.f32.mrb[0].mxu0
        %1118 = vdwg.mxu0
        %v1119 = vmul.f32 %v1116, 0.35355338
        %v1120 = vadd.f32 %v1119, %v952
        %v1121 = vsel %vm873, %v1120, -inf
        %1122 = vmax.xlane.f32.xlu0 %v1121
        %v1123 = vpop.xlane.xlu0 %1122
        %v1124 = vsub.f32 %v1120, %v1123
        %v1125 = vmul.f32 %v1124, 1.442695
        %v1126 = vpow.pop %v1125
        %v1127 = vsel %vm873, %v1126, 0.0
        %1128 = vadd.xlane.f32.xlu0 %v1127
        %v1129 = vpop.xlane.xlu0 %1128
        %v1130 = vrcp.pop %v1129
        %v1131 = vmul.f32 %v1126, %v1130
        %1132 = vrot.lane.b32.xlu0 %v861, 56
        %v1133 = vpop.permute.xlu0 %1132
        %v1136 = vsel %vm873, %v1131, 0
        %1138 = vmatprep.subr.mxu0 0.0
        %1139 = vmatpush1.msra.mxu0 %v1133
        %1140 = vmatprep.subr.mxu0 0.0
        %1141 = vmatpush1.msra.mxu0 0.0
        %1142 = vmatprep.subr.mxu0 0.0
        %1143 = vmatpush1.msra.mxu0 0.0
        %1144 = vmatprep.subr.mxu0 0.0
        %1145 = vmatpush1.msra.mxu0 0.0
        %1146 = vmatprep.subr.mxu0 0.0
        %1147 = vmatpush1.msra.mxu0 0.0
        %1148 = vmatprep.subr.mxu0 0.0
        %1149 = vmatpush1.msra.mxu0 0.0
        %1150 = vmatprep.subr.mxu0 0.0
        %1151 = vmatpush1.msra.mxu0 0.0
        %1152 = vmatprep.subr.mxu0 0.0
        %1153 = vmatpush1.msra.mxu0 0.0
        %1154 = vmatprep.subr.mxu0 0.0
        %1155 = vmatpush1.msra.mxu0 0.0
        %1156 = vmatprep.subr.mxu0 0.0
        %1157 = vmatpush1.msra.mxu0 0.0
        %1158 = vmatprep.subr.mxu0 0.0
        %1159 = vmatpush1.msra.mxu0 0.0
        %1160 = vmatprep.subr.mxu0 0.0
        %1161 = vmatpush1.msra.mxu0 0.0
        %1162 = vmatprep.subr.mxu0 0.0
        %1163 = vmatpush1.msra.mxu0 0.0
        %1164 = vmatprep.subr.mxu0 0.0
        %1165 = vmatpush1.msra.mxu0 0.0
        %1166 = vmatprep.subr.mxu0 0.0
        %1167 = vmatpush1.msra.mxu0 0.0
        %1168 = vmatprep.subr.mxu0 0.0
        %1169 = vmatpush1.msra.mxu0 0.0
        %1170 = vmatprep.subr.mxu0 0.0
        %1171 = vmatpush1.msra.mxu0 0.0
        %1172 = vmatprep.subr.mxu0 0.0
        %1173 = vmatpush1.msra.mxu0 0.0
        %1174 = vmatprep.subr.mxu0 0.0
        %1175 = vmatpush1.msra.mxu0 0.0
        %1176 = vmatprep.subr.mxu0 0.0
        %1177 = vmatpush1.msra.mxu0 0.0
        %1178 = vmatprep.subr.mxu0 0.0
        %1179 = vmatpush1.msra.mxu0 0.0
        %1180 = vmatprep.subr.mxu0 0.0
        %1181 = vmatpush1.msra.mxu0 0.0
        %1182 = vmatprep.subr.mxu0 0.0
        %1183 = vmatpush1.msra.mxu0 0.0
        %1184 = vmatprep.subr.mxu0 0.0
        %1185 = vmatpush1.msra.mxu0 0.0
        %1186 = vmatprep.subr.mxu0 0.0
        %1187 = vmatpush1.msra.mxu0 0.0
        %1188 = vmatprep.subr.mxu0 0.0
        %1189 = vmatpush1.msra.mxu0 0.0
        %1190 = vmatprep.subr.mxu0 0.0
        %1191 = vmatpush1.msra.mxu0 0.0
        %1192 = vmatprep.subr.mxu0 0.0
        %1193 = vmatpush1.msra.mxu0 0.0
        %1194 = vmatprep.subr.mxu0 0.0
        %1195 = vmatpush1.msra.mxu0 0.0
        %1196 = vmatprep.subr.mxu0 0.0
        %1197 = vmatpush1.msra.mxu0 0.0
        %1198 = vmatprep.subr.mxu0 0.0
        %1199 = vmatpush1.msra.mxu0 0.0
        %1200 = vmatprep.subr.mxu0 0.0
        %1201 = vmatpush1.msra.mxu0 0.0
        %1202 = vmatprep.mubr.f32.mxu0 0.0
        %1203 = vmatmul.mubr.f32.gmra.mrb[0].mxu0 %v1136
        %v1204 = vpop.f32.mrb[0].mxu0
        %v1205 = vadd.f32 0.0, %v1204
        %v1206 = vpop.f32.mrb[0].mxu0
        %1207 = vdwg.mxu0
        %1208 = vrot.lane.b32.xlu0 %v861, 112
        %v1209 = vpop.permute.xlu0 %1208
        %1210 = vrot.lane.b32.xlu0 %v861, 80
        %v1211 = vpop.permute.xlu0 %1210
        %v1212 = vsel %vm873, %v1209, 0
        %v1214 = vsel %vm873, %v1211, 0
        %1216 = vmatprep.subr.mxu0 0.0
        %1217 = vmatpush1.xpose.msra.mxu0 %v1214
        %1218 = vmatprep.subr.mxu0 0.0
        %1219 = vmatpush1.xpose.msra.mxu0 0.0
        %1220 = vmatprep.subr.mxu0 0.0
        %1221 = vmatpush1.xpose.msra.mxu0 0.0
        %1222 = vmatprep.subr.mxu0 0.0
        %1223 = vmatpush1.xpose.msra.mxu0 0.0
        %1224 = vmatprep.subr.mxu0 0.0
        %1225 = vmatpush1.xpose.msra.mxu0 0.0
        %1226 = vmatprep.subr.mxu0 0.0
        %1227 = vmatpush1.xpose.msra.mxu0 0.0
        %1228 = vmatprep.subr.mxu0 0.0
        %1229 = vmatpush1.xpose.msra.mxu0 0.0
        %1230 = vmatprep.subr.mxu0 0.0
        %1231 = vmatpush1.xpose.msra.mxu0 0.0
        %1232 = vmatprep.subr.mxu0 0.0
        %1233 = vmatpush1.xpose.msra.mxu0 0.0
        %1234 = vmatprep.subr.mxu0 0.0
        %1235 = vmatpush1.xpose.msra.mxu0 0.0
        %1236 = vmatprep.subr.mxu0 0.0
        %1237 = vmatpush1.xpose.msra.mxu0 0.0
        %1238 = vmatprep.subr.mxu0 0.0
        %1239 = vmatpush1.xpose.msra.mxu0 0.0
        %1240 = vmatprep.subr.mxu0 0.0
        %1241 = vmatpush1.xpose.msra.mxu0 0.0
        %1242 = vmatprep.subr.mxu0 0.0
        %1243 = vmatpush1.xpose.msra.mxu0 0.0
        %1244 = vmatprep.subr.mxu0 0.0
        %1245 = vmatpush1.xpose.msra.mxu0 0.0
        %1246 = vmatprep.subr.mxu0 0.0
        %1247 = vmatpush1.xpose.msra.mxu0 0.0
        %1248 = vmatprep.subr.mxu0 0.0
        %1249 = vmatpush1.xpose.msra.mxu0 0.0
        %1250 = vmatprep.subr.mxu0 0.0
        %1251 = vmatpush1.xpose.msra.mxu0 0.0
        %1252 = vmatprep.subr.mxu0 0.0
        %1253 = vmatpush1.xpose.msra.mxu0 0.0
        %1254 = vmatprep.subr.mxu0 0.0
        %1255 = vmatpush1.xpose.msra.mxu0 0.0
        %1256 = vmatprep.subr.mxu0 0.0
        %1257 = vmatpush1.xpose.msra.mxu0 0.0
        %1258 = vmatprep.subr.mxu0 0.0
        %1259 = vmatpush1.xpose.msra.mxu0 0.0
        %1260 = vmatprep.subr.mxu0 0.0
        %1261 = vmatpush1.xpose.msra.mxu0 0.0
        %1262 = vmatprep.subr.mxu0 0.0
        %1263 = vmatpush1.xpose.msra.mxu0 0.0
        %1264 = vmatprep.subr.mxu0 0.0
        %1265 = vmatpush1.xpose.msra.mxu0 0.0
        %1266 = vmatprep.subr.mxu0 0.0
        %1267 = vmatpush1.xpose.msra.mxu0 0.0
        %1268 = vmatprep.subr.mxu0 0.0
        %1269 = vmatpush1.xpose.msra.mxu0 0.0
        %1270 = vmatprep.subr.mxu0 0.0
        %1271 = vmatpush1.xpose.msra.mxu0 0.0
        %1272 = vmatprep.subr.mxu0 0.0
        %1273 = vmatpush1.xpose.msra.mxu0 0.0
        %1274 = vmatprep.subr.mxu0 0.0
        %1275 = vmatpush1.xpose.msra.mxu0 0.0
        %1276 = vmatprep.subr.mxu0 0.0
        %1277 = vmatpush1.xpose.msra.mxu0 0.0
        %1278 = vmatprep.subr.mxu0 0.0
        %1279 = vmatpush1.xpose.msra.mxu0 0.0
        %1280 = vmatprep.mubr.f32.mxu0 0.0
        %1281 = vmatmul.mubr.f32.gmra.mrb[0].mxu0 %v1212
        %v1282 = vpop.f32.mrb[0].mxu0
        %v1283 = vadd.f32 0.0, %v1282
        %v1284 = vpop.f32.mrb[0].mxu0
        %1285 = vdwg.mxu0
        %v1286 = vmul.f32 %v1283, 0.35355338
        %v1287 = vadd.f32 %v1286, %v952
        %v1288 = vsel %vm873, %v1287, -inf
        %1289 = vmax.xlane.f32.xlu0 %v1288
        %v1290 = vpop.xlane.xlu0 %1289
        %v1291 = vsub.f32 %v1287, %v1290
        %v1292 = vmul.f32 %v1291, 1.442695
        %v1293 = vpow.pop %v1292
        %v1294 = vsel %vm873, %v1293, 0.0
        %1295 = vadd.xlane.f32.xlu0 %v1294
        %v1296 = vpop.xlane.xlu0 %1295
        %v1297 = vrcp.pop %v1296
        %v1298 = vmul.f32 %v1293, %v1297
        %1299 = vrot.lane.b32.xlu0 %v861, 48
        %v1300 = vpop.permute.xlu0 %1299
        %v1303 = vsel %vm873, %v1298, 0
        %1305 = vmatprep.subr.mxu0 0.0
        %1306 = vmatpush1.msra.mxu0 %v1300
        %1307 = vmatprep.subr.mxu0 0.0
        %1308 = vmatpush1.msra.mxu0 0.0
        %1309 = vmatprep.subr.mxu0 0.0
        %1310 = vmatpush1.msra.mxu0 0.0
        %1311 = vmatprep.subr.mxu0 0.0
        %1312 = vmatpush1.msra.mxu0 0.0
        %1313 = vmatprep.subr.mxu0 0.0
        %1314 = vmatpush1.msra.mxu0 0.0
        %1315 = vmatprep.subr.mxu0 0.0
        %1316 = vmatpush1.msra.mxu0 0.0
        %1317 = vmatprep.subr.mxu0 0.0
        %1318 = vmatpush1.msra.mxu0 0.0
        %1319 = vmatprep.subr.mxu0 0.0
        %1320 = vmatpush1.msra.mxu0 0.0
        %1321 = vmatprep.subr.mxu0 0.0
        %1322 = vmatpush1.msra.mxu0 0.0
        %1323 = vmatprep.subr.mxu0 0.0
        %1324 = vmatpush1.msra.mxu0 0.0
        %1325 = vmatprep.subr.mxu0 0.0
        %1326 = vmatpush1.msra.mxu0 0.0
        %1327 = vmatprep.subr.mxu0 0.0
        %1328 = vmatpush1.msra.mxu0 0.0
        %1329 = vmatprep.subr.mxu0 0.0
        %1330 = vmatpush1.msra.mxu0 0.0
        %1331 = vmatprep.subr.mxu0 0.0
        %1332 = vmatpush1.msra.mxu0 0.0
        %1333 = vmatprep.subr.mxu0 0.0
        %1334 = vmatpush1.msra.mxu0 0.0
        %1335 = vmatprep.subr.mxu0 0.0
        %1336 = vmatpush1.msra.mxu0 0.0
        %1337 = vmatprep.subr.mxu0 0.0
        %1338 = vmatpush1.msra.mxu0 0.0
        %1339 = vmatprep.subr.mxu0 0.0
        %1340 = vmatpush1.msra.mxu0 0.0
        %1341 = vmatprep.subr.mxu0 0.0
        %1342 = vmatpush1.msra.mxu0 0.0
        %1343 = vmatprep.subr.mxu0 0.0
        %1344 = vmatpush1.msra.mxu0 0.0
        %1345 = vmatprep.subr.mxu0 0.0
        %1346 = vmatpush1.msra.mxu0 0.0
        %1347 = vmatprep.subr.mxu0 0.0
        %1348 = vmatpush1.msra.mxu0 0.0
        %1349 = vmatprep.subr.mxu0 0.0
        %1350 = vmatpush1.msra.mxu0 0.0
        %1351 = vmatprep.subr.mxu0 0.0
        %1352 = vmatpush1.msra.mxu0 0.0
        %1353 = vmatprep.subr.mxu0 0.0
        %1354 = vmatpush1.msra.mxu0 0.0
        %1355 = vmatprep.subr.mxu0 0.0
        %1356 = vmatpush1.msra.mxu0 0.0
        %1357 = vmatprep.subr.mxu0 0.0
        %1358 = vmatpush1.msra.mxu0 0.0
        %1359 = vmatprep.subr.mxu0 0.0
        %1360 = vmatpush1.msra.mxu0 0.0
        %1361 = vmatprep.subr.mxu0 0.0
        %1362 = vmatpush1.msra.mxu0 0.0
        %1363 = vmatprep.subr.mxu0 0.0
        %1364 = vmatpush1.msra.mxu0 0.0
        %1365 = vmatprep.subr.mxu0 0.0
        %1366 = vmatpush1.msra.mxu0 0.0
        %1367 = vmatprep.subr.mxu0 0.0
        %1368 = vmatpush1.msra.mxu0 0.0
        %1369 = vmatprep.mubr.f32.mxu0 0.0
        %1370 = vmatmul.mubr.f32.gmra.mrb[0].mxu0 %v1303
        %v1371 = vpop.f32.mrb[0].mxu0
        %v1372 = vadd.f32 0.0, %v1371
        %v1373 = vpop.f32.mrb[0].mxu0
        %1374 = vdwg.mxu0
        %1375 = vrot.lane.b32.xlu0 %v861, 104
        %v1376 = vpop.permute.xlu0 %1375
        %1377 = vrot.lane.b32.xlu0 %v861, 72
        %v1378 = vpop.permute.xlu0 %1377
        %v1379 = vsel %vm873, %v1376, 0
        %v1381 = vsel %vm873, %v1378, 0
        %1383 = vmatprep.subr.mxu0 0.0
        %1384 = vmatpush1.xpose.msra.mxu0 %v1381
        %1385 = vmatprep.subr.mxu0 0.0
        %1386 = vmatpush1.xpose.msra.mxu0 0.0
        %1387 = vmatprep.subr.mxu0 0.0
        %1388 = vmatpush1.xpose.msra.mxu0 0.0
        %1389 = vmatprep.subr.mxu0 0.0
        %1390 = vmatpush1.xpose.msra.mxu0 0.0
        %1391 = vmatprep.subr.mxu0 0.0
        %1392 = vmatpush1.xpose.msra.mxu0 0.0
        %1393 = vmatprep.subr.mxu0 0.0
        %1394 = vmatpush1.xpose.msra.mxu0 0.0
        %1395 = vmatprep.subr.mxu0 0.0
        %1396 = vmatpush1.xpose.msra.mxu0 0.0
        %1397 = vmatprep.subr.mxu0 0.0
        %1398 = vmatpush1.xpose.msra.mxu0 0.0
        %1399 = vmatprep.subr.mxu0 0.0
        %1400 = vmatpush1.xpose.msra.mxu0 0.0
        %1401 = vmatprep.subr.mxu0 0.0
        %1402 = vmatpush1.xpose.msra.mxu0 0.0
        %1403 = vmatprep.subr.mxu0 0.0
        %1404 = vmatpush1.xpose.msra.mxu0 0.0
        %1405 = vmatprep.subr.mxu0 0.0
        %1406 = vmatpush1.xpose.msra.mxu0 0.0
        %1407 = vmatprep.subr.mxu0 0.0
        %1408 = vmatpush1.xpose.msra.mxu0 0.0
        %1409 = vmatprep.subr.mxu0 0.0
        %1410 = vmatpush1.xpose.msra.mxu0 0.0
        %1411 = vmatprep.subr.mxu0 0.0
        %1412 = vmatpush1.xpose.msra.mxu0 0.0
        %1413 = vmatprep.subr.mxu0 0.0
        %1414 = vmatpush1.xpose.msra.mxu0 0.0
        %1415 = vmatprep.subr.mxu0 0.0
        %1416 = vmatpush1.xpose.msra.mxu0 0.0
        %1417 = vmatprep.subr.mxu0 0.0
        %1418 = vmatpush1.xpose.msra.mxu0 0.0
        %1419 = vmatprep.subr.mxu0 0.0
        %1420 = vmatpush1.xpose.msra.mxu0 0.0
        %1421 = vmatprep.subr.mxu0 0.0
        %1422 = vmatpush1.xpose.msra.mxu0 0.0
        %1423 = vmatprep.subr.mxu0 0.0
        %1424 = vmatpush1.xpose.msra.mxu0 0.0
        %1425 = vmatprep.subr.mxu0 0.0
        %1426 = vmatpush1.xpose.msra.mxu0 0.0
        %1427 = vmatprep.subr.mxu0 0.0
        %1428 = vmatpush1.xpose.msra.mxu0 0.0
        %1429 = vmatprep.subr.mxu0 0.0
        %1430 = vmatpush1.xpose.msra.mxu0 0.0
        %1431 = vmatprep.subr.mxu0 0.0
        %1432 = vmatpush1.xpose.msra.mxu0 0.0
        %1433 = vmatprep.subr.mxu0 0.0
        %1434 = vmatpush1.xpose.msra.mxu0 0.0
        %1435 = vmatprep.subr.mxu0 0.0
        %1436 = vmatpush1.xpose.msra.mxu0 0.0
        %1437 = vmatprep.subr.mxu0 0.0
        %1438 = vmatpush1.xpose.msra.mxu0 0.0
        %1439 = vmatprep.subr.mxu0 0.0
        %1440 = vmatpush1.xpose.msra.mxu0 0.0
        %1441 = vmatprep.subr.mxu0 0.0
        %1442 = vmatpush1.xpose.msra.mxu0 0.0
        %1443 = vmatprep.subr.mxu0 0.0
        %1444 = vmatpush1.xpose.msra.mxu0 0.0
        %1445 = vmatprep.subr.mxu0 0.0
        %1446 = vmatpush1.xpose.msra.mxu0 0.0
        %1447 = vmatprep.mubr.f32.mxu0 0.0
        %1448 = vmatmul.mubr.f32.gmra.mrb[0].mxu0 %v1379
        %v1449 = vpop.f32.mrb[0].mxu0
        %v1450 = vadd.f32 0.0, %v1449
        %v1451 = vpop.f32.mrb[0].mxu0
        %1452 = vdwg.mxu0
        %v1453 = vmul.f32 %v1450, 0.35355338
        %v1454 = vadd.f32 %v1453, %v952
        %v1455 = vsel %vm873, %v1454, -inf
        %1456 = vmax.xlane.f32.xlu0 %v1455
        %v1457 = vpop.xlane.xlu0 %1456
        %v1458 = vsub.f32 %v1454, %v1457
        %v1459 = vmul.f32 %v1458, 1.442695
        %v1460 = vpow.pop %v1459
        %v1461 = vsel %vm873, %v1460, 0.0
        %1462 = vadd.xlane.f32.xlu0 %v1461
        %v1463 = vpop.xlane.xlu0 %1462
        %v1464 = vrcp.pop %v1463
        %v1465 = vmul.f32 %v1460, %v1464
        %1466 = vrot.lane.b32.xlu0 %v861, 40
        %v1467 = vpop.permute.xlu0 %1466
        %v1470 = vsel %vm873, %v1465, 0
        %1472 = vmatprep.subr.mxu0 0.0
        %1473 = vmatpush1.msra.mxu0 %v1467
        %1474 = vmatprep.subr.mxu0 0.0
        %1475 = vmatpush1.msra.mxu0 0.0
        %1476 = vmatprep.subr.mxu0 0.0
        %1477 = vmatpush1.msra.mxu0 0.0
        %1478 = vmatprep.subr.mxu0 0.0
        %1479 = vmatpush1.msra.mxu0 0.0
        %1480 = vmatprep.subr.mxu0 0.0
        %1481 = vmatpush1.msra.mxu0 0.0
        %1482 = vmatprep.subr.mxu0 0.0
        %1483 = vmatpush1.msra.mxu0 0.0
        %1484 = vmatprep.subr.mxu0 0.0
        %1485 = vmatpush1.msra.mxu0 0.0
        %1486 = vmatprep.subr.mxu0 0.0
        %1487 = vmatpush1.msra.mxu0 0.0
        %1488 = vmatprep.subr.mxu0 0.0
        %1489 = vmatpush1.msra.mxu0 0.0
        %1490 = vmatprep.subr.mxu0 0.0
        %1491 = vmatpush1.msra.mxu0 0.0
        %1492 = vmatprep.subr.mxu0 0.0
        %1493 = vmatpush1.msra.mxu0 0.0
        %1494 = vmatprep.subr.mxu0 0.0
        %1495 = vmatpush1.msra.mxu0 0.0
        %1496 = vmatprep.subr.mxu0 0.0
        %1497 = vmatpush1.msra.mxu0 0.0
        %1498 = vmatprep.subr.mxu0 0.0
        %1499 = vmatpush1.msra.mxu0 0.0
        %1500 = vmatprep.subr.mxu0 0.0
        %1501 = vmatpush1.msra.mxu0 0.0
        %1502 = vmatprep.subr.mxu0 0.0
        %1503 = vmatpush1.msra.mxu0 0.0
        %1504 = vmatprep.subr.mxu0 0.0
        %1505 = vmatpush1.msra.mxu0 0.0
        %1506 = vmatprep.subr.mxu0 0.0
        %1507 = vmatpush1.msra.mxu0 0.0
        %1508 = vmatprep.subr.mxu0 0.0
        %1509 = vmatpush1.msra.mxu0 0.0
        %1510 = vmatprep.subr.mxu0 0.0
        %1511 = vmatpush1.msra.mxu0 0.0
        %1512 = vmatprep.subr.mxu0 0.0
        %1513 = vmatpush1.msra.mxu0 0.0
        %1514 = vmatprep.subr.mxu0 0.0
        %1515 = vmatpush1.msra.mxu0 0.0
        %1516 = vmatprep.subr.mxu0 0.0
        %1517 = vmatpush1.msra.mxu0 0.0
        %1518 = vmatprep.subr.mxu0 0.0
        %1519 = vmatpush1.msra.mxu0 0.0
        %1520 = vmatprep.subr.mxu0 0.0
        %1521 = vmatpush1.msra.mxu0 0.0
        %1522 = vmatprep.subr.mxu0 0.0
        %1523 = vmatpush1.msra.mxu0 0.0
        %1524 = vmatprep.subr.mxu0 0.0
        %1525 = vmatpush1.msra.mxu0 0.0
        %1526 = vmatprep.subr.mxu0 0.0
        %1527 = vmatpush1.msra.mxu0 0.0
        %1528 = vmatprep.subr.mxu0 0.0
        %1529 = vmatpush1.msra.mxu0 0.0
        %1530 = vmatprep.subr.mxu0 0.0
        %1531 = vmatpush1.msra.mxu0 0.0
        %1532 = vmatprep.subr.mxu0 0.0
        %1533 = vmatpush1.msra.mxu0 0.0
        %1534 = vmatprep.subr.mxu0 0.0
        %1535 = vmatpush1.msra.mxu0 0.0
        %1536 = vmatprep.mubr.f32.mxu0 0.0
        %1537 = vmatmul.mubr.f32.gmra.mrb[0].mxu0 %v1470
        %v1538 = vpop.f32.mrb[0].mxu0
        %v1539 = vadd.f32 0.0, %v1538
        %v1540 = vpop.f32.mrb[0].mxu0
        %1541 = vdwg.mxu0
        %1543 = vrot.lane.b32.xlu0 %v1205, 8
        %v1544 = vpop.permute.xlu0 %1543
        %1547 = vrot.lane.b32.xlu0 %v1372, 16
        %v1548 = vpop.permute.xlu0 %1547
        %1551 = vrot.lane.b32.xlu0 %v1539, 24
        %v1552 = vpop.permute.xlu0 %1551
        %v1554 = vsel %vm873, %v1038, %v1544
        %vm1555 = vcmask 130048
        %v1556 = vsel %vm1555, %v1554, %v1548
        %vm1557 = vcmask 195584
        %v1558 = vsel %vm1557, %v1556, %v1552
        %v1559 = vld [vmem:[%s1 + $0x1] sm:$0x1]
        %1561 = vrot.lane.b32.xlu0 %v866, 96
        %v1562 = vpop.permute.xlu0 %1561
        %v1563 = vsel %vm873, %v866, 0
        %v1565 = vsel %vm873, %v1562, 0
        %1567 = vmatprep.subr.mxu0 0.0
        %1568 = vmatpush1.xpose.msra.mxu0 %v1565
        %1569 = vmatprep.subr.mxu0 0.0
        %1570 = vmatpush1.xpose.msra.mxu0 0.0
        %1571 = vmatprep.subr.mxu0 0.0
        %1572 = vmatpush1.xpose.msra.mxu0 0.0
        %1573 = vmatprep.subr.mxu0 0.0
        %1574 = vmatpush1.xpose.msra.mxu0 0.0
        %1575 = vmatprep.subr.mxu0 0.0
        %1576 = vmatpush1.xpose.msra.mxu0 0.0
        %1577 = vmatprep.subr.mxu0 0.0
        %1578 = vmatpush1.xpose.msra.mxu0 0.0
        %1579 = vmatprep.subr.mxu0 0.0
        %1580 = vmatpush1.xpose.msra.mxu0 0.0
        %1581 = vmatprep.subr.mxu0 0.0
        %1582 = vmatpush1.xpose.msra.mxu0 0.0
        %1583 = vmatprep.subr.mxu0 0.0
        %1584 = vmatpush1.xpose.msra.mxu0 0.0
        %1585 = vmatprep.subr.mxu0 0.0
        %1586 = vmatpush1.xpose.msra.mxu0 0.0
        %1587 = vmatprep.subr.mxu0 0.0
        %1588 = vmatpush1.xpose.msra.mxu0 0.0
        %1589 = vmatprep.subr.mxu0 0.0
        %1590 = vmatpush1.xpose.msra.mxu0 0.0
        %1591 = vmatprep.subr.mxu0 0.0
        %1592 = vmatpush1.xpose.msra.mxu0 0.0
        %1593 = vmatprep.subr.mxu0 0.0
        %1594 = vmatpush1.xpose.msra.mxu0 0.0
        %1595 = vmatprep.subr.mxu0 0.0
        %1596 = vmatpush1.xpose.msra.mxu0 0.0
        %1597 = vmatprep.subr.mxu0 0.0
        %1598 = vmatpush1.xpose.msra.mxu0 0.0
        %1599 = vmatprep.subr.mxu0 0.0
        %1600 = vmatpush1.xpose.msra.mxu0 0.0
        %1601 = vmatprep.subr.mxu0 0.0
        %1602 = vmatpush1.xpose.msra.mxu0 0.0
        %1603 = vmatprep.subr.mxu0 0.0
        %1604 = vmatpush1.xpose.msra.mxu0 0.0
        %1605 = vmatprep.subr.mxu0 0.0
        %1606 = vmatpush1.xpose.msra.mxu0 0.0
        %1607 = vmatprep.subr.mxu0 0.0
        %1608 = vmatpush1.xpose.msra.mxu0 0.0
        %1609 = vmatprep.subr.mxu0 0.0
        %1610 = vmatpush1.xpose.msra.mxu0 0.0
        %1611 = vmatprep.subr.mxu0 0.0
        %1612 = vmatpush1.xpose.msra.mxu0 0.0
        %1613 = vmatprep.subr.mxu0 0.0
        %1614 = vmatpush1.xpose.msra.mxu0 0.0
        %1615 = vmatprep.subr.mxu0 0.0
        %1616 = vmatpush1.xpose.msra.mxu0 0.0
        %1617 = vmatprep.subr.mxu0 0.0
        %1618 = vmatpush1.xpose.msra.mxu0 0.0
        %1619 = vmatprep.subr.mxu0 0.0
        %1620 = vmatpush1.xpose.msra.mxu0 0.0
        %1621 = vmatprep.subr.mxu0 0.0
        %1622 = vmatpush1.xpose.msra.mxu0 0.0
        %1623 = vmatprep.subr.mxu0 0.0
        %1624 = vmatpush1.xpose.msra.mxu0 0.0
        %1625 = vmatprep.subr.mxu0 0.0
        %1626 = vmatpush1.xpose.msra.mxu0 0.0
        %1627 = vmatprep.subr.mxu0 0.0
        %1628 = vmatpush1.xpose.msra.mxu0 0.0
        %1629 = vmatprep.subr.mxu0 0.0
        %1630 = vmatpush1.xpose.msra.mxu0 0.0
        %1631 = vmatprep.mubr.f32.mxu0 0.0
        %1632 = vmatmul.mubr.f32.gmra.mrb[0].mxu0 %v1563
        %v1633 = vpop.f32.mrb[0].mxu0
        %v1634 = vadd.f32 0.0, %v1633
        %v1635 = vpop.f32.mrb[0].mxu0
        %1636 = vdwg.mxu0
        %v1637 = vmul.f32 %v1634, 0.35355338
        %v1638 = vlaneseq
        %v1639 = vshrl.u32 %v1638, 7
        %v1640 = vsub.s32 0, %v1639
        %v1641 = vrot.slane %v1559, %v1640
        %v1642 = vadd.f32 %v1637, %v1641
        %v1643 = vsel %vm873, %v1642, -inf
        %1644 = vmax.xlane.f32.xlu0 %v1643
        %v1645 = vpop.xlane.xlu0 %1644
        %v1646 = vsub.f32 %v1642, %v1645
        %v1647 = vmul.f32 %v1646, 1.442695
        %v1648 = vpow.pop %v1647
        %v1649 = vsel %vm873, %v1648, 0.0
        %1650 = vadd.xlane.f32.xlu0 %v1649
        %v1651 = vpop.xlane.xlu0 %1650
        %v1652 = vrcp.pop %v1651
        %v1653 = vmul.f32 %v1648, %v1652
        %1654 = vrot.lane.b32.xlu0 %v866, 64
        %v1655 = vpop.permute.xlu0 %1654
        %v1658 = vsel %vm873, %v1653, 0
        %1660 = vmatprep.subr.mxu0 0.0
        %1661 = vmatpush1.msra.mxu0 %v1655
        %1662 = vmatprep.subr.mxu0 0.0
        %1663 = vmatpush1.msra.mxu0 0.0
        %1664 = vmatprep.subr.mxu0 0.0
        %1665 = vmatpush1.msra.mxu0 0.0
        %1666 = vmatprep.subr.mxu0 0.0
        %1667 = vmatpush1.msra.mxu0 0.0
        %1668 = vmatprep.subr.mxu0 0.0
        %1669 = vmatpush1.msra.mxu0 0.0
        %1670 = vmatprep.subr.mxu0 0.0
        %1671 = vmatpush1.msra.mxu0 0.0
        %1672 = vmatprep.subr.mxu0 0.0
        %1673 = vmatpush1.msra.mxu0 0.0
        %1674 = vmatprep.subr.mxu0 0.0
        %1675 = vmatpush1.msra.mxu0 0.0
        %1676 = vmatprep.subr.mxu0 0.0
        %1677 = vmatpush1.msra.mxu0 0.0
        %1678 = vmatprep.subr.mxu0 0.0
        %1679 = vmatpush1.msra.mxu0 0.0
        %1680 = vmatprep.subr.mxu0 0.0
        %1681 = vmatpush1.msra.mxu0 0.0
        %1682 = vmatprep.subr.mxu0 0.0
        %1683 = vmatpush1.msra.mxu0 0.0
        %1684 = vmatprep.subr.mxu0 0.0
        %1685 = vmatpush1.msra.mxu0 0.0
        %1686 = vmatprep.subr.mxu0 0.0
        %1687 = vmatpush1.msra.mxu0 0.0
        %1688 = vmatprep.subr.mxu0 0.0
        %1689 = vmatpush1.msra.mxu0 0.0
        %1690 = vmatprep.subr.mxu0 0.0
        %1691 = vmatpush1.msra.mxu0 0.0
        %1692 = vmatprep.subr.mxu0 0.0
        %1693 = vmatpush1.msra.mxu0 0.0
        %1694 = vmatprep.subr.mxu0 0.0
        %1695 = vmatpush1.msra.mxu0 0.0
        %1696 = vmatprep.subr.mxu0 0.0
        %1697 = vmatpush1.msra.mxu0 0.0
        %1698 = vmatprep.subr.mxu0 0.0
        %1699 = vmatpush1.msra.mxu0 0.0
        %1700 = vmatprep.subr.mxu0 0.0
        %1701 = vmatpush1.msra.mxu0 0.0
        %1702 = vmatprep.subr.mxu0 0.0
        %1703 = vmatpush1.msra.mxu0 0.0
        %1704 = vmatprep.subr.mxu0 0.0
        %1705 = vmatpush1.msra.mxu0 0.0
        %1706 = vmatprep.subr.mxu0 0.0
        %1707 = vmatpush1.msra.mxu0 0.0
        %1708 = vmatprep.subr.mxu0 0.0
        %1709 = vmatpush1.msra.mxu0 0.0
        %1710 = vmatprep.subr.mxu0 0.0
        %1711 = vmatpush1.msra.mxu0 0.0
        %1712 = vmatprep.subr.mxu0 0.0
        %1713 = vmatpush1.msra.mxu0 0.0
        %1714 = vmatprep.subr.mxu0 0.0
        %1715 = vmatpush1.msra.mxu0 0.0
        %1716 = vmatprep.subr.mxu0 0.0
        %1717 = vmatpush1.msra.mxu0 0.0
        %1718 = vmatprep.subr.mxu0 0.0
        %1719 = vmatpush1.msra.mxu0 0.0
        %1720 = vmatprep.subr.mxu0 0.0
        %1721 = vmatpush1.msra.mxu0 0.0
        %1722 = vmatprep.subr.mxu0 0.0
        %1723 = vmatpush1.msra.mxu0 0.0
        %1724 = vmatprep.mubr.f32.mxu0 0.0
        %1725 = vmatmul.mubr.f32.gmra.mrb[0].mxu0 %v1658
        %v1726 = vpop.f32.mrb[0].mxu0
        %v1727 = vadd.f32 0.0, %v1726
        %v1728 = vpop.f32.mrb[0].mxu0
        %1729 = vdwg.mxu0
        %1730 = vrot.lane.b32.xlu0 %v866, 120
        %v1731 = vpop.permute.xlu0 %1730
        %1732 = vrot.lane.b32.xlu0 %v866, 88
        %v1733 = vpop.permute.xlu0 %1732
        %v1734 = vsel %vm873, %v1731, 0
        %v1736 = vsel %vm873, %v1733, 0
        %1738 = vmatprep.subr.mxu0 0.0
        %1739 = vmatpush1.xpose.msra.mxu0 %v1736
        %1740 = vmatprep.subr.mxu0 0.0
        %1741 = vmatpush1.xpose.msra.mxu0 0.0
        %1742 = vmatprep.subr.mxu0 0.0
        %1743 = vmatpush1.xpose.msra.mxu0 0.0
        %1744 = vmatprep.subr.mxu0 0.0
        %1745 = vmatpush1.xpose.msra.mxu0 0.0
        %1746 = vmatprep.subr.mxu0 0.0
        %1747 = vmatpush1.xpose.msra.mxu0 0.0
        %1748 = vmatprep.subr.mxu0 0.0
        %1749 = vmatpush1.xpose.msra.mxu0 0.0
        %1750 = vmatprep.subr.mxu0 0.0
        %1751 = vmatpush1.xpose.msra.mxu0 0.0
        %1752 = vmatprep.subr.mxu0 0.0
        %1753 = vmatpush1.xpose.msra.mxu0 0.0
        %1754 = vmatprep.subr.mxu0 0.0
        %1755 = vmatpush1.xpose.msra.mxu0 0.0
        %1756 = vmatprep.subr.mxu0 0.0
        %1757 = vmatpush1.xpose.msra.mxu0 0.0
        %1758 = vmatprep.subr.mxu0 0.0
        %1759 = vmatpush1.xpose.msra.mxu0 0.0
        %1760 = vmatprep.subr.mxu0 0.0
        %1761 = vmatpush1.xpose.msra.mxu0 0.0
        %1762 = vmatprep.subr.mxu0 0.0
        %1763 = vmatpush1.xpose.msra.mxu0 0.0
        %1764 = vmatprep.subr.mxu0 0.0
        %1765 = vmatpush1.xpose.msra.mxu0 0.0
        %1766 = vmatprep.subr.mxu0 0.0
        %1767 = vmatpush1.xpose.msra.mxu0 0.0
        %1768 = vmatprep.subr.mxu0 0.0
        %1769 = vmatpush1.xpose.msra.mxu0 0.0
        %1770 = vmatprep.subr.mxu0 0.0
        %1771 = vmatpush1.xpose.msra.mxu0 0.0
        %1772 = vmatprep.subr.mxu0 0.0
        %1773 = vmatpush1.xpose.msra.mxu0 0.0
        %1774 = vmatprep.subr.mxu0 0.0
        %1775 = vmatpush1.xpose.msra.mxu0 0.0
        %1776 = vmatprep.subr.mxu0 0.0
        %1777 = vmatpush1.xpose.msra.mxu0 0.0
        %1778 = vmatprep.subr.mxu0 0.0
        %1779 = vmatpush1.xpose.msra.mxu0 0.0
        %1780 = vmatprep.subr.mxu0 0.0
        %1781 = vmatpush1.xpose.msra.mxu0 0.0
        %1782 = vmatprep.subr.mxu0 0.0
        %1783 = vmatpush1.xpose.msra.mxu0 0.0
        %1784 = vmatprep.subr.mxu0 0.0
        %1785 = vmatpush1.xpose.msra.mxu0 0.0
        %1786 = vmatprep.subr.mxu0 0.0
        %1787 = vmatpush1.xpose.msra.mxu0 0.0
        %1788 = vmatprep.subr.mxu0 0.0
        %1789 = vmatpush1.xpose.msra.mxu0 0.0
        %1790 = vmatprep.subr.mxu0 0.0
        %1791 = vmatpush1.xpose.msra.mxu0 0.0
        %1792 = vmatprep.subr.mxu0 0.0
        %1793 = vmatpush1.xpose.msra.mxu0 0.0
        %1794 = vmatprep.subr.mxu0 0.0
        %1795 = vmatpush1.xpose.msra.mxu0 0.0
        %1796 = vmatprep.subr.mxu0 0.0
        %1797 = vmatpush1.xpose.msra.mxu0 0.0
        %1798 = vmatprep.subr.mxu0 0.0
        %1799 = vmatpush1.xpose.msra.mxu0 0.0
        %1800 = vmatprep.subr.mxu0 0.0
        %1801 = vmatpush1.xpose.msra.mxu0 0.0
        %1802 = vmatprep.mubr.f32.mxu0 0.0
        %1803 = vmatmul.mubr.f32.gmra.mrb[0].mxu0 %v1734
        %v1804 = vpop.f32.mrb[0].mxu0
        %v1805 = vadd.f32 0.0, %v1804
        %v1806 = vpop.f32.mrb[0].mxu0
        %1807 = vdwg.mxu0
        %v1808 = vmul.f32 %v1805, 0.35355338
        %v1809 = vadd.f32 %v1808, %v1641
        %v1810 = vsel %vm873, %v1809, -inf
        %1811 = vmax.xlane.f32.xlu0 %v1810
        %v1812 = vpop.xlane.xlu0 %1811
        %v1813 = vsub.f32 %v1809, %v1812
        %v1814 = vmul.f32 %v1813, 1.442695
        %v1815 = vpow.pop %v1814
        %v1816 = vsel %vm873, %v1815, 0.0
        %1817 = vadd.xlane.f32.xlu0 %v1816
        %v1818 = vpop.xlane.xlu0 %1817
        %v1819 = vrcp.pop %v1818
        %v1820 = vmul.f32 %v1815, %v1819
        %1821 = vrot.lane.b32.xlu0 %v866, 56
        %v1822 = vpop.permute.xlu0 %1821
        %v1825 = vsel %vm873, %v1820, 0
        %1827 = vmatprep.subr.mxu0 0.0
        %1828 = vmatpush1.msra.mxu0 %v1822
        %1829 = vmatprep.subr.mxu0 0.0
        %1830 = vmatpush1.msra.mxu0 0.0
        %1831 = vmatprep.subr.mxu0 0.0
        %1832 = vmatpush1.msra.mxu0 0.0
        %1833 = vmatprep.subr.mxu0 0.0
        %1834 = vmatpush1.msra.mxu0 0.0
        %1835 = vmatprep.subr.mxu0 0.0
        %1836 = vmatpush1.msra.mxu0 0.0
        %1837 = vmatprep.subr.mxu0 0.0
        %1838 = vmatpush1.msra.mxu0 0.0
        %1839 = vmatprep.subr.mxu0 0.0
        %1840 = vmatpush1.msra.mxu0 0.0
        %1841 = vmatprep.subr.mxu0 0.0
        %1842 = vmatpush1.msra.mxu0 0.0
        %1843 = vmatprep.subr.mxu0 0.0
        %1844 = vmatpush1.msra.mxu0 0.0
        %1845 = vmatprep.subr.mxu0 0.0
        %1846 = vmatpush1.msra.mxu0 0.0
        %1847 = vmatprep.subr.mxu0 0.0
        %1848 = vmatpush1.msra.mxu0 0.0
        %1849 = vmatprep.subr.mxu0 0.0
        %1850 = vmatpush1.msra.mxu0 0.0
        %1851 = vmatprep.subr.mxu0 0.0
        %1852 = vmatpush1.msra.mxu0 0.0
        %1853 = vmatprep.subr.mxu0 0.0
        %1854 = vmatpush1.msra.mxu0 0.0
        %1855 = vmatprep.subr.mxu0 0.0
        %1856 = vmatpush1.msra.mxu0 0.0
        %1857 = vmatprep.subr.mxu0 0.0
        %1858 = vmatpush1.msra.mxu0 0.0
        %1859 = vmatprep.subr.mxu0 0.0
        %1860 = vmatpush1.msra.mxu0 0.0
        %1861 = vmatprep.subr.mxu0 0.0
        %1862 = vmatpush1.msra.mxu0 0.0
        %1863 = vmatprep.subr.mxu0 0.0
        %1864 = vmatpush1.msra.mxu0 0.0
        %1865 = vmatprep.subr.mxu0 0.0
        %1866 = vmatpush1.msra.mxu0 0.0
        %1867 = vmatprep.subr.mxu0 0.0
        %1868 = vmatpush1.msra.mxu0 0.0
        %1869 = vmatprep.subr.mxu0 0.0
        %1870 = vmatpush1.msra.mxu0 0.0
        %1871 = vmatprep.subr.mxu0 0.0
        %1872 = vmatpush1.msra.mxu0 0.0
        %1873 = vmatprep.subr.mxu0 0.0
        %1874 = vmatpush1.msra.mxu0 0.0
        %1875 = vmatprep.subr.mxu0 0.0
        %1876 = vmatpush1.msra.mxu0 0.0
        %1877 = vmatprep.subr.mxu0 0.0
        %1878 = vmatpush1.msra.mxu0 0.0
        %1879 = vmatprep.subr.mxu0 0.0
        %1880 = vmatpush1.msra.mxu0 0.0
        %1881 = vmatprep.subr.mxu0 0.0
        %1882 = vmatpush1.msra.mxu0 0.0
        %1883 = vmatprep.subr.mxu0 0.0
        %1884 = vmatpush1.msra.mxu0 0.0
        %1885 = vmatprep.subr.mxu0 0.0
        %1886 = vmatpush1.msra.mxu0 0.0
        %1887 = vmatprep.subr.mxu0 0.0
        %1888 = vmatpush1.msra.mxu0 0.0
        %1889 = vmatprep.subr.mxu0 0.0
        %1890 = vmatpush1.msra.mxu0 0.0
        %1891 = vmatprep.mubr.f32.mxu0 0.0
        %1892 = vmatmul.mubr.f32.gmra.mrb[0].mxu0 %v1825
        %v1893 = vpop.f32.mrb[0].mxu0
        %v1894 = vadd.f32 0.0, %v1893
        %v1895 = vpop.f32.mrb[0].mxu0
        %1896 = vdwg.mxu0
        %1897 = vrot.lane.b32.xlu0 %v866, 112
        %v1898 = vpop.permute.xlu0 %1897
        %1899 = vrot.lane.b32.xlu0 %v866, 80
        %v1900 = vpop.permute.xlu0 %1899
        %v1901 = vsel %vm873, %v1898, 0
        %v1903 = vsel %vm873, %v1900, 0
        %1905 = vmatprep.subr.mxu0 0.0
        %1906 = vmatpush1.xpose.msra.mxu0 %v1903
        %1907 = vmatprep.subr.mxu0 0.0
        %1908 = vmatpush1.xpose.msra.mxu0 0.0
        %1909 = vmatprep.subr.mxu0 0.0
        %1910 = vmatpush1.xpose.msra.mxu0 0.0
        %1911 = vmatprep.subr.mxu0 0.0
        %1912 = vmatpush1.xpose.msra.mxu0 0.0
        %1913 = vmatprep.subr.mxu0 0.0
        %1914 = vmatpush1.xpose.msra.mxu0 0.0
        %1915 = vmatprep.subr.mxu0 0.0
        %1916 = vmatpush1.xpose.msra.mxu0 0.0
        %1917 = vmatprep.subr.mxu0 0.0
        %1918 = vmatpush1.xpose.msra.mxu0 0.0
        %1919 = vmatprep.subr.mxu0 0.0
        %1920 = vmatpush1.xpose.msra.mxu0 0.0
        %1921 = vmatprep.subr.mxu0 0.0
        %1922 = vmatpush1.xpose.msra.mxu0 0.0
        %1923 = vmatprep.subr.mxu0 0.0
        %1924 = vmatpush1.xpose.msra.mxu0 0.0
        %1925 = vmatprep.subr.mxu0 0.0
        %1926 = vmatpush1.xpose.msra.mxu0 0.0
        %1927 = vmatprep.subr.mxu0 0.0
        %1928 = vmatpush1.xpose.msra.mxu0 0.0
        %1929 = vmatprep.subr.mxu0 0.0
        %1930 = vmatpush1.xpose.msra.mxu0 0.0
        %1931 = vmatprep.subr.mxu0 0.0
        %1932 = vmatpush1.xpose.msra.mxu0 0.0
        %1933 = vmatprep.subr.mxu0 0.0
        %1934 = vmatpush1.xpose.msra.mxu0 0.0
        %1935 = vmatprep.subr.mxu0 0.0
        %1936 = vmatpush1.xpose.msra.mxu0 0.0
        %1937 = vmatprep.subr.mxu0 0.0
        %1938 = vmatpush1.xpose.msra.mxu0 0.0
        %1939 = vmatprep.subr.mxu0 0.0
        %1940 = vmatpush1.xpose.msra.mxu0 0.0
        %1941 = vmatprep.subr.mxu0 0.0
        %1942 = vmatpush1.xpose.msra.mxu0 0.0
        %1943 = vmatprep.subr.mxu0 0.0
        %1944 = vmatpush1.xpose.msra.mxu0 0.0
        %1945 = vmatprep.subr.mxu0 0.0
        %1946 = vmatpush1.xpose.msra.mxu0 0.0
        %1947 = vmatprep.subr.mxu0 0.0
        %1948 = vmatpush1.xpose.msra.mxu0 0.0
        %1949 = vmatprep.subr.mxu0 0.0
        %1950 = vmatpush1.xpose.msra.mxu0 0.0
        %1951 = vmatprep.subr.mxu0 0.0
        %1952 = vmatpush1.xpose.msra.mxu0 0.0
        %1953 = vmatprep.subr.mxu0 0.0
        %1954 = vmatpush1.xpose.msra.mxu0 0.0
        %1955 = vmatprep.subr.mxu0 0.0
        %1956 = vmatpush1.xpose.msra.mxu0 0.0
        %1957 = vmatprep.subr.mxu0 0.0
        %1958 = vmatpush1.xpose.msra.mxu0 0.0
        %1959 = vmatprep.subr.mxu0 0.0
        %1960 = vmatpush1.xpose.msra.mxu0 0.0
        %1961 = vmatprep.subr.mxu0 0.0
        %1962 = vmatpush1.xpose.msra.mxu0 0.0
        %1963 = vmatprep.subr.mxu0 0.0
        %1964 = vmatpush1.xpose.msra.mxu0 0.0
        %1965 = vmatprep.subr.mxu0 0.0
        %1966 = vmatpush1.xpose.msra.mxu0 0.0
        %1967 = vmatprep.subr.mxu0 0.0
        %1968 = vmatpush1.xpose.msra.mxu0 0.0
        %1969 = vmatprep.mubr.f32.mxu0 0.0
        %1970 = vmatmul.mubr.f32.gmra.mrb[0].mxu0 %v1901
        %v1971 = vpop.f32.mrb[0].mxu0
        %v1972 = vadd.f32 0.0, %v1971
        %v1973 = vpop.f32.mrb[0].mxu0
        %1974 = vdwg.mxu0
        %v1975 = vmul.f32 %v1972, 0.35355338
        %v1976 = vadd.f32 %v1975, %v1641
        %v1977 = vsel %vm873, %v1976, -inf
        %1978 = vmax.xlane.f32.xlu0 %v1977
        %v1979 = vpop.xlane.xlu0 %1978
        %v1980 = vsub.f32 %v1976, %v1979
        %v1981 = vmul.f32 %v1980, 1.442695
        %v1982 = vpow.pop %v1981
        %v1983 = vsel %vm873, %v1982, 0.0
        %1984 = vadd.xlane.f32.xlu0 %v1983
        %v1985 = vpop.xlane.xlu0 %1984
        %v1986 = vrcp.pop %v1985
        %v1987 = vmul.f32 %v1982, %v1986
        %1988 = vrot.lane.b32.xlu0 %v866, 48
        %v1989 = vpop.permute.xlu0 %1988
        %v1992 = vsel %vm873, %v1987, 0
        %1994 = vmatprep.subr.mxu0 0.0
        %1995 = vmatpush1.msra.mxu0 %v1989
        %1996 = vmatprep.subr.mxu0 0.0
        %1997 = vmatpush1.msra.mxu0 0.0
        %1998 = vmatprep.subr.mxu0 0.0
        %1999 = vmatpush1.msra.mxu0 0.0
        %2000 = vmatprep.subr.mxu0 0.0
        %2001 = vmatpush1.msra.mxu0 0.0
        %2002 = vmatprep.subr.mxu0 0.0
        %2003 = vmatpush1.msra.mxu0 0.0
        %2004 = vmatprep.subr.mxu0 0.0
        %2005 = vmatpush1.msra.mxu0 0.0
        %2006 = vmatprep.subr.mxu0 0.0
        %2007 = vmatpush1.msra.mxu0 0.0
        %2008 = vmatprep.subr.mxu0 0.0
        %2009 = vmatpush1.msra.mxu0 0.0
        %2010 = vmatprep.subr.mxu0 0.0
        %2011 = vmatpush1.msra.mxu0 0.0
        %2012 = vmatprep.subr.mxu0 0.0
        %2013 = vmatpush1.msra.mxu0 0.0
        %2014 = vmatprep.subr.mxu0 0.0
        %2015 = vmatpush1.msra.mxu0 0.0
        %2016 = vmatprep.subr.mxu0 0.0
        %2017 = vmatpush1.msra.mxu0 0.0
        %2018 = vmatprep.subr.mxu0 0.0
        %2019 = vmatpush1.msra.mxu0 0.0
        %2020 = vmatprep.subr.mxu0 0.0
        %2021 = vmatpush1.msra.mxu0 0.0
        %2022 = vmatprep.subr.mxu0 0.0
        %2023 = vmatpush1.msra.mxu0 0.0
        %2024 = vmatprep.subr.mxu0 0.0
        %2025 = vmatpush1.msra.mxu0 0.0
        %2026 = vmatprep.subr.mxu0 0.0
        %2027 = vmatpush1.msra.mxu0 0.0
        %2028 = vmatprep.subr.mxu0 0.0
        %2029 = vmatpush1.msra.mxu0 0.0
        %2030 = vmatprep.subr.mxu0 0.0
        %2031 = vmatpush1.msra.mxu0 0.0
        %2032 = vmatprep.subr.mxu0 0.0
        %2033 = vmatpush1.msra.mxu0 0.0
        %2034 = vmatprep.subr.mxu0 0.0
        %2035 = vmatpush1.msra.mxu0 0.0
        %2036 = vmatprep.subr.mxu0 0.0
        %2037 = vmatpush1.msra.mxu0 0.0
        %2038 = vmatprep.subr.mxu0 0.0
        %2039 = vmatpush1.msra.mxu0 0.0
        %2040 = vmatprep.subr.mxu0 0.0
        %2041 = vmatpush1.msra.mxu0 0.0
        %2042 = vmatprep.subr.mxu0 0.0
        %2043 = vmatpush1.msra.mxu0 0.0
        %2044 = vmatprep.subr.mxu0 0.0
        %2045 = vmatpush1.msra.mxu0 0.0
        %2046 = vmatprep.subr.mxu0 0.0
        %2047 = vmatpush1.msra.mxu0 0.0
        %2048 = vmatprep.subr.mxu0 0.0
        %2049 = vmatpush1.msra.mxu0 0.0
        %2050 = vmatprep.subr.mxu0 0.0
        %2051 = vmatpush1.msra.mxu0 0.0
        %2052 = vmatprep.subr.mxu0 0.0
        %2053 = vmatpush1.msra.mxu0 0.0
        %2054 = vmatprep.subr.mxu0 0.0
        %2055 = vmatpush1.msra.mxu0 0.0
        %2056 = vmatprep.subr.mxu0 0.0
        %2057 = vmatpush1.msra.mxu0 0.0
        %2058 = vmatprep.mubr.f32.mxu0 0.0
        %2059 = vmatmul.mubr.f32.gmra.mrb[0].mxu0 %v1992
        %v2060 = vpop.f32.mrb[0].mxu0
        %v2061 = vadd.f32 0.0, %v2060
        %v2062 = vpop.f32.mrb[0].mxu0
        %2063 = vdwg.mxu0
        %2064 = vrot.lane.b32.xlu0 %v866, 104
        %v2065 = vpop.permute.xlu0 %2064
        %2066 = vrot.lane.b32.xlu0 %v866, 72
        %v2067 = vpop.permute.xlu0 %2066
        %v2068 = vsel %vm873, %v2065, 0
        %v2070 = vsel %vm873, %v2067, 0
        %2072 = vmatprep.subr.mxu0 0.0
        %2073 = vmatpush1.xpose.msra.mxu0 %v2070
        %2074 = vmatprep.subr.mxu0 0.0
        %2075 = vmatpush1.xpose.msra.mxu0 0.0
        %2076 = vmatprep.subr.mxu0 0.0
        %2077 = vmatpush1.xpose.msra.mxu0 0.0
        %2078 = vmatprep.subr.mxu0 0.0
        %2079 = vmatpush1.xpose.msra.mxu0 0.0
        %2080 = vmatprep.subr.mxu0 0.0
        %2081 = vmatpush1.xpose.msra.mxu0 0.0
        %2082 = vmatprep.subr.mxu0 0.0
        %2083 = vmatpush1.xpose.msra.mxu0 0.0
        %2084 = vmatprep.subr.mxu0 0.0
        %2085 = vmatpush1.xpose.msra.mxu0 0.0
        %2086 = vmatprep.subr.mxu0 0.0
        %2087 = vmatpush1.xpose.msra.mxu0 0.0
        %2088 = vmatprep.subr.mxu0 0.0
        %2089 = vmatpush1.xpose.msra.mxu0 0.0
        %2090 = vmatprep.subr.mxu0 0.0
        %2091 = vmatpush1.xpose.msra.mxu0 0.0
        %2092 = vmatprep.subr.mxu0 0.0
        %2093 = vmatpush1.xpose.msra.mxu0 0.0
        %2094 = vmatprep.subr.mxu0 0.0
        %2095 = vmatpush1.xpose.msra.mxu0 0.0
        %2096 = vmatprep.subr.mxu0 0.0
        %2097 = vmatpush1.xpose.msra.mxu0 0.0
        %2098 = vmatprep.subr.mxu0 0.0
        %2099 = vmatpush1.xpose.msra.mxu0 0.0
        %2100 = vmatprep.subr.mxu0 0.0
        %2101 = vmatpush1.xpose.msra.mxu0 0.0
        %2102 = vmatprep.subr.mxu0 0.0
        %2103 = vmatpush1.xpose.msra.mxu0 0.0
        %2104 = vmatprep.subr.mxu0 0.0
        %2105 = vmatpush1.xpose.msra.mxu0 0.0
        %2106 = vmatprep.subr.mxu0 0.0
        %2107 = vmatpush1.xpose.msra.mxu0 0.0
        %2108 = vmatprep.subr.mxu0 0.0
        %2109 = vmatpush1.xpose.msra.mxu0 0.0
        %2110 = vmatprep.subr.mxu0 0.0
        %2111 = vmatpush1.xpose.msra.mxu0 0.0
        %2112 = vmatprep.subr.mxu0 0.0
        %2113 = vmatpush1.xpose.msra.mxu0 0.0
        %2114 = vmatprep.subr.mxu0 0.0
        %2115 = vmatpush1.xpose.msra.mxu0 0.0
        %2116 = vmatprep.subr.mxu0 0.0
        %2117 = vmatpush1.xpose.msra.mxu0 0.0
        %2118 = vmatprep.subr.mxu0 0.0
        %2119 = vmatpush1.xpose.msra.mxu0 0.0
        %2120 = vmatprep.subr.mxu0 0.0
        %2121 = vmatpush1.xpose.msra.mxu0 0.0
        %2122 = vmatprep.subr.mxu0 0.0
        %2123 = vmatpush1.xpose.msra.mxu0 0.0
        %2124 = vmatprep.subr.mxu0 0.0
        %2125 = vmatpush1.xpose.msra.mxu0 0.0
        %2126 = vmatprep.subr.mxu0 0.0
        %2127 = vmatpush1.xpose.msra.mxu0 0.0
        %2128 = vmatprep.subr.mxu0 0.0
        %2129 = vmatpush1.xpose.msra.mxu0 0.0
        %2130 = vmatprep.subr.mxu0 0.0
        %2131 = vmatpush1.xpose.msra.mxu0 0.0
        %2132 = vmatprep.subr.mxu0 0.0
        %2133 = vmatpush1.xpose.msra.mxu0 0.0
        %2134 = vmatprep.subr.mxu0 0.0
        %2135 = vmatpush1.xpose.msra.mxu0 0.0
        %2136 = vmatprep.mubr.f32.mxu0 0.0
        %2137 = vmatmul.mubr.f32.gmra.mrb[0].mxu0 %v2068
        %v2138 = vpop.f32.mrb[0].mxu0
        %v2139 = vadd.f32 0.0, %v2138
        %v2140 = vpop.f32.mrb[0].mxu0
        %2141 = vdwg.mxu0
        %v2142 = vmul.f32 %v2139, 0.35355338
        %v2143 = vadd.f32 %v2142, %v1641
        %v2144 = vsel %vm873, %v2143, -inf
        %2145 = vmax.xlane.f32.xlu0 %v2144
        %v2146 = vpop.xlane.xlu0 %2145
        %v2147 = vsub.f32 %v2143, %v2146
        %v2148 = vmul.f32 %v2147, 1.442695
        %v2149 = vpow.pop %v2148
        %v2150 = vsel %vm873, %v2149, 0.0
        %2151 = vadd.xlane.f32.xlu0 %v2150
        %v2152 = vpop.xlane.xlu0 %2151
        %v2153 = vrcp.pop %v2152
        %v2154 = vmul.f32 %v2149, %v2153
        %2155 = vrot.lane.b32.xlu0 %v866, 40
        %v2156 = vpop.permute.xlu0 %2155
        %v2159 = vsel %vm873, %v2154, 0
        %2161 = vmatprep.subr.mxu0 0.0
        %2162 = vmatpush1.msra.mxu0 %v2156
        %2163 = vmatprep.subr.mxu0 0.0
        %2164 = vmatpush1.msra.mxu0 0.0
        %2165 = vmatprep.subr.mxu0 0.0
        %2166 = vmatpush1.msra.mxu0 0.0
        %2167 = vmatprep.subr.mxu0 0.0
        %2168 = vmatpush1.msra.mxu0 0.0
        %2169 = vmatprep.subr.mxu0 0.0
        %2170 = vmatpush1.msra.mxu0 0.0
        %2171 = vmatprep.subr.mxu0 0.0
        %2172 = vmatpush1.msra.mxu0 0.0
        %2173 = vmatprep.subr.mxu0 0.0
        %2174 = vmatpush1.msra.mxu0 0.0
        %2175 = vmatprep.subr.mxu0 0.0
        %2176 = vmatpush1.msra.mxu0 0.0
        %2177 = vmatprep.subr.mxu0 0.0
        %2178 = vmatpush1.msra.mxu0 0.0
        %2179 = vmatprep.subr.mxu0 0.0
        %2180 = vmatpush1.msra.mxu0 0.0
        %2181 = vmatprep.subr.mxu0 0.0
        %2182 = vmatpush1.msra.mxu0 0.0
        %2183 = vmatprep.subr.mxu0 0.0
        %2184 = vmatpush1.msra.mxu0 0.0
        %2185 = vmatprep.subr.mxu0 0.0
        %2186 = vmatpush1.msra.mxu0 0.0
        %2187 = vmatprep.subr.mxu0 0.0
        %2188 = vmatpush1.msra.mxu0 0.0
        %2189 = vmatprep.subr.mxu0 0.0
        %2190 = vmatpush1.msra.mxu0 0.0
        %2191 = vmatprep.subr.mxu0 0.0
        %2192 = vmatpush1.msra.mxu0 0.0
        %2193 = vmatprep.subr.mxu0 0.0
        %2194 = vmatpush1.msra.mxu0 0.0
        %2195 = vmatprep.subr.mxu0 0.0
        %2196 = vmatpush1.msra.mxu0 0.0
        %2197 = vmatprep.subr.mxu0 0.0
        %2198 = vmatpush1.msra.mxu0 0.0
        %2199 = vmatprep.subr.mxu0 0.0
        %2200 = vmatpush1.msra.mxu0 0.0
        %2201 = vmatprep.subr.mxu0 0.0
        %2202 = vmatpush1.msra.mxu0 0.0
        %2203 = vmatprep.subr.mxu0 0.0
        %2204 = vmatpush1.msra.mxu0 0.0
        %2205 = vmatprep.subr.mxu0 0.0
        %2206 = vmatpush1.msra.mxu0 0.0
        %2207 = vmatprep.subr.mxu0 0.0
        %2208 = vmatpush1.msra.mxu0 0.0
        %2209 = vmatprep.subr.mxu0 0.0
        %2210 = vmatpush1.msra.mxu0 0.0
        %2211 = vmatprep.subr.mxu0 0.0
        %2212 = vmatpush1.msra.mxu0 0.0
        %2213 = vmatprep.subr.mxu0 0.0
        %2214 = vmatpush1.msra.mxu0 0.0
        %2215 = vmatprep.subr.mxu0 0.0
        %2216 = vmatpush1.msra.mxu0 0.0
        %2217 = vmatprep.subr.mxu0 0.0
        %2218 = vmatpush1.msra.mxu0 0.0
        %2219 = vmatprep.subr.mxu0 0.0
        %2220 = vmatpush1.msra.mxu0 0.0
        %2221 = vmatprep.subr.mxu0 0.0
        %2222 = vmatpush1.msra.mxu0 0.0
        %2223 = vmatprep.subr.mxu0 0.0
        %2224 = vmatpush1.msra.mxu0 0.0
        %2225 = vmatprep.mubr.f32.mxu0 0.0
        %2226 = vmatmul.mubr.f32.gmra.mrb[0].mxu0 %v2159
        %v2227 = vpop.f32.mrb[0].mxu0
        %v2228 = vadd.f32 0.0, %v2227
        %v2229 = vpop.f32.mrb[0].mxu0
        %2230 = vdwg.mxu0
        %2232 = vrot.lane.b32.xlu0 %v1894, 8
        %v2233 = vpop.permute.xlu0 %2232
        %2236 = vrot.lane.b32.xlu0 %v2061, 16
        %v2237 = vpop.permute.xlu0 %2236
        %2240 = vrot.lane.b32.xlu0 %v2228, 24
        %v2241 = vpop.permute.xlu0 %2240
        %v2243 = vsel %vm873, %v1727, %v2233
        %v2244 = vsel %vm1555, %v2243, %v2237
        %v2245 = vsel %vm1557, %v2244, %v2241
        %v2246 = vld [vmem:[%s688] sm:$0xff]
        %v2247 = vld [vmem:[%s688 + $0x8] sm:$0xff]
        %v2248 = vld [vmem:[%s688 + $0x10] sm:$0xff]
        %v2249 = vld [vmem:[%s688 + $0x18] sm:$0xff]
        %v2250 = vld [vmem:[%s691] sm:$0x1]
        %v2252 = vlaneseq
        %v2253 = vshrl.u32 %v2252, 7
        %v2254 = vsub.s32 0, %v2253
        %v2255 = vrot.slane %v2250, %v2254
        %v2258 = vsel %vm787, %v1558, 0
        %v2261 = vsel %vm787, %v2245, 0
        %2263 = vmatprep.subr.mxu0 0.0
        %2264 = vmatpush1.msra.mxu0 %v2246
        %2265 = vmatprep.subr.mxu0 0.0
        %2266 = vmatpush1.msra.mxu0 %v2247
        %2267 = vmatprep.subr.mxu0 0.0
        %2268 = vmatpush1.msra.mxu0 %v2248
        %2269 = vmatprep.subr.mxu0 0.0
        %2270 = vmatpush1.msra.mxu0 %v2249
        %2271 = vmatprep.subr.mxu0 0.0
        %2272 = vmatpush1.msra.mxu0 0.0
        %2273 = vmatprep.subr.mxu0 0.0
        %2274 = vmatpush1.msra.mxu0 0.0
        %2275 = vmatprep.subr.mxu0 0.0
        %2276 = vmatpush1.msra.mxu0 0.0
        %2277 = vmatprep.subr.mxu0 0.0
        %2278 = vmatpush1.msra.mxu0 0.0
        %2279 = vmatprep.subr.mxu0 0.0
        %2280 = vmatpush1.msra.mxu0 0.0
        %2281 = vmatprep.subr.mxu0 0.0
        %2282 = vmatpush1.msra.mxu0 0.0
        %2283 = vmatprep.subr.mxu0 0.0
        %2284 = vmatpush1.msra.mxu0 0.0
        %2285 = vmatprep.subr.mxu0 0.0
        %2286 = vmatpush1.msra.mxu0 0.0
        %2287 = vmatprep.subr.mxu0 0.0
        %2288 = vmatpush1.msra.mxu0 0.0
        %2289 = vmatprep.subr.mxu0 0.0
        %2290 = vmatpush1.msra.mxu0 0.0
        %2291 = vmatprep.subr.mxu0 0.0
        %2292 = vmatpush1.msra.mxu0 0.0
        %2293 = vmatprep.subr.mxu0 0.0
        %2294 = vmatpush1.msra.mxu0 0.0
        %2295 = vmatprep.subr.mxu0 0.0
        %2296 = vmatpush1.msra.mxu0 0.0
        %2297 = vmatprep.subr.mxu0 0.0
        %2298 = vmatpush1.msra.mxu0 0.0
        %2299 = vmatprep.subr.mxu0 0.0
        %2300 = vmatpush1.msra.mxu0 0.0
        %2301 = vmatprep.subr.mxu0 0.0
        %2302 = vmatpush1.msra.mxu0 0.0
        %2303 = vmatprep.subr.mxu0 0.0
        %2304 = vmatpush1.msra.mxu0 0.0
        %2305 = vmatprep.subr.mxu0 0.0
        %2306 = vmatpush1.msra.mxu0 0.0
        %2307 = vmatprep.subr.mxu0 0.0
        %2308 = vmatpush1.msra.mxu0 0.0
        %2309 = vmatprep.subr.mxu0 0.0
        %2310 = vmatpush1.msra.mxu0 0.0
        %2311 = vmatprep.subr.mxu0 0.0
        %2312 = vmatpush1.msra.mxu0 0.0
        %2313 = vmatprep.subr.mxu0 0.0
        %2314 = vmatpush1.msra.mxu0 0.0
        %2315 = vmatprep.subr.mxu0 0.0
        %2316 = vmatpush1.msra.mxu0 0.0
        %2317 = vmatprep.subr.mxu0 0.0
        %2318 = vmatpush1.msra.mxu0 0.0
        %2319 = vmatprep.subr.mxu0 0.0
        %2320 = vmatpush1.msra.mxu0 0.0
        %2321 = vmatprep.subr.mxu0 0.0
        %2322 = vmatpush1.msra.mxu0 0.0
        %2323 = vmatprep.subr.mxu0 0.0
        %2324 = vmatpush1.msra.mxu0 0.0
        %2325 = vmatprep.subr.mxu0 0.0
        %2326 = vmatpush1.msra.mxu0 0.0
        %2327 = vmatprep.mubr.f32.mxu0 0.0
        %2328 = vmatmul.mubr.f32.gmra.mrb[0].mxu0 %v2258
        %v2329 = vpop.f32.mrb[0].mxu0
        %v2330 = vadd.f32 %v2255, %v2329
        %v2331 = vpop.f32.mrb[0].mxu0
        %2332 = vmatprep.mubr.f32.mxu0 0.0
        %2333 = vmatmul.mubr.f32.gmra.mrb[0].mxu0 %v2261
        %v2334 = vpop.f32.mrb[0].mxu0
        %v2335 = vadd.f32 %v2255, %v2334
        %v2336 = vpop.f32.mrb[0].mxu0
        %2337 = vdwg.mxu0
        %v2338 = vadd.f32 %v774, %v2330
        %v2339 = vadd.f32 %v775, %v2335
        %v2340 = vld [vmem:[%s694] sm:$0x1]
        %v2341 = vld [vmem:[%s697] sm:$0x1]
        %v2342 = vsel %vm787, %v2338, 0.0
        %2343 = vadd.xlane.f32.xlu0 %v2342
        %v2344 = vpop.xlane.xlu0 %2343
        %v2345 = vsel %vm787, %v2339, 0.0
        %2346 = vadd.xlane.f32.xlu0 %v2345
        %v2347 = vpop.xlane.xlu0 %2346
        %v2348 = vrcp.pop 32.0
        %v2349 = vmul.f32 %v2344, %v2348
        %v2350 = vmul.f32 %v2347, %v2348
        %v2351 = vsub.f32 %v2338, %v2349
        %v2352 = vsub.f32 %v2339, %v2350
        %v2353 = vmul.f32 %v2351, %v2351
        %v2354 = vmul.f32 %v2352, %v2352
        %v2355 = vsel %vm787, %v2353, 0.0
        %2356 = vadd.xlane.f32.xlu0 %v2355
        %v2357 = vpop.xlane.xlu0 %2356
        %v2358 = vsel %vm787, %v2354, 0.0
        %2359 = vadd.xlane.f32.xlu0 %v2358
        %v2360 = vpop.xlane.xlu0 %2359
        %v2361 = vmul.f32 %v2357, %v2348
        %v2362 = vmul.f32 %v2360, %v2348
        %v2363 = vadd.f32 %v2361, 1e-12
        %v2364 = vadd.f32 %v2362, 1e-12
        %v2365 = vrsqrt.pop %v2363
        %v2366 = vrsqrt.pop %v2364
        %v2367 = vmul.f32 %v2351, %v2365
        %v2368 = vmul.f32 %v2352, %v2366
        %v2370 = vlaneseq
        %v2371 = vshrl.u32 %v2370, 7
        %v2372 = vsub.s32 0, %v2371
        %v2373 = vrot.slane %v2340, %v2372
        %v2375 = vmul.f32 %v2367, %v2373
        %v2376 = vmul.f32 %v2368, %v2373
        %v2378 = vlaneseq
        %v2379 = vshrl.u32 %v2378, 7
        %v2380 = vsub.s32 0, %v2379
        %v2381 = vrot.slane %v2341, %v2380
        %v2383 = vadd.f32 %v2375, %v2381
        %v2384 = vadd.f32 %v2376, %v2381
        %v2385 = vld [vmem:[%s702] sm:$0xff]
        %v2386 = vld [vmem:[%s702 + $0x8] sm:$0xff]
        %v2387 = vld [vmem:[%s702 + $0x10] sm:$0xff]
        %v2388 = vld [vmem:[%s702 + $0x18] sm:$0xff]
        %v2389 = vld [vmem:[%s705] sm:$0x1]
        %v2391 = vlaneseq
        %v2392 = vshrl.u32 %v2391, 7
        %v2393 = vsub.s32 0, %v2392
        %v2394 = vrot.slane %v2389, %v2393
        %v2397 = vsel %vm787, %v2383, 0
        %v2400 = vsel %vm787, %v2384, 0
        %2402 = vmatprep.subr.mxu0 0.0
        %2403 = vmatpush1.msra.mxu0 %v2385
        %2404 = vmatprep.subr.mxu0 0.0
        %2405 = vmatpush1.msra.mxu0 %v2386
        %2406 = vmatprep.subr.mxu0 0.0
        %2407 = vmatpush1.msra.mxu0 %v2387
        %2408 = vmatprep.subr.mxu0 0.0
        %2409 = vmatpush1.msra.mxu0 %v2388
        %2410 = vmatprep.subr.mxu0 0.0
        %2411 = vmatpush1.msra.mxu0 0.0
        %2412 = vmatprep.subr.mxu0 0.0
        %2413 = vmatpush1.msra.mxu0 0.0
        %2414 = vmatprep.subr.mxu0 0.0
        %2415 = vmatpush1.msra.mxu0 0.0
        %2416 = vmatprep.subr.mxu0 0.0
        %2417 = vmatpush1.msra.mxu0 0.0
        %2418 = vmatprep.subr.mxu0 0.0
        %2419 = vmatpush1.msra.mxu0 0.0
        %2420 = vmatprep.subr.mxu0 0.0
        %2421 = vmatpush1.msra.mxu0 0.0
        %2422 = vmatprep.subr.mxu0 0.0
        %2423 = vmatpush1.msra.mxu0 0.0
        %2424 = vmatprep.subr.mxu0 0.0
        %2425 = vmatpush1.msra.mxu0 0.0
        %2426 = vmatprep.subr.mxu0 0.0
        %2427 = vmatpush1.msra.mxu0 0.0
        %2428 = vmatprep.subr.mxu0 0.0
        %2429 = vmatpush1.msra.mxu0 0.0
        %2430 = vmatprep.subr.mxu0 0.0
        %2431 = vmatpush1.msra.mxu0 0.0
        %2432 = vmatprep.subr.mxu0 0.0
        %2433 = vmatpush1.msra.mxu0 0.0
        %2434 = vmatprep.subr.mxu0 0.0
        %2435 = vmatpush1.msra.mxu0 0.0
        %2436 = vmatprep.subr.mxu0 0.0
        %2437 = vmatpush1.msra.mxu0 0.0
        %2438 = vmatprep.subr.mxu0 0.0
        %2439 = vmatpush1.msra.mxu0 0.0
        %2440 = vmatprep.subr.mxu0 0.0
        %2441 = vmatpush1.msra.mxu0 0.0
        %2442 = vmatprep.subr.mxu0 0.0
        %2443 = vmatpush1.msra.mxu0 0.0
        %2444 = vmatprep.subr.mxu0 0.0
        %2445 = vmatpush1.msra.mxu0 0.0
        %2446 = vmatprep.subr.mxu0 0.0
        %2447 = vmatpush1.msra.mxu0 0.0
        %2448 = vmatprep.subr.mxu0 0.0
        %2449 = vmatpush1.msra.mxu0 0.0
        %2450 = vmatprep.subr.mxu0 0.0
        %2451 = vmatpush1.msra.mxu0 0.0
        %2452 = vmatprep.subr.mxu0 0.0
        %2453 = vmatpush1.msra.mxu0 0.0
        %2454 = vmatprep.subr.mxu0 0.0
        %2455 = vmatpush1.msra.mxu0 0.0
        %2456 = vmatprep.subr.mxu0 0.0
        %2457 = vmatpush1.msra.mxu0 0.0
        %2458 = vmatprep.subr.mxu0 0.0
        %2459 = vmatpush1.msra.mxu0 0.0
        %2460 = vmatprep.subr.mxu0 0.0
        %2461 = vmatpush1.msra.mxu0 0.0
        %2462 = vmatprep.subr.mxu0 0.0
        %2463 = vmatpush1.msra.mxu0 0.0
        %2464 = vmatprep.subr.mxu0 0.0
        %2465 = vmatpush1.msra.mxu0 0.0
        %2466 = vmatprep.mubr.f32.mxu0 0.0
        %2467 = vmatmul.mubr.f32.gmra.mrb[0].mxu0 %v2397
        %v2468 = vpop.f32.mrb[0].mxu0
        %v2469 = vadd.f32 %v2394, %v2468
        %v2470 = vpop.f32.mrb[0].mxu0
        %2471 = vmatprep.mubr.f32.mxu0 0.0
        %2472 = vmatmul.mubr.f32.gmra.mrb[0].mxu0 %v2400
        %v2473 = vpop.f32.mrb[0].mxu0
        %v2474 = vadd.f32 %v2394, %v2473
        %v2475 = vpop.f32.mrb[0].mxu0
        %2476 = vdwg.mxu0
        %v2477 = vmul.f32 %v2469, %v2469
        %v2478 = vmul.f32 %v2474, %v2474
        %v2479 = vmul.f32 %v2469, %v2477
        %v2480 = vmul.f32 %v2474, %v2478
        %v2481 = vmul.f32 %v2479, 0.044715
        %v2482 = vmul.f32 %v2480, 0.044715
        %v2483 = vadd.f32 %v2469, %v2481
        %v2484 = vadd.f32 %v2474, %v2482
        %v2485 = vmul.f32 %v2483, 0.7978846
        %v2486 = vmul.f32 %v2484, 0.7978846
        %v2487 = vtanh.pop %v2485
        %v2488 = vtanh.pop %v2486
        %v2489 = vadd.f32 %v2487, 1.0
        %v2490 = vadd.f32 %v2488, 1.0
        %v2491 = vmul.f32 %v2489, 0.5
        %v2492 = vmul.f32 %v2490, 0.5
        %v2493 = vmul.f32 %v2469, %v2491
        %v2494 = vmul.f32 %v2474, %v2492
        %v2495 = vld [vmem:[%s710] sm:$0xff]
        %v2496 = vld [vmem:[%s710 + $0x8] sm:$0xff]
        %v2497 = vld [vmem:[%s710 + $0x10] sm:$0xff]
        %v2498 = vld [vmem:[%s710 + $0x18] sm:$0xff]
        %v2499 = vld [vmem:[%s710 + $0x20] sm:$0xff]
        %v2500 = vld [vmem:[%s710 + $0x28] sm:$0xff]
        %v2501 = vld [vmem:[%s710 + $0x30] sm:$0xff]
        %v2502 = vld [vmem:[%s710 + $0x38] sm:$0xff]
        %v2503 = vld [vmem:[%s713] sm:$0x1]
        %v2505 = vlaneseq
        %v2506 = vshrl.u32 %v2505, 7
        %v2507 = vsub.s32 0, %v2506
        %v2508 = vrot.slane %v2503, %v2507
        %vm2510 = vcmask 523264
        %v2512 = vsel %vm2510, %v2493, 0
        %v2515 = vsel %vm2510, %v2494, 0
        %2517 = vmatprep.subr.mxu0 0.0
        %2518 = vmatpush1.msra.mxu0 %v2495
        %2519 = vmatprep.subr.mxu0 0.0
        %2520 = vmatpush1.msra.mxu0 %v2496
        %2521 = vmatprep.subr.mxu0 0.0
        %2522 = vmatpush1.msra.mxu0 %v2497
        %2523 = vmatprep.subr.mxu0 0.0
        %2524 = vmatpush1.msra.mxu0 %v2498
        %2525 = vmatprep.subr.mxu0 0.0
        %2526 = vmatpush1.msra.mxu0 %v2499
        %2527 = vmatprep.subr.mxu0 0.0
        %2528 = vmatpush1.msra.mxu0 %v2500
        %2529 = vmatprep.subr.mxu0 0.0
        %2530 = vmatpush1.msra.mxu0 %v2501
        %2531 = vmatprep.subr.mxu0 0.0
        %2532 = vmatpush1.msra.mxu0 %v2502
        %2533 = vmatprep.subr.mxu0 0.0
        %2534 = vmatpush1.msra.mxu0 0.0
        %2535 = vmatprep.subr.mxu0 0.0
        %2536 = vmatpush1.msra.mxu0 0.0
        %2537 = vmatprep.subr.mxu0 0.0
        %2538 = vmatpush1.msra.mxu0 0.0
        %2539 = vmatprep.subr.mxu0 0.0
        %2540 = vmatpush1.msra.mxu0 0.0
        %2541 = vmatprep.subr.mxu0 0.0
        %2542 = vmatpush1.msra.mxu0 0.0
        %2543 = vmatprep.subr.mxu0 0.0
        %2544 = vmatpush1.msra.mxu0 0.0
        %2545 = vmatprep.subr.mxu0 0.0
        %2546 = vmatpush1.msra.mxu0 0.0
        %2547 = vmatprep.subr.mxu0 0.0
        %2548 = vmatpush1.msra.mxu0 0.0
        %2549 = vmatprep.subr.mxu0 0.0
        %2550 = vmatpush1.msra.mxu0 0.0
        %2551 = vmatprep.subr.mxu0 0.0
        %2552 = vmatpush1.msra.mxu0 0.0
        %2553 = vmatprep.subr.mxu0 0.0
        %2554 = vmatpush1.msra.mxu0 0.0
        %2555 = vmatprep.subr.mxu0 0.0
        %2556 = vmatpush1.msra.mxu0 0.0
        %2557 = vmatprep.subr.mxu0 0.0
        %2558 = vmatpush1.msra.mxu0 0.0
        %2559 = vmatprep.subr.mxu0 0.0
        %2560 = vmatpush1.msra.mxu0 0.0
        %2561 = vmatprep.subr.mxu0 0.0
        %2562 = vmatpush1.msra.mxu0 0.0
        %2563 = vmatprep.subr.mxu0 0.0
        %2564 = vmatpush1.msra.mxu0 0.0
        %2565 = vmatprep.subr.mxu0 0.0
        %2566 = vmatpush1.msra.mxu0 0.0
        %2567 = vmatprep.subr.mxu0 0.0
        %2568 = vmatpush1.msra.mxu0 0.0
        %2569 = vmatprep.subr.mxu0 0.0
        %2570 = vmatpush1.msra.mxu0 0.0
        %2571 = vmatprep.subr.mxu0 0.0
        %2572 = vmatpush1.msra.mxu0 0.0
        %2573 = vmatprep.subr.mxu0 0.0
        %2574 = vmatpush1.msra.mxu0 0.0
        %2575 = vmatprep.subr.mxu0 0.0
        %2576 = vmatpush1.msra.mxu0 0.0
        %2577 = vmatprep.subr.mxu0 0.0
        %2578 = vmatpush1.msra.mxu0 0.0
        %2579 = vmatprep.subr.mxu0 0.0
        %2580 = vmatpush1.msra.mxu0 0.0
        %2581 = vmatprep.mubr.f32.mxu0 0.0
        %2582 = vmatmul.mubr.f32.gmra.mrb[0].mxu0 %v2512
        %v2583 = vpop.f32.mrb[0].mxu0
        %v2584 = vadd.f32 %v2508, %v2583
        %v2585 = vpop.f32.mrb[0].mxu0
        %2586 = vmatprep.mubr.f32.mxu0 0.0
        %2587 = vmatmul.mubr.f32.gmra.mrb[0].mxu0 %v2515
        %v2588 = vpop.f32.mrb[0].mxu0
        %v2589 = vadd.f32 %v2508, %v2588
        %v2590 = vpop.f32.mrb[0].mxu0
        %2591 = vdwg.mxu0
        %v2592 = vadd.f32 %v2383, %v2584
        %v2593 = vadd.f32 %v2384, %v2589
        %v2594 = vld [vmem:[%s716] sm:$0x1]
        %v2595 = vld [vmem:[%s719] sm:$0x1]
        %v2596 = vsel %vm787, %v2592, 0.0
        %2597 = vadd.xlane.f32.xlu0 %v2596
        %v2598 = vpop.xlane.xlu0 %2597
        %v2599 = vsel %vm787, %v2593, 0.0
        %2600 = vadd.xlane.f32.xlu0 %v2599
        %v2601 = vpop.xlane.xlu0 %2600
        %v2602 = vmul.f32 %v2598, %v2348
        %v2603 = vmul.f32 %v2601, %v2348
        %v2604 = vsub.f32 %v2592, %v2602
        %v2605 = vsub.f32 %v2593, %v2603
        %v2606 = vmul.f32 %v2604, %v2604
        %v2607 = vmul.f32 %v2605, %v2605
        %v2608 = vsel %vm787, %v2606, 0.0
        %2609 = vadd.xlane.f32.xlu0 %v2608
        %v2610 = vpop.xlane.xlu0 %2609
        %v2611 = vsel %vm787, %v2607, 0.0
        %2612 = vadd.xlane.f32.xlu0 %v2611
        %v2613 = vpop.xlane.xlu0 %2612
        %v2614 = vmul.f32 %v2610, %v2348
        %v2615 = vmul.f32 %v2613, %v2348
        %v2616 = vadd.f32 %v2614, 1e-12
        %v2617 = vadd.f32 %v2615, 1e-12
        %v2618 = vrsqrt.pop %v2616
        %v2619 = vrsqrt.pop %v2617
        %v2620 = vmul.f32 %v2604, %v2618
        %v2621 = vmul.f32 %v2605, %v2619
        %v2623 = vlaneseq
        %v2624 = vshrl.u32 %v2623, 7
        %v2625 = vsub.s32 0, %v2624
        %v2626 = vrot.slane %v2594, %v2625
        %v2628 = vmul.f32 %v2620, %v2626
        %v2629 = vmul.f32 %v2621, %v2626
        %v2631 = vlaneseq
        %v2632 = vshrl.u32 %v2631, 7
        %v2633 = vsub.s32 0, %v2632
        %v2634 = vrot.slane %v2595, %v2633
        %v2636 = vadd.f32 %v2628, %v2634
        %v2637 = vadd.f32 %v2629, %v2634
        %2638 = vst.msk [vmem:[#allocation8] sm:$0xff] %vm787, %v2636
        %2639 = vst.msk [vmem:[#allocation8 + $0x8] sm:$0xff] %vm787, %v2637
        // Predicated region
        $region101: #{tpu_custom_call.1} parent=83 // pred_check
          %p2640 = pneg %p439
        $region102: #{tpu_custom_call.1} parent=83 // pred_check_branch
          %2642 = sbr.rel (%p2640) target = $region104
        $region103: #{tpu_custom_call.1} parent=83 // pred_region
          %s2644 = ssub.s32 256, 256
          %2645 = vsyncadd [#allocation4], %s2644
          %s2646 = sshll.u32 [#allocation8], 4
          %s2647 = int_to_ptr.vmem [resolvable:$true] %s2646
          %2652 = dma.vmem_to_hbm [thread:$0]  %s2647, 256, %s16, [#allocation4], 128, 128, 8
        $region104: #{tpu_custom_call.1} parent=83 // pred_fallthru
          _
        // Predicated region
        $region105: #{tpu_custom_call.1} parent=83 // pred_check
          %p2653 = pneg %p439
        $region106: #{tpu_custom_call.1} parent=83 // pred_check_branch
          %2655 = sbr.rel (%p2653) target = $region108
        $region107: #{tpu_custom_call.1} parent=83 // pred_region
          %2656 = dma.done [#allocation4], 256
        $region108: #{tpu_custom_call.1} parent=83 // pred_fallthru
          _
      $region84: #{tpu_custom_call.1} parent=5 // pred_fallthru
        _
      %p2657 = scmp.le.s32.totalorder 2, %s25
      // Predicated region
      $region109: #{tpu_custom_call.1} parent=5 // pred_check
        %p2658 = pneg %p2657
      $region110: #{tpu_custom_call.1} parent=5 // pred_check_branch
        %2660 = sbr.rel (%p2658) target = $region112
      $region111: #{tpu_custom_call.1} parent=5 // pred_region
        %s2661 = ssub.s32 %s25, 2
      $region112: #{tpu_custom_call.1} parent=5 // pred_fallthru
        _
    $region6: #{tpu_custom_call.1} parent=1 // loop_footer
      %s29 = sadd.s32 1, %s25
    $region7: #{tpu_custom_call.1} parent=1 // loop_footer_branch
      %24 = sbr.rel target = $region3
    $region8: #{tpu_custom_call.1} parent=1 // loop_exit
      _
    %2662 = vsyncpa [#allocation3], 1
    %s2663 = scalar_lea.sflag [#allocation3], 1
    %2664 = vsyncpa %s2663, 1
    %2665 = vsyncpa [#allocation6], 1
    %2666 = vsyncpa [#allocation4], 1
    %s2667 = scalar_lea.sflag [#allocation4], 1
    %2668 = vsyncpa %s2667, 1

</llo_original>
